<compile_context>
chip_gen: v7x
topology: tpu7x:2x2x1
jax: 0.10.0
libtpu: 0.0.40
codegen_flags: <defaults>
</compile_context>

<pallas_src>
import math
import numpy as np

import jax
import jax.numpy as jnp
from jax import lax
from jax.experimental import pallas as pl
from jax.experimental.pallas import tpu as pltpu

# ---------------- small synthetic MAE-encoder config ----------------
IMG = 16                      # image size
PATCH = 8                     # patch size -> 2x2 grid, L = 4 patches
CIN = 3                       # RGB
EMBED = 32                    # embed_dim
DEPTH = 4                     # encoder depth
HEADS = 4
HEAD_DIM = EMBED // HEADS
MLP = 4 * EMBED               # mlp_ratio = 4
NUM_FEATURE_BLOCKS = 2        # `num_blocks`: hooks on the last 2 encoder blocks
LN_EPS = 1e-6                 # partial(nn.LayerNorm, eps=1e-6)

GRID_HW = IMG // PATCH        # patches per side
L_PATCH = GRID_HW * GRID_HW   # number of patch tokens
N_TOK = L_PATCH + 1           # tokens incl. cls
PATCH_DIM = CIN * PATCH * PATCH


# ---------------- fused Pallas kernel (whole batch, whole encoder) ----------------
def _mae_encoder_kernel(patches_ref, add_ref, mask_ref, pw_ref,
                        ln1_ref, wqkv_ref, bqkv_ref, wo_ref, bo_ref,
                        ln2_ref, w1_ref, b1_ref, w2_ref, b2_ref,
                        feat_ref, ctx_ref):
    D = EMBED
    bf16 = jnp.bfloat16
    scale = 1.0 / math.sqrt(HEAD_DIM)
    inv_sqrt2 = 1.0 / math.sqrt(2.0)

    # patch embed (Conv2d k=s=patch == flattened-patch matmul) for ALL images at once.
    # `add` already holds cls_token+pos[0] on cls rows, patch_bias+pos[1+l] on patch rows,
    # zeros on padding rows.  x: (R_PAD, D) f32, rows b*N_TOK.. are image b's tokens.
    x = jnp.dot(patches_ref[...], pw_ref[...],
                preferred_element_type=jnp.float32) + add_ref[...]
    mask = mask_ref[...]                       # (R_PAD, R_PAD) block-diagonal additive mask

    feat_idx = 0
    for d in range(DEPTH):                     # static, fully unrolled
        # ---- LayerNorm 1 (biased variance, eps=1e-6, torch semantics) ----
        ln1 = ln1_ref[d]                       # (2, D): [0]=scale [1]=bias
        mu = jnp.mean(x, axis=-1, keepdims=True)
        var = jnp.mean(jnp.square(x - mu), axis=-1, keepdims=True)
        hn = (x - mu) * lax.rsqrt(var + LN_EPS) * ln1[0:1, :] + ln1[1:2, :]

        # ---- multi-head self-attention, fused QKV projection (bf16 MXU, f32 acc) ----
        qkv = jnp.dot(hn.astype(bf16), wqkv_ref[d],
                      preferred_element_type=jnp.float32) + bqkv_ref[d]    # (R_PAD, 3D)

        for hh in range(HEADS):                # static loop; heads -> contiguous lane slices
            lo = hh * HEAD_DIM
            qh = qkv[:, lo:lo + HEAD_DIM].astype(bf16)
            kh = qkv[:, D + lo:D + lo + HEAD_DIM].astype(bf16)
            vh = qkv[:, 2 * D + lo:2 * D + lo + HEAD_DIM].astype(bf16)
            s = lax.dot_general(qh, kh, (((1,), (1,)), ((), ())),
                                preferred_element_type=jnp.float32)        # (R_PAD, R_PAD)
            s = s * scale + mask
            s = s - jnp.max(s, axis=-1, keepdims=True)
            p = jnp.exp(s)
            p = p * pl.reciprocal(jnp.sum(p, axis=-1, keepdims=True), approx=True)
            ctx_ref[:, lo:lo + HEAD_DIM] = jnp.dot(
                p.astype(bf16), vh, preferred_element_type=jnp.float32)    # lane-slice write

        # single fused output projection over all heads
        x = x + jnp.dot(ctx_ref[...].astype(bf16), wo_ref[d],
                        preferred_element_type=jnp.float32) + bo_ref[d]

        # ---- LayerNorm 2 + MLP (exact erf GELU, as nn.GELU default) ----
        ln2 = ln2_ref[d]
        mu2 = jnp.mean(x, axis=-1, keepdims=True)
        var2 = jnp.mean(jnp.square(x - mu2), axis=-1, keepdims=True)
        h2 = (x - mu2) * lax.rsqrt(var2 + LN_EPS) * ln2[0:1, :] + ln2[1:2, :]
        z = jnp.dot(h2.astype(bf16), w1_ref[d],
                    preferred_element_type=jnp.float32) + b1_ref[d]
        z = 0.5 * z * (1.0 + lax.erf(z * inv_sqrt2))
        z = jnp.dot(z.astype(bf16), w2_ref[d],
                    preferred_element_type=jnp.float32) + b2_ref[d]
        x = x + z

        # save_out_hook: OUTPUT of the last NUM_FEATURE_BLOCKS blocks (full padded tile store;
        # cls/padding rows are dropped in the wrapper)
        if d >= DEPTH - NUM_FEATURE_BLOCKS:
            feat_ref[feat_idx, :, :] = x
            feat_idx += 1
    # TODO(synk): the encoder's final LayerNorm is skipped on purpose -- its result is
    # discarded by FeatureExtractorMAE.forward (only the hooked block outputs are used).


# ---------------- glue: parameters, patchify, forward ----------------
def init_params(key):
    D = EMBED
    k = jax.random.split(key, 8)
    ln_scale_bias = jnp.stack(
        [jnp.ones((DEPTH, D), jnp.float32), jnp.zeros((DEPTH, D), jnp.float32)],
        axis=1)                                              # (DEPTH, 2, D)
    return {
        'patch_w': 0.02 * jax.random.normal(k[0], (PATCH_DIM, D), jnp.float32),
        'patch_b': jnp.zeros((1, D), jnp.float32),
        'pos_embed': 0.02 * jax.random.normal(k[1], (1, N_TOK, D), jnp.float32),
        'cls_token': 0.02 * jax.random.normal(k[2], (1, 1, D), jnp.float32),
        'ln1': ln_scale_bias,
        'wqkv': 0.02 * jax.random.normal(k[3], (DEPTH, D, 3 * D), jnp.float32),
        'bqkv': jnp.zeros((DEPTH, 1, 3 * D), jnp.float32),
        'wo': 0.02 * jax.random.normal(k[4], (DEPTH, D, D), jnp.float32),
        'bo': jnp.zeros((DEPTH, 1, D), jnp.float32),
        'ln2': ln_scale_bias,
        'w1': 0.02 * jax.random.normal(k[5], (DEPTH, D, MLP), jnp.float32),
        'b1': jnp.zeros((DEPTH, 1, MLP), jnp.float32),
        'w2': 0.02 * jax.random.normal(k[6], (DEPTH, MLP, D), jnp.float32),
        'b2': jnp.zeros((DEPTH, 1, D), jnp.float32),
    }


def patchify(x):
    # x: (B, C, H, W) NCHW -> (B, L, C*p*p), flattened in (c, ph, pw) order,
    # exactly matching Conv2d(kernel=stride=patch) weight flattening.
    B = x.shape[0]
    p = x.reshape(B, CIN, GRID_HW, PATCH, GRID_HW, PATCH)
    p = p.transpose(0, 2, 4, 1, 3, 5)            # (B, gh, gw, C, ph, pw)
    return p.reshape(B, L_PATCH, PATCH_DIM)


def feature_extractor_mae_forward(params, x):
    B = x.shape[0]
    R_TOK = B * N_TOK                            # valid token rows (cls + patches per image)
    R_PAD = ((R_TOK + 7) // 8) * 8               # pad rows to a sublane multiple (10 -> 16)
    bf16 = jnp.bfloat16

    # --- pack all images' patch rows into one padded row tile; cls rows stay zero ---
    patches = patchify(x)                        # (B, L, C*p*p)
    rows = jnp.concatenate(
        [jnp.zeros((B, 1, PATCH_DIM), patches.dtype), patches], axis=1
    ).reshape(R_TOK, PATCH_DIM)
    patches_pad = jnp.pad(rows, ((0, R_PAD - R_TOK), (0, 0))).astype(bf16)

    # --- per-row additive term: cls rows = cls_token + pos[0]; patch rows = patch_b + pos[1+l] ---
    add_img = jnp.concatenate(
        [params['cls_token'][0] + params['pos_embed'][0, 0:1],
         params['patch_b'] + params['pos_embed'][0, 1:]], axis=0)       # (N_TOK, D)
    add = jnp.pad(jnp.tile(add_img, (B, 1)), ((0, R_PAD - R_TOK), (0, 0)))

    # --- static block-diagonal attention mask (numpy -> compile-time constant) ---
    ids = np.arange(R_PAD)
    allow = ((ids[:, None] // N_TOK) == (ids[None, :] // N_TOK)) \
        & (ids[None, :] < R_TOK) & (ids[:, None] < R_TOK)
    mask = jnp.asarray(np.where(allow, 0.0, -1e30).astype(np.float32))

    args = (patches_pad, add, mask,
            params['patch_w'].astype(bf16),
            params['ln1'],
            params['wqkv'].astype(bf16), params['bqkv'],
            params['wo'].astype(bf16), params['bo'],
            params['ln2'],
            params['w1'].astype(bf16), params['b1'],
            params['w2'].astype(bf16), params['b2'])

    # random_masking(mask_ratio=0): shuffle + ids_restore-gather cancel exactly and the
    # encoder is permutation-equivariant over patch tokens, so the noise/argsort/gather
    # path is eliminated; features come out of the kernel already in raster order.
    feats = pl.pallas_call(
        _mae_encoder_kernel,
        out_shape=jax.ShapeDtypeStruct((NUM_FEATURE_BLOCKS, R_PAD, EMBED), jnp.float32),
        scratch_shapes=[pltpu.VMEM((R_PAD, EMBED), jnp.float32)],   # per-block attn context
    )(*args)

    # wrapper-side plumbing: drop padding + cls rows, permute(0,2,1), view(B, D, sqrt, sqrt)
    valid = feats[:, :R_TOK, :].reshape(NUM_FEATURE_BLOCKS, B, N_TOK, EMBED)
    out = []
    for i in range(NUM_FEATURE_BLOCKS):
        f = valid[i, :, 1:, :]                                       # (B, L, D)
        out.append(jnp.transpose(f, (0, 2, 1)).reshape(B, EMBED, GRID_HW, GRID_HW))
    return out


if __name__ == "__main__":
    key = jax.random.PRNGKey(0)
    pkey, xkey = jax.random.split(key)
    params = init_params(pkey)
    x = jax.random.normal(xkey, (2, CIN, IMG, IMG), jnp.float32)   # NCHW like PyTorch

    feats = jax.jit(feature_extractor_mae_forward)(params, x)
    feats = jax.block_until_ready(feats)

    assert len(feats) == NUM_FEATURE_BLOCKS
    for f in feats:
        assert f.shape == (2, EMBED, GRID_HW, GRID_HW)
        assert f.dtype == jnp.float32
        assert bool(jnp.all(jnp.isfinite(f)))
    print("KERNEL_OK")
</pallas_src>

<mosaic_0001>
module attributes {stable_mosaic.version = 11 : i64} {
  func.func @_mae_encoder_kernel(%arg0: memref<16x192xbf16, #tpu.memory_space<vmem>>, %arg1: memref<16x32xf32, #tpu.memory_space<vmem>>, %arg2: memref<16x16xf32, #tpu.memory_space<vmem>>, %arg3: memref<192x32xbf16, #tpu.memory_space<vmem>>, %arg4: memref<4x2x32xf32, #tpu.memory_space<vmem>>, %arg5: memref<4x32x96xbf16, #tpu.memory_space<vmem>>, %arg6: memref<4x1x96xf32, #tpu.memory_space<vmem>>, %arg7: memref<4x32x32xbf16, #tpu.memory_space<vmem>>, %arg8: memref<4x1x32xf32, #tpu.memory_space<vmem>>, %arg9: memref<4x2x32xf32, #tpu.memory_space<vmem>>, %arg10: memref<4x32x128xbf16, #tpu.memory_space<vmem>>, %arg11: memref<4x1x128xf32, #tpu.memory_space<vmem>>, %arg12: memref<4x128x32xbf16, #tpu.memory_space<vmem>>, %arg13: memref<4x1x32xf32, #tpu.memory_space<vmem>>, %arg14: memref<2x16x32xf32, #tpu.memory_space<vmem>>, %arg15: memref<16x32xf32, #tpu.memory_space<vmem>>) attributes {dimension_semantics = [], scalar_prefetch = 0 : i64, scratch_operands = 1 : i64, tpu.core_type = #tpu.core_type<tc>} {
    %c0 = arith.constant 0 : index
    %c0_0 = arith.constant 0 : index
    %0 = vector.load %arg0[%c0, %c0_0] : memref<16x192xbf16, #tpu.memory_space<vmem>>, vector<16x192xbf16>
    %c0_1 = arith.constant 0 : index
    %c0_2 = arith.constant 0 : index
    %1 = vector.load %arg3[%c0_1, %c0_2] : memref<192x32xbf16, #tpu.memory_space<vmem>>, vector<192x32xbf16>
    %cst = arith.constant dense<0.000000e+00> : vector<16x32xf32>
    %2 = tpu.matmul %0, %1, %cst {dimension_numbers = #tpu.dot_dimension_numbers<[1], [0], [0], [1], [0, 0, 1, 1], [], []>} : vector<16x192xbf16>, vector<192x32xbf16>, vector<16x32xf32> -> vector<16x32xf32>
    %c0_3 = arith.constant 0 : index
    %c0_4 = arith.constant 0 : index
    %3 = vector.load %arg1[%c0_3, %c0_4] : memref<16x32xf32, #tpu.memory_space<vmem>>, vector<16x32xf32>
    %4 = arith.addf %2, %3 : vector<16x32xf32>
    %c0_5 = arith.constant 0 : index
    %c0_6 = arith.constant 0 : index
    %5 = vector.load %arg2[%c0_5, %c0_6] : memref<16x16xf32, #tpu.memory_space<vmem>>, vector<16x16xf32>
    %c0_7 = arith.constant 0 : index
    %c0_8 = arith.constant 0 : index
    %c0_9 = arith.constant 0 : index
    %6 = vector.load %arg4[%c0_7, %c0_8, %c0_9] : memref<4x2x32xf32, #tpu.memory_space<vmem>>, vector<1x2x32xf32>
    %7 = vector.shape_cast %6 : vector<1x2x32xf32> to vector<2x32xf32>
    %cst_10 = arith.constant dense<0.000000e+00> : vector<16xf32>
    %8 = vector.multi_reduction <add>, %4, %cst_10 [1] : vector<16x32xf32> to vector<16xf32>
    %9 = vector.shape_cast %8 : vector<16xf32> to vector<16x1xf32>
    %cst_11 = arith.constant 3.200000e+01 : f32
    %10 = vector.broadcast %cst_11 : f32 to vector<16x1xf32>
    %11 = arith.divf %9, %10 : vector<16x1xf32>
    %12 = vector.broadcast %11 : vector<16x1xf32> to vector<16x32xf32>
    %13 = arith.subf %4, %12 : vector<16x32xf32>
    %14 = arith.mulf %13, %13 : vector<16x32xf32>
    %cst_12 = arith.constant dense<0.000000e+00> : vector<16xf32>
    %15 = vector.multi_reduction <add>, %14, %cst_12 [1] : vector<16x32xf32> to vector<16xf32>
    %16 = vector.shape_cast %15 : vector<16xf32> to vector<16x1xf32>
    %cst_13 = arith.constant 3.200000e+01 : f32
    %17 = vector.broadcast %cst_13 : f32 to vector<16x1xf32>
    %18 = arith.divf %16, %17 : vector<16x1xf32>
    %19 = vector.broadcast %11 : vector<16x1xf32> to vector<16x32xf32>
    %20 = arith.subf %4, %19 : vector<16x32xf32>
    %cst_14 = arith.constant 9.99999997E-7 : f32
    %21 = vector.broadcast %cst_14 : f32 to vector<16x1xf32>
    %22 = arith.addf %18, %21 : vector<16x1xf32>
    %23 = math.rsqrt %22 : vector<16x1xf32>
    %24 = vector.broadcast %23 : vector<16x1xf32> to vector<16x32xf32>
    %25 = arith.mulf %20, %24 : vector<16x32xf32>
    %26 = vector.extract_strided_slice %7 {offsets = [0, 0], sizes = [1, 32], strides = [1, 1]} : vector<2x32xf32> to vector<1x32xf32>
    %27 = vector.broadcast %26 : vector<1x32xf32> to vector<16x32xf32>
    %28 = arith.mulf %25, %27 : vector<16x32xf32>
    %29 = vector.extract_strided_slice %7 {offsets = [1, 0], sizes = [1, 32], strides = [1, 1]} : vector<2x32xf32> to vector<1x32xf32>
    %30 = vector.broadcast %29 : vector<1x32xf32> to vector<16x32xf32>
    %31 = arith.addf %28, %30 : vector<16x32xf32>
    %32 = arith.truncf %31 : vector<16x32xf32> to vector<16x32xbf16>
    %c0_15 = arith.constant 0 : index
    %c0_16 = arith.constant 0 : index
    %c0_17 = arith.constant 0 : index
    %33 = vector.load %arg5[%c0_15, %c0_16, %c0_17] : memref<4x32x96xbf16, #tpu.memory_space<vmem>>, vector<1x32x96xbf16>
    %34 = vector.shape_cast %33 : vector<1x32x96xbf16> to vector<32x96xbf16>
    %cst_18 = arith.constant dense<0.000000e+00> : vector<16x96xf32>
    %35 = tpu.matmul %32, %34, %cst_18 {dimension_numbers = #tpu.dot_dimension_numbers<[1], [0], [0], [1], [0, 0, 1, 1], [], []>} : vector<16x32xbf16>, vector<32x96xbf16>, vector<16x96xf32> -> vector<16x96xf32>
    %c0_19 = arith.constant 0 : index
    %c0_20 = arith.constant 0 : index
    %c0_21 = arith.constant 0 : index
    %36 = vector.load %arg6[%c0_19, %c0_20, %c0_21] : memref<4x1x96xf32, #tpu.memory_space<vmem>>, vector<1x1x96xf32>
    %37 = vector.shape_cast %36 : vector<1x1x96xf32> to vector<1x96xf32>
    %38 = vector.broadcast %37 : vector<1x96xf32> to vector<16x96xf32>
    %39 = arith.addf %35, %38 : vector<16x96xf32>
    %40 = vector.extract_strided_slice %39 {offsets = [0, 0], sizes = [16, 8], strides = [1, 1]} : vector<16x96xf32> to vector<16x8xf32>
    %41 = arith.truncf %40 : vector<16x8xf32> to vector<16x8xbf16>
    %42 = vector.extract_strided_slice %39 {offsets = [0, 32], sizes = [16, 8], strides = [1, 1]} : vector<16x96xf32> to vector<16x8xf32>
    %43 = arith.truncf %42 : vector<16x8xf32> to vector<16x8xbf16>
    %44 = vector.extract_strided_slice %39 {offsets = [0, 64], sizes = [16, 8], strides = [1, 1]} : vector<16x96xf32> to vector<16x8xf32>
    %45 = arith.truncf %44 : vector<16x8xf32> to vector<16x8xbf16>
    %cst_22 = arith.constant dense<0.000000e+00> : vector<16x16xf32>
    %46 = tpu.matmul %41, %43, %cst_22 {dimension_numbers = #tpu.dot_dimension_numbers<[1], [1], [0], [0], [0, 0, 1, 0], [], []>} : vector<16x8xbf16>, vector<16x8xbf16>, vector<16x16xf32> -> vector<16x16xf32>
    %cst_23 = arith.constant 0.353553385 : f32
    %47 = vector.broadcast %cst_23 : f32 to vector<16x16xf32>
    %48 = arith.mulf %46, %47 : vector<16x16xf32>
    %49 = arith.addf %48, %5 : vector<16x16xf32>
    %cst_24 = arith.constant dense<0xFF800000> : vector<16xf32>
    %50 = vector.multi_reduction <maximumf>, %49, %cst_24 [1] : vector<16x16xf32> to vector<16xf32>
    %51 = vector.shape_cast %50 : vector<16xf32> to vector<16x1xf32>
    %52 = vector.broadcast %51 : vector<16x1xf32> to vector<16x16xf32>
    %53 = arith.subf %49, %52 : vector<16x16xf32>
    %54 = math.exp %53 : vector<16x16xf32>
    %cst_25 = arith.constant dense<0.000000e+00> : vector<16xf32>
    %55 = vector.multi_reduction <add>, %54, %cst_25 [1] : vector<16x16xf32> to vector<16xf32>
    %56 = vector.shape_cast %55 : vector<16xf32> to vector<16x1xf32>
    %57 = tpu.reciprocal %56 {approx = true} : vector<16x1xf32> -> vector<16x1xf32>
    %58 = vector.broadcast %57 : vector<16x1xf32> to vector<16x16xf32>
    %59 = arith.mulf %54, %58 : vector<16x16xf32>
    %60 = arith.truncf %59 : vector<16x16xf32> to vector<16x16xbf16>
    %cst_26 = arith.constant dense<0.000000e+00> : vector<16x8xf32>
    %61 = tpu.matmul %60, %45, %cst_26 {dimension_numbers = #tpu.dot_dimension_numbers<[1], [0], [0], [1], [0, 0, 1, 1], [], []>} : vector<16x16xbf16>, vector<16x8xbf16>, vector<16x8xf32> -> vector<16x8xf32>
    %c0_27 = arith.constant 0 : index
    %c0_28 = arith.constant 0 : index
    %62 = vector.load %arg15[%c0_27, %c0_28] : memref<16x32xf32, #tpu.memory_space<vmem>>, vector<16x8xf32>
    tpu.vector_store %arg15[%c0_27, %c0_28], %61 {strides = array<i32>} : memref<16x32xf32, #tpu.memory_space<vmem>>, vector<16x8xf32>,
    %63 = vector.extract_strided_slice %39 {offsets = [0, 8], sizes = [16, 8], strides = [1, 1]} : vector<16x96xf32> to vector<16x8xf32>
    %64 = arith.truncf %63 : vector<16x8xf32> to vector<16x8xbf16>
    %65 = vector.extract_strided_slice %39 {offsets = [0, 40], sizes = [16, 8], strides = [1, 1]} : vector<16x96xf32> to vector<16x8xf32>
    %66 = arith.truncf %65 : vector<16x8xf32> to vector<16x8xbf16>
    %67 = vector.extract_strided_slice %39 {offsets = [0, 72], sizes = [16, 8], strides = [1, 1]} : vector<16x96xf32> to vector<16x8xf32>
    %68 = arith.truncf %67 : vector<16x8xf32> to vector<16x8xbf16>
    %cst_29 = arith.constant dense<0.000000e+00> : vector<16x16xf32>
    %69 = tpu.matmul %64, %66, %cst_29 {dimension_numbers = #tpu.dot_dimension_numbers<[1], [1], [0], [0], [0, 0, 1, 0], [], []>} : vector<16x8xbf16>, vector<16x8xbf16>, vector<16x16xf32> -> vector<16x16xf32>
    %cst_30 = arith.constant 0.353553385 : f32
    %70 = vector.broadcast %cst_30 : f32 to vector<16x16xf32>
    %71 = arith.mulf %69, %70 : vector<16x16xf32>
    %72 = arith.addf %71, %5 : vector<16x16xf32>
    %cst_31 = arith.constant dense<0xFF800000> : vector<16xf32>
    %73 = vector.multi_reduction <maximumf>, %72, %cst_31 [1] : vector<16x16xf32> to vector<16xf32>
    %74 = vector.shape_cast %73 : vector<16xf32> to vector<16x1xf32>
    %75 = vector.broadcast %74 : vector<16x1xf32> to vector<16x16xf32>
    %76 = arith.subf %72, %75 : vector<16x16xf32>
    %77 = math.exp %76 : vector<16x16xf32>
    %cst_32 = arith.constant dense<0.000000e+00> : vector<16xf32>
    %78 = vector.multi_reduction <add>, %77, %cst_32 [1] : vector<16x16xf32> to vector<16xf32>
    %79 = vector.shape_cast %78 : vector<16xf32> to vector<16x1xf32>
    %80 = tpu.reciprocal %79 {approx = true} : vector<16x1xf32> -> vector<16x1xf32>
    %81 = vector.broadcast %80 : vector<16x1xf32> to vector<16x16xf32>
    %82 = arith.mulf %77, %81 : vector<16x16xf32>
    %83 = arith.truncf %82 : vector<16x16xf32> to vector<16x16xbf16>
    %cst_33 = arith.constant dense<0.000000e+00> : vector<16x8xf32>
    %84 = tpu.matmul %83, %68, %cst_33 {dimension_numbers = #tpu.dot_dimension_numbers<[1], [0], [0], [1], [0, 0, 1, 1], [], []>} : vector<16x16xbf16>, vector<16x8xbf16>, vector<16x8xf32> -> vector<16x8xf32>
    %c0_34 = arith.constant 0 : index
    %c8 = arith.constant 8 : index
    %85 = vector.load %arg15[%c0_34, %c8] : memref<16x32xf32, #tpu.memory_space<vmem>>, vector<16x8xf32>
    tpu.vector_store %arg15[%c0_34, %c8], %84 {strides = array<i32>} : memref<16x32xf32, #tpu.memory_space<vmem>>, vector<16x8xf32>,
    %86 = vector.extract_strided_slice %39 {offsets = [0, 16], sizes = [16, 8], strides = [1, 1]} : vector<16x96xf32> to vector<16x8xf32>
    %87 = arith.truncf %86 : vector<16x8xf32> to vector<16x8xbf16>
    %88 = vector.extract_strided_slice %39 {offsets = [0, 48], sizes = [16, 8], strides = [1, 1]} : vector<16x96xf32> to vector<16x8xf32>
    %89 = arith.truncf %88 : vector<16x8xf32> to vector<16x8xbf16>
    %90 = vector.extract_strided_slice %39 {offsets = [0, 80], sizes = [16, 8], strides = [1, 1]} : vector<16x96xf32> to vector<16x8xf32>
    %91 = arith.truncf %90 : vector<16x8xf32> to vector<16x8xbf16>
    %cst_35 = arith.constant dense<0.000000e+00> : vector<16x16xf32>
    %92 = tpu.matmul %87, %89, %cst_35 {dimension_numbers = #tpu.dot_dimension_numbers<[1], [1], [0], [0], [0, 0, 1, 0], [], []>} : vector<16x8xbf16>, vector<16x8xbf16>, vector<16x16xf32> -> vector<16x16xf32>
    %cst_36 = arith.constant 0.353553385 : f32
    %93 = vector.broadcast %cst_36 : f32 to vector<16x16xf32>
    %94 = arith.mulf %92, %93 : vector<16x16xf32>
    %95 = arith.addf %94, %5 : vector<16x16xf32>
    %cst_37 = arith.constant dense<0xFF800000> : vector<16xf32>
    %96 = vector.multi_reduction <maximumf>, %95, %cst_37 [1] : vector<16x16xf32> to vector<16xf32>
    %97 = vector.shape_cast %96 : vector<16xf32> to vector<16x1xf32>
    %98 = vector.broadcast %97 : vector<16x1xf32> to vector<16x16xf32>
    %99 = arith.subf %95, %98 : vector<16x16xf32>
    %100 = math.exp %99 : vector<16x16xf32>
    %cst_38 = arith.constant dense<0.000000e+00> : vector<16xf32>
    %101 = vector.multi_reduction <add>, %100, %cst_38 [1] : vector<16x16xf32> to vector<16xf32>
    %102 = vector.shape_cast %101 : vector<16xf32> to vector<16x1xf32>
    %103 = tpu.reciprocal %102 {approx = true} : vector<16x1xf32> -> vector<16x1xf32>
    %104 = vector.broadcast %103 : vector<16x1xf32> to vector<16x16xf32>
    %105 = arith.mulf %100, %104 : vector<16x16xf32>
    %106 = arith.truncf %105 : vector<16x16xf32> to vector<16x16xbf16>
    %cst_39 = arith.constant dense<0.000000e+00> : vector<16x8xf32>
    %107 = tpu.matmul %106, %91, %cst_39 {dimension_numbers = #tpu.dot_dimension_numbers<[1], [0], [0], [1], [0, 0, 1, 1], [], []>} : vector<16x16xbf16>, vector<16x8xbf16>, vector<16x8xf32> -> vector<16x8xf32>
    %c0_40 = arith.constant 0 : index
    %c16 = arith.constant 16 : index
    %108 = vector.load %arg15[%c0_40, %c16] : memref<16x32xf32, #tpu.memory_space<vmem>>, vector<16x8xf32>
    tpu.vector_store %arg15[%c0_40, %c16], %107 {strides = array<i32>} : memref<16x32xf32, #tpu.memory_space<vmem>>, vector<16x8xf32>,
    %109 = vector.extract_strided_slice %39 {offsets = [0, 24], sizes = [16, 8], strides = [1, 1]} : vector<16x96xf32> to vector<16x8xf32>
    %110 = arith.truncf %109 : vector<16x8xf32> to vector<16x8xbf16>
    %111 = vector.extract_strided_slice %39 {offsets = [0, 56], sizes = [16, 8], strides = [1, 1]} : vector<16x96xf32> to vector<16x8xf32>
    %112 = arith.truncf %111 : vector<16x8xf32> to vector<16x8xbf16>
    %113 = vector.extract_strided_slice %39 {offsets = [0, 88], sizes = [16, 8], strides = [1, 1]} : vector<16x96xf32> to vector<16x8xf32>
    %114 = arith.truncf %113 : vector<16x8xf32> to vector<16x8xbf16>
    %cst_41 = arith.constant dense<0.000000e+00> : vector<16x16xf32>
    %115 = tpu.matmul %110, %112, %cst_41 {dimension_numbers = #tpu.dot_dimension_numbers<[1], [1], [0], [0], [0, 0, 1, 0], [], []>} : vector<16x8xbf16>, vector<16x8xbf16>, vector<16x16xf32> -> vector<16x16xf32>
    %cst_42 = arith.constant 0.353553385 : f32
    %116 = vector.broadcast %cst_42 : f32 to vector<16x16xf32>
    %117 = arith.mulf %115, %116 : vector<16x16xf32>
    %118 = arith.addf %117, %5 : vector<16x16xf32>
    %cst_43 = arith.constant dense<0xFF800000> : vector<16xf32>
    %119 = vector.multi_reduction <maximumf>, %118, %cst_43 [1] : vector<16x16xf32> to vector<16xf32>
    %120 = vector.shape_cast %119 : vector<16xf32> to vector<16x1xf32>
    %121 = vector.broadcast %120 : vector<16x1xf32> to vector<16x16xf32>
    %122 = arith.subf %118, %121 : vector<16x16xf32>
    %123 = math.exp %122 : vector<16x16xf32>
    %cst_44 = arith.constant dense<0.000000e+00> : vector<16xf32>
    %124 = vector.multi_reduction <add>, %123, %cst_44 [1] : vector<16x16xf32> to vector<16xf32>
    %125 = vector.shape_cast %124 : vector<16xf32> to vector<16x1xf32>
    %126 = tpu.reciprocal %125 {approx = true} : vector<16x1xf32> -> vector<16x1xf32>
    %127 = vector.broadcast %126 : vector<16x1xf32> to vector<16x16xf32>
    %128 = arith.mulf %123, %127 : vector<16x16xf32>
    %129 = arith.truncf %128 : vector<16x16xf32> to vector<16x16xbf16>
    %cst_45 = arith.constant dense<0.000000e+00> : vector<16x8xf32>
    %130 = tpu.matmul %129, %114, %cst_45 {dimension_numbers = #tpu.dot_dimension_numbers<[1], [0], [0], [1], [0, 0, 1, 1], [], []>} : vector<16x16xbf16>, vector<16x8xbf16>, vector<16x8xf32> -> vector<16x8xf32>
    %c0_46 = arith.constant 0 : index
    %c24 = arith.constant 24 : index
    %131 = vector.load %arg15[%c0_46, %c24] : memref<16x32xf32, #tpu.memory_space<vmem>>, vector<16x8xf32>
    tpu.vector_store %arg15[%c0_46, %c24], %130 {strides = array<i32>} : memref<16x32xf32, #tpu.memory_space<vmem>>, vector<16x8xf32>,
    %c0_47 = arith.constant 0 : index
    %c0_48 = arith.constant 0 : index
    %132 = vector.load %arg15[%c0_47, %c0_48] : memref<16x32xf32, #tpu.memory_space<vmem>>, vector<16x32xf32>
    %133 = arith.truncf %132 : vector<16x32xf32> to vector<16x32xbf16>
    %c0_49 = arith.constant 0 : index
    %c0_50 = arith.constant 0 : index
    %c0_51 = arith.constant 0 : index
    %134 = vector.load %arg7[%c0_49, %c0_50, %c0_51] : memref<4x32x32xbf16, #tpu.memory_space<vmem>>, vector<1x32x32xbf16>
    %135 = vector.shape_cast %134 : vector<1x32x32xbf16> to vector<32x32xbf16>
    %cst_52 = arith.constant dense<0.000000e+00> : vector<16x32xf32>
    %136 = tpu.matmul %133, %135, %cst_52 {dimension_numbers = #tpu.dot_dimension_numbers<[1], [0], [0], [1], [0, 0, 1, 1], [], []>} : vector<16x32xbf16>, vector<32x32xbf16>, vector<16x32xf32> -> vector<16x32xf32>
    %137 = arith.addf %4, %136 : vector<16x32xf32>
    %c0_53 = arith.constant 0 : index
    %c0_54 = arith.constant 0 : index
    %c0_55 = arith.constant 0 : index
    %138 = vector.load %arg8[%c0_53, %c0_54, %c0_55] : memref<4x1x32xf32, #tpu.memory_space<vmem>>, vector<1x1x32xf32>
    %139 = vector.shape_cast %138 : vector<1x1x32xf32> to vector<1x32xf32>
    %140 = vector.broadcast %139 : vector<1x32xf32> to vector<16x32xf32>
    %141 = arith.addf %137, %140 : vector<16x32xf32>
    %c0_56 = arith.constant 0 : index
    %c0_57 = arith.constant 0 : index
    %c0_58 = arith.constant 0 : index
    %142 = vector.load %arg9[%c0_56, %c0_57, %c0_58] : memref<4x2x32xf32, #tpu.memory_space<vmem>>, vector<1x2x32xf32>
    %143 = vector.shape_cast %142 : vector<1x2x32xf32> to vector<2x32xf32>
    %cst_59 = arith.constant dense<0.000000e+00> : vector<16xf32>
    %144 = vector.multi_reduction <add>, %141, %cst_59 [1] : vector<16x32xf32> to vector<16xf32>
    %145 = vector.shape_cast %144 : vector<16xf32> to vector<16x1xf32>
    %cst_60 = arith.constant 3.200000e+01 : f32
    %146 = vector.broadcast %cst_60 : f32 to vector<16x1xf32>
    %147 = arith.divf %145, %146 : vector<16x1xf32>
    %148 = vector.broadcast %147 : vector<16x1xf32> to vector<16x32xf32>
    %149 = arith.subf %141, %148 : vector<16x32xf32>
    %150 = arith.mulf %149, %149 : vector<16x32xf32>
    %cst_61 = arith.constant dense<0.000000e+00> : vector<16xf32>
    %151 = vector.multi_reduction <add>, %150, %cst_61 [1] : vector<16x32xf32> to vector<16xf32>
    %152 = vector.shape_cast %151 : vector<16xf32> to vector<16x1xf32>
    %cst_62 = arith.constant 3.200000e+01 : f32
    %153 = vector.broadcast %cst_62 : f32 to vector<16x1xf32>
    %154 = arith.divf %152, %153 : vector<16x1xf32>
    %155 = vector.broadcast %147 : vector<16x1xf32> to vector<16x32xf32>
    %156 = arith.subf %141, %155 : vector<16x32xf32>
    %cst_63 = arith.constant 9.99999997E-7 : f32
    %157 = vector.broadcast %cst_63 : f32 to vector<16x1xf32>
    %158 = arith.addf %154, %157 : vector<16x1xf32>
    %159 = math.rsqrt %158 : vector<16x1xf32>
    %160 = vector.broadcast %159 : vector<16x1xf32> to vector<16x32xf32>
    %161 = arith.mulf %156, %160 : vector<16x32xf32>
    %162 = vector.extract_strided_slice %143 {offsets = [0, 0], sizes = [1, 32], strides = [1, 1]} : vector<2x32xf32> to vector<1x32xf32>
    %163 = vector.broadcast %162 : vector<1x32xf32> to vector<16x32xf32>
    %164 = arith.mulf %161, %163 : vector<16x32xf32>
    %165 = vector.extract_strided_slice %143 {offsets = [1, 0], sizes = [1, 32], strides = [1, 1]} : vector<2x32xf32> to vector<1x32xf32>
    %166 = vector.broadcast %165 : vector<1x32xf32> to vector<16x32xf32>
    %167 = arith.addf %164, %166 : vector<16x32xf32>
    %168 = arith.truncf %167 : vector<16x32xf32> to vector<16x32xbf16>
    %c0_64 = arith.constant 0 : index
    %c0_65 = arith.constant 0 : index
    %c0_66 = arith.constant 0 : index
    %169 = vector.load %arg10[%c0_64, %c0_65, %c0_66] : memref<4x32x128xbf16, #tpu.memory_space<vmem>>, vector<1x32x128xbf16>
    %170 = vector.shape_cast %169 : vector<1x32x128xbf16> to vector<32x128xbf16>
    %cst_67 = arith.constant dense<0.000000e+00> : vector<16x128xf32>
    %171 = tpu.matmul %168, %170, %cst_67 {dimension_numbers = #tpu.dot_dimension_numbers<[1], [0], [0], [1], [0, 0, 1, 1], [], []>} : vector<16x32xbf16>, vector<32x128xbf16>, vector<16x128xf32> -> vector<16x128xf32>
    %c0_68 = arith.constant 0 : index
    %c0_69 = arith.constant 0 : index
    %c0_70 = arith.constant 0 : index
    %172 = vector.load %arg11[%c0_68, %c0_69, %c0_70] : memref<4x1x128xf32, #tpu.memory_space<vmem>>, vector<1x1x128xf32>
    %173 = vector.shape_cast %172 : vector<1x1x128xf32> to vector<1x128xf32>
    %174 = vector.broadcast %173 : vector<1x128xf32> to vector<16x128xf32>
    %175 = arith.addf %171, %174 : vector<16x128xf32>
    %cst_71 = arith.constant 5.000000e-01 : f32
    %176 = vector.broadcast %cst_71 : f32 to vector<16x128xf32>
    %177 = arith.mulf %176, %175 : vector<16x128xf32>
    %cst_72 = arith.constant 0.707106769 : f32
    %178 = vector.broadcast %cst_72 : f32 to vector<16x128xf32>
    %179 = arith.mulf %175, %178 : vector<16x128xf32>
    %180 = math.erf %179 : vector<16x128xf32>
    %cst_73 = arith.constant 1.000000e+00 : f32
    %181 = vector.broadcast %cst_73 : f32 to vector<16x128xf32>
    %182 = arith.addf %181, %180 : vector<16x128xf32>
    %183 = arith.mulf %177, %182 : vector<16x128xf32>
    %184 = arith.truncf %183 : vector<16x128xf32> to vector<16x128xbf16>
    %c0_74 = arith.constant 0 : index
    %c0_75 = arith.constant 0 : index
    %c0_76 = arith.constant 0 : index
    %185 = vector.load %arg12[%c0_74, %c0_75, %c0_76] : memref<4x128x32xbf16, #tpu.memory_space<vmem>>, vector<1x128x32xbf16>
    %186 = vector.shape_cast %185 : vector<1x128x32xbf16> to vector<128x32xbf16>
    %cst_77 = arith.constant dense<0.000000e+00> : vector<16x32xf32>
    %187 = tpu.matmul %184, %186, %cst_77 {dimension_numbers = #tpu.dot_dimension_numbers<[1], [0], [0], [1], [0, 0, 1, 1], [], []>} : vector<16x128xbf16>, vector<128x32xbf16>, vector<16x32xf32> -> vector<16x32xf32>
    %c0_78 = arith.constant 0 : index
    %c0_79 = arith.constant 0 : index
    %c0_80 = arith.constant 0 : index
    %188 = vector.load %arg13[%c0_78, %c0_79, %c0_80] : memref<4x1x32xf32, #tpu.memory_space<vmem>>, vector<1x1x32xf32>
    %189 = vector.shape_cast %188 : vector<1x1x32xf32> to vector<1x32xf32>
    %190 = vector.broadcast %189 : vector<1x32xf32> to vector<16x32xf32>
    %191 = arith.addf %187, %190 : vector<16x32xf32>
    %192 = arith.addf %141, %191 : vector<16x32xf32>
    %c1 = arith.constant 1 : index
    %c0_81 = arith.constant 0 : index
    %c0_82 = arith.constant 0 : index
    %193 = vector.load %arg4[%c1, %c0_81, %c0_82] : memref<4x2x32xf32, #tpu.memory_space<vmem>>, vector<1x2x32xf32>
    %194 = vector.shape_cast %193 : vector<1x2x32xf32> to vector<2x32xf32>
    %cst_83 = arith.constant dense<0.000000e+00> : vector<16xf32>
    %195 = vector.multi_reduction <add>, %192, %cst_83 [1] : vector<16x32xf32> to vector<16xf32>
    %196 = vector.shape_cast %195 : vector<16xf32> to vector<16x1xf32>
    %cst_84 = arith.constant 3.200000e+01 : f32
    %197 = vector.broadcast %cst_84 : f32 to vector<16x1xf32>
    %198 = arith.divf %196, %197 : vector<16x1xf32>
    %199 = vector.broadcast %198 : vector<16x1xf32> to vector<16x32xf32>
    %200 = arith.subf %192, %199 : vector<16x32xf32>
    %201 = arith.mulf %200, %200 : vector<16x32xf32>
    %cst_85 = arith.constant dense<0.000000e+00> : vector<16xf32>
    %202 = vector.multi_reduction <add>, %201, %cst_85 [1] : vector<16x32xf32> to vector<16xf32>
    %203 = vector.shape_cast %202 : vector<16xf32> to vector<16x1xf32>
    %cst_86 = arith.constant 3.200000e+01 : f32
    %204 = vector.broadcast %cst_86 : f32 to vector<16x1xf32>
    %205 = arith.divf %203, %204 : vector<16x1xf32>
    %206 = vector.broadcast %198 : vector<16x1xf32> to vector<16x32xf32>
    %207 = arith.subf %192, %206 : vector<16x32xf32>
    %cst_87 = arith.constant 9.99999997E-7 : f32
    %208 = vector.broadcast %cst_87 : f32 to vector<16x1xf32>
    %209 = arith.addf %205, %208 : vector<16x1xf32>
    %210 = math.rsqrt %209 : vector<16x1xf32>
    %211 = vector.broadcast %210 : vector<16x1xf32> to vector<16x32xf32>
    %212 = arith.mulf %207, %211 : vector<16x32xf32>
    %213 = vector.extract_strided_slice %194 {offsets = [0, 0], sizes = [1, 32], strides = [1, 1]} : vector<2x32xf32> to vector<1x32xf32>
    %214 = vector.broadcast %213 : vector<1x32xf32> to vector<16x32xf32>
    %215 = arith.mulf %212, %214 : vector<16x32xf32>
    %216 = vector.extract_strided_slice %194 {offsets = [1, 0], sizes = [1, 32], strides = [1, 1]} : vector<2x32xf32> to vector<1x32xf32>
    %217 = vector.broadcast %216 : vector<1x32xf32> to vector<16x32xf32>
    %218 = arith.addf %215, %217 : vector<16x32xf32>
    %219 = arith.truncf %218 : vector<16x32xf32> to vector<16x32xbf16>
    %c1_88 = arith.constant 1 : index
    %c0_89 = arith.constant 0 : index
    %c0_90 = arith.constant 0 : index
    %220 = vector.load %arg5[%c1_88, %c0_89, %c0_90] : memref<4x32x96xbf16, #tpu.memory_space<vmem>>, vector<1x32x96xbf16>
    %221 = vector.shape_cast %220 : vector<1x32x96xbf16> to vector<32x96xbf16>
    %cst_91 = arith.constant dense<0.000000e+00> : vector<16x96xf32>
    %222 = tpu.matmul %219, %221, %cst_91 {dimension_numbers = #tpu.dot_dimension_numbers<[1], [0], [0], [1], [0, 0, 1, 1], [], []>} : vector<16x32xbf16>, vector<32x96xbf16>, vector<16x96xf32> -> vector<16x96xf32>
    %c1_92 = arith.constant 1 : index
    %c0_93 = arith.constant 0 : index
    %c0_94 = arith.constant 0 : index
    %223 = vector.load %arg6[%c1_92, %c0_93, %c0_94] : memref<4x1x96xf32, #tpu.memory_space<vmem>>, vector<1x1x96xf32>
    %224 = vector.shape_cast %223 : vector<1x1x96xf32> to vector<1x96xf32>
    %225 = vector.broadcast %224 : vector<1x96xf32> to vector<16x96xf32>
    %226 = arith.addf %222, %225 : vector<16x96xf32>
    %227 = vector.extract_strided_slice %226 {offsets = [0, 0], sizes = [16, 8], strides = [1, 1]} : vector<16x96xf32> to vector<16x8xf32>
    %228 = arith.truncf %227 : vector<16x8xf32> to vector<16x8xbf16>
    %229 = vector.extract_strided_slice %226 {offsets = [0, 32], sizes = [16, 8], strides = [1, 1]} : vector<16x96xf32> to vector<16x8xf32>
    %230 = arith.truncf %229 : vector<16x8xf32> to vector<16x8xbf16>
    %231 = vector.extract_strided_slice %226 {offsets = [0, 64], sizes = [16, 8], strides = [1, 1]} : vector<16x96xf32> to vector<16x8xf32>
    %232 = arith.truncf %231 : vector<16x8xf32> to vector<16x8xbf16>
    %cst_95 = arith.constant dense<0.000000e+00> : vector<16x16xf32>
    %233 = tpu.matmul %228, %230, %cst_95 {dimension_numbers = #tpu.dot_dimension_numbers<[1], [1], [0], [0], [0, 0, 1, 0], [], []>} : vector<16x8xbf16>, vector<16x8xbf16>, vector<16x16xf32> -> vector<16x16xf32>
    %cst_96 = arith.constant 0.353553385 : f32
    %234 = vector.broadcast %cst_96 : f32 to vector<16x16xf32>
    %235 = arith.mulf %233, %234 : vector<16x16xf32>
    %236 = arith.addf %235, %5 : vector<16x16xf32>
    %cst_97 = arith.constant dense<0xFF800000> : vector<16xf32>
    %237 = vector.multi_reduction <maximumf>, %236, %cst_97 [1] : vector<16x16xf32> to vector<16xf32>
    %238 = vector.shape_cast %237 : vector<16xf32> to vector<16x1xf32>
    %239 = vector.broadcast %238 : vector<16x1xf32> to vector<16x16xf32>
    %240 = arith.subf %236, %239 : vector<16x16xf32>
    %241 = math.exp %240 : vector<16x16xf32>
    %cst_98 = arith.constant dense<0.000000e+00> : vector<16xf32>
    %242 = vector.multi_reduction <add>, %241, %cst_98 [1] : vector<16x16xf32> to vector<16xf32>
    %243 = vector.shape_cast %242 : vector<16xf32> to vector<16x1xf32>
    %244 = tpu.reciprocal %243 {approx = true} : vector<16x1xf32> -> vector<16x1xf32>
    %245 = vector.broadcast %244 : vector<16x1xf32> to vector<16x16xf32>
    %246 = arith.mulf %241, %245 : vector<16x16xf32>
    %247 = arith.truncf %246 : vector<16x16xf32> to vector<16x16xbf16>
    %cst_99 = arith.constant dense<0.000000e+00> : vector<16x8xf32>
    %248 = tpu.matmul %247, %232, %cst_99 {dimension_numbers = #tpu.dot_dimension_numbers<[1], [0], [0], [1], [0, 0, 1, 1], [], []>} : vector<16x16xbf16>, vector<16x8xbf16>, vector<16x8xf32> -> vector<16x8xf32>
    %c0_100 = arith.constant 0 : index
    %c0_101 = arith.constant 0 : index
    %249 = vector.load %arg15[%c0_100, %c0_101] : memref<16x32xf32, #tpu.memory_space<vmem>>, vector<16x8xf32>
    tpu.vector_store %arg15[%c0_100, %c0_101], %248 {strides = array<i32>} : memref<16x32xf32, #tpu.memory_space<vmem>>, vector<16x8xf32>,
    %250 = vector.extract_strided_slice %226 {offsets = [0, 8], sizes = [16, 8], strides = [1, 1]} : vector<16x96xf32> to vector<16x8xf32>
    %251 = arith.truncf %250 : vector<16x8xf32> to vector<16x8xbf16>
    %252 = vector.extract_strided_slice %226 {offsets = [0, 40], sizes = [16, 8], strides = [1, 1]} : vector<16x96xf32> to vector<16x8xf32>
    %253 = arith.truncf %252 : vector<16x8xf32> to vector<16x8xbf16>
    %254 = vector.extract_strided_slice %226 {offsets = [0, 72], sizes = [16, 8], strides = [1, 1]} : vector<16x96xf32> to vector<16x8xf32>
    %255 = arith.truncf %254 : vector<16x8xf32> to vector<16x8xbf16>
    %cst_102 = arith.constant dense<0.000000e+00> : vector<16x16xf32>
    %256 = tpu.matmul %251, %253, %cst_102 {dimension_numbers = #tpu.dot_dimension_numbers<[1], [1], [0], [0], [0, 0, 1, 0], [], []>} : vector<16x8xbf16>, vector<16x8xbf16>, vector<16x16xf32> -> vector<16x16xf32>
    %cst_103 = arith.constant 0.353553385 : f32
    %257 = vector.broadcast %cst_103 : f32 to vector<16x16xf32>
    %258 = arith.mulf %256, %257 : vector<16x16xf32>
    %259 = arith.addf %258, %5 : vector<16x16xf32>
    %cst_104 = arith.constant dense<0xFF800000> : vector<16xf32>
    %260 = vector.multi_reduction <maximumf>, %259, %cst_104 [1] : vector<16x16xf32> to vector<16xf32>
    %261 = vector.shape_cast %260 : vector<16xf32> to vector<16x1xf32>
    %262 = vector.broadcast %261 : vector<16x1xf32> to vector<16x16xf32>
    %263 = arith.subf %259, %262 : vector<16x16xf32>
    %264 = math.exp %263 : vector<16x16xf32>
    %cst_105 = arith.constant dense<0.000000e+00> : vector<16xf32>
    %265 = vector.multi_reduction <add>, %264, %cst_105 [1] : vector<16x16xf32> to vector<16xf32>
    %266 = vector.shape_cast %265 : vector<16xf32> to vector<16x1xf32>
    %267 = tpu.reciprocal %266 {approx = true} : vector<16x1xf32> -> vector<16x1xf32>
    %268 = vector.broadcast %267 : vector<16x1xf32> to vector<16x16xf32>
    %269 = arith.mulf %264, %268 : vector<16x16xf32>
    %270 = arith.truncf %269 : vector<16x16xf32> to vector<16x16xbf16>
    %cst_106 = arith.constant dense<0.000000e+00> : vector<16x8xf32>
    %271 = tpu.matmul %270, %255, %cst_106 {dimension_numbers = #tpu.dot_dimension_numbers<[1], [0], [0], [1], [0, 0, 1, 1], [], []>} : vector<16x16xbf16>, vector<16x8xbf16>, vector<16x8xf32> -> vector<16x8xf32>
    %c0_107 = arith.constant 0 : index
    %c8_108 = arith.constant 8 : index
    %272 = vector.load %arg15[%c0_107, %c8_108] : memref<16x32xf32, #tpu.memory_space<vmem>>, vector<16x8xf32>
    tpu.vector_store %arg15[%c0_107, %c8_108], %271 {strides = array<i32>} : memref<16x32xf32, #tpu.memory_space<vmem>>, vector<16x8xf32>,
    %273 = vector.extract_strided_slice %226 {offsets = [0, 16], sizes = [16, 8], strides = [1, 1]} : vector<16x96xf32> to vector<16x8xf32>
    %274 = arith.truncf %273 : vector<16x8xf32> to vector<16x8xbf16>
    %275 = vector.extract_strided_slice %226 {offsets = [0, 48], sizes = [16, 8], strides = [1, 1]} : vector<16x96xf32> to vector<16x8xf32>
    %276 = arith.truncf %275 : vector<16x8xf32> to vector<16x8xbf16>
    %277 = vector.extract_strided_slice %226 {offsets = [0, 80], sizes = [16, 8], strides = [1, 1]} : vector<16x96xf32> to vector<16x8xf32>
    %278 = arith.truncf %277 : vector<16x8xf32> to vector<16x8xbf16>
    %cst_109 = arith.constant dense<0.000000e+00> : vector<16x16xf32>
    %279 = tpu.matmul %274, %276, %cst_109 {dimension_numbers = #tpu.dot_dimension_numbers<[1], [1], [0], [0], [0, 0, 1, 0], [], []>} : vector<16x8xbf16>, vector<16x8xbf16>, vector<16x16xf32> -> vector<16x16xf32>
    %cst_110 = arith.constant 0.353553385 : f32
    %280 = vector.broadcast %cst_110 : f32 to vector<16x16xf32>
    %281 = arith.mulf %279, %280 : vector<16x16xf32>
    %282 = arith.addf %281, %5 : vector<16x16xf32>
    %cst_111 = arith.constant dense<0xFF800000> : vector<16xf32>
    %283 = vector.multi_reduction <maximumf>, %282, %cst_111 [1] : vector<16x16xf32> to vector<16xf32>
    %284 = vector.shape_cast %283 : vector<16xf32> to vector<16x1xf32>
    %285 = vector.broadcast %284 : vector<16x1xf32> to vector<16x16xf32>
    %286 = arith.subf %282, %285 : vector<16x16xf32>
    %287 = math.exp %286 : vector<16x16xf32>
    %cst_112 = arith.constant dense<0.000000e+00> : vector<16xf32>
    %288 = vector.multi_reduction <add>, %287, %cst_112 [1] : vector<16x16xf32> to vector<16xf32>
    %289 = vector.shape_cast %288 : vector<16xf32> to vector<16x1xf32>
    %290 = tpu.reciprocal %289 {approx = true} : vector<16x1xf32> -> vector<16x1xf32>
    %291 = vector.broadcast %290 : vector<16x1xf32> to vector<16x16xf32>
    %292 = arith.mulf %287, %291 : vector<16x16xf32>
    %293 = arith.truncf %292 : vector<16x16xf32> to vector<16x16xbf16>
    %cst_113 = arith.constant dense<0.000000e+00> : vector<16x8xf32>
    %294 = tpu.matmul %293, %278, %cst_113 {dimension_numbers = #tpu.dot_dimension_numbers<[1], [0], [0], [1], [0, 0, 1, 1], [], []>} : vector<16x16xbf16>, vector<16x8xbf16>, vector<16x8xf32> -> vector<16x8xf32>
    %c0_114 = arith.constant 0 : index
    %c16_115 = arith.constant 16 : index
    %295 = vector.load %arg15[%c0_114, %c16_115] : memref<16x32xf32, #tpu.memory_space<vmem>>, vector<16x8xf32>
    tpu.vector_store %arg15[%c0_114, %c16_115], %294 {strides = array<i32>} : memref<16x32xf32, #tpu.memory_space<vmem>>, vector<16x8xf32>,
    %296 = vector.extract_strided_slice %226 {offsets = [0, 24], sizes = [16, 8], strides = [1, 1]} : vector<16x96xf32> to vector<16x8xf32>
    %297 = arith.truncf %296 : vector<16x8xf32> to vector<16x8xbf16>
    %298 = vector.extract_strided_slice %226 {offsets = [0, 56], sizes = [16, 8], strides = [1, 1]} : vector<16x96xf32> to vector<16x8xf32>
    %299 = arith.truncf %298 : vector<16x8xf32> to vector<16x8xbf16>
    %300 = vector.extract_strided_slice %226 {offsets = [0, 88], sizes = [16, 8], strides = [1, 1]} : vector<16x96xf32> to vector<16x8xf32>
    %301 = arith.truncf %300 : vector<16x8xf32> to vector<16x8xbf16>
    %cst_116 = arith.constant dense<0.000000e+00> : vector<16x16xf32>
    %302 = tpu.matmul %297, %299, %cst_116 {dimension_numbers = #tpu.dot_dimension_numbers<[1], [1], [0], [0], [0, 0, 1, 0], [], []>} : vector<16x8xbf16>, vector<16x8xbf16>, vector<16x16xf32> -> vector<16x16xf32>
    %cst_117 = arith.constant 0.353553385 : f32
    %303 = vector.broadcast %cst_117 : f32 to vector<16x16xf32>
    %304 = arith.mulf %302, %303 : vector<16x16xf32>
    %305 = arith.addf %304, %5 : vector<16x16xf32>
    %cst_118 = arith.constant dense<0xFF800000> : vector<16xf32>
    %306 = vector.multi_reduction <maximumf>, %305, %cst_118 [1] : vector<16x16xf32> to vector<16xf32>
    %307 = vector.shape_cast %306 : vector<16xf32> to vector<16x1xf32>
    %308 = vector.broadcast %307 : vector<16x1xf32> to vector<16x16xf32>
    %309 = arith.subf %305, %308 : vector<16x16xf32>
    %310 = math.exp %309 : vector<16x16xf32>
    %cst_119 = arith.constant dense<0.000000e+00> : vector<16xf32>
    %311 = vector.multi_reduction <add>, %310, %cst_119 [1] : vector<16x16xf32> to vector<16xf32>
    %312 = vector.shape_cast %311 : vector<16xf32> to vector<16x1xf32>
    %313 = tpu.reciprocal %312 {approx = true} : vector<16x1xf32> -> vector<16x1xf32>
    %314 = vector.broadcast %313 : vector<16x1xf32> to vector<16x16xf32>
    %315 = arith.mulf %310, %314 : vector<16x16xf32>
    %316 = arith.truncf %315 : vector<16x16xf32> to vector<16x16xbf16>
    %cst_120 = arith.constant dense<0.000000e+00> : vector<16x8xf32>
    %317 = tpu.matmul %316, %301, %cst_120 {dimension_numbers = #tpu.dot_dimension_numbers<[1], [0], [0], [1], [0, 0, 1, 1], [], []>} : vector<16x16xbf16>, vector<16x8xbf16>, vector<16x8xf32> -> vector<16x8xf32>
    %c0_121 = arith.constant 0 : index
    %c24_122 = arith.constant 24 : index
    %318 = vector.load %arg15[%c0_121, %c24_122] : memref<16x32xf32, #tpu.memory_space<vmem>>, vector<16x8xf32>
    tpu.vector_store %arg15[%c0_121, %c24_122], %317 {strides = array<i32>} : memref<16x32xf32, #tpu.memory_space<vmem>>, vector<16x8xf32>,
    %c0_123 = arith.constant 0 : index
    %c0_124 = arith.constant 0 : index
    %319 = vector.load %arg15[%c0_123, %c0_124] : memref<16x32xf32, #tpu.memory_space<vmem>>, vector<16x32xf32>
    %320 = arith.truncf %319 : vector<16x32xf32> to vector<16x32xbf16>
    %c1_125 = arith.constant 1 : index
    %c0_126 = arith.constant 0 : index
    %c0_127 = arith.constant 0 : index
    %321 = vector.load %arg7[%c1_125, %c0_126, %c0_127] : memref<4x32x32xbf16, #tpu.memory_space<vmem>>, vector<1x32x32xbf16>
    %322 = vector.shape_cast %321 : vector<1x32x32xbf16> to vector<32x32xbf16>
    %cst_128 = arith.constant dense<0.000000e+00> : vector<16x32xf32>
    %323 = tpu.matmul %320, %322, %cst_128 {dimension_numbers = #tpu.dot_dimension_numbers<[1], [0], [0], [1], [0, 0, 1, 1], [], []>} : vector<16x32xbf16>, vector<32x32xbf16>, vector<16x32xf32> -> vector<16x32xf32>
    %324 = arith.addf %192, %323 : vector<16x32xf32>
    %c1_129 = arith.constant 1 : index
    %c0_130 = arith.constant 0 : index
    %c0_131 = arith.constant 0 : index
    %325 = vector.load %arg8[%c1_129, %c0_130, %c0_131] : memref<4x1x32xf32, #tpu.memory_space<vmem>>, vector<1x1x32xf32>
    %326 = vector.shape_cast %325 : vector<1x1x32xf32> to vector<1x32xf32>
    %327 = vector.broadcast %326 : vector<1x32xf32> to vector<16x32xf32>
    %328 = arith.addf %324, %327 : vector<16x32xf32>
    %c1_132 = arith.constant 1 : index
    %c0_133 = arith.constant 0 : index
    %c0_134 = arith.constant 0 : index
    %329 = vector.load %arg9[%c1_132, %c0_133, %c0_134] : memref<4x2x32xf32, #tpu.memory_space<vmem>>, vector<1x2x32xf32>
    %330 = vector.shape_cast %329 : vector<1x2x32xf32> to vector<2x32xf32>
    %cst_135 = arith.constant dense<0.000000e+00> : vector<16xf32>
    %331 = vector.multi_reduction <add>, %328, %cst_135 [1] : vector<16x32xf32> to vector<16xf32>
    %332 = vector.shape_cast %331 : vector<16xf32> to vector<16x1xf32>
    %cst_136 = arith.constant 3.200000e+01 : f32
    %333 = vector.broadcast %cst_136 : f32 to vector<16x1xf32>
    %334 = arith.divf %332, %333 : vector<16x1xf32>
    %335 = vector.broadcast %334 : vector<16x1xf32> to vector<16x32xf32>
    %336 = arith.subf %328, %335 : vector<16x32xf32>
    %337 = arith.mulf %336, %336 : vector<16x32xf32>
    %cst_137 = arith.constant dense<0.000000e+00> : vector<16xf32>
    %338 = vector.multi_reduction <add>, %337, %cst_137 [1] : vector<16x32xf32> to vector<16xf32>
    %339 = vector.shape_cast %338 : vector<16xf32> to vector<16x1xf32>
    %cst_138 = arith.constant 3.200000e+01 : f32
    %340 = vector.broadcast %cst_138 : f32 to vector<16x1xf32>
    %341 = arith.divf %339, %340 : vector<16x1xf32>
    %342 = vector.broadcast %334 : vector<16x1xf32> to vector<16x32xf32>
    %343 = arith.subf %328, %342 : vector<16x32xf32>
    %cst_139 = arith.constant 9.99999997E-7 : f32
    %344 = vector.broadcast %cst_139 : f32 to vector<16x1xf32>
    %345 = arith.addf %341, %344 : vector<16x1xf32>
    %346 = math.rsqrt %345 : vector<16x1xf32>
    %347 = vector.broadcast %346 : vector<16x1xf32> to vector<16x32xf32>
    %348 = arith.mulf %343, %347 : vector<16x32xf32>
    %349 = vector.extract_strided_slice %330 {offsets = [0, 0], sizes = [1, 32], strides = [1, 1]} : vector<2x32xf32> to vector<1x32xf32>
    %350 = vector.broadcast %349 : vector<1x32xf32> to vector<16x32xf32>
    %351 = arith.mulf %348, %350 : vector<16x32xf32>
    %352 = vector.extract_strided_slice %330 {offsets = [1, 0], sizes = [1, 32], strides = [1, 1]} : vector<2x32xf32> to vector<1x32xf32>
    %353 = vector.broadcast %352 : vector<1x32xf32> to vector<16x32xf32>
    %354 = arith.addf %351, %353 : vector<16x32xf32>
    %355 = arith.truncf %354 : vector<16x32xf32> to vector<16x32xbf16>
    %c1_140 = arith.constant 1 : index
    %c0_141 = arith.constant 0 : index
    %c0_142 = arith.constant 0 : index
    %356 = vector.load %arg10[%c1_140, %c0_141, %c0_142] : memref<4x32x128xbf16, #tpu.memory_space<vmem>>, vector<1x32x128xbf16>
    %357 = vector.shape_cast %356 : vector<1x32x128xbf16> to vector<32x128xbf16>
    %cst_143 = arith.constant dense<0.000000e+00> : vector<16x128xf32>
    %358 = tpu.matmul %355, %357, %cst_143 {dimension_numbers = #tpu.dot_dimension_numbers<[1], [0], [0], [1], [0, 0, 1, 1], [], []>} : vector<16x32xbf16>, vector<32x128xbf16>, vector<16x128xf32> -> vector<16x128xf32>
    %c1_144 = arith.constant 1 : index
    %c0_145 = arith.constant 0 : index
    %c0_146 = arith.constant 0 : index
    %359 = vector.load %arg11[%c1_144, %c0_145, %c0_146] : memref<4x1x128xf32, #tpu.memory_space<vmem>>, vector<1x1x128xf32>
    %360 = vector.shape_cast %359 : vector<1x1x128xf32> to vector<1x128xf32>
    %361 = vector.broadcast %360 : vector<1x128xf32> to vector<16x128xf32>
    %362 = arith.addf %358, %361 : vector<16x128xf32>
    %cst_147 = arith.constant 5.000000e-01 : f32
    %363 = vector.broadcast %cst_147 : f32 to vector<16x128xf32>
    %364 = arith.mulf %363, %362 : vector<16x128xf32>
    %cst_148 = arith.constant 0.707106769 : f32
    %365 = vector.broadcast %cst_148 : f32 to vector<16x128xf32>
    %366 = arith.mulf %362, %365 : vector<16x128xf32>
    %367 = math.erf %366 : vector<16x128xf32>
    %cst_149 = arith.constant 1.000000e+00 : f32
    %368 = vector.broadcast %cst_149 : f32 to vector<16x128xf32>
    %369 = arith.addf %368, %367 : vector<16x128xf32>
    %370 = arith.mulf %364, %369 : vector<16x128xf32>
    %371 = arith.truncf %370 : vector<16x128xf32> to vector<16x128xbf16>
    %c1_150 = arith.constant 1 : index
    %c0_151 = arith.constant 0 : index
    %c0_152 = arith.constant 0 : index
    %372 = vector.load %arg12[%c1_150, %c0_151, %c0_152] : memref<4x128x32xbf16, #tpu.memory_space<vmem>>, vector<1x128x32xbf16>
    %373 = vector.shape_cast %372 : vector<1x128x32xbf16> to vector<128x32xbf16>
    %cst_153 = arith.constant dense<0.000000e+00> : vector<16x32xf32>
    %374 = tpu.matmul %371, %373, %cst_153 {dimension_numbers = #tpu.dot_dimension_numbers<[1], [0], [0], [1], [0, 0, 1, 1], [], []>} : vector<16x128xbf16>, vector<128x32xbf16>, vector<16x32xf32> -> vector<16x32xf32>
    %c1_154 = arith.constant 1 : index
    %c0_155 = arith.constant 0 : index
    %c0_156 = arith.constant 0 : index
    %375 = vector.load %arg13[%c1_154, %c0_155, %c0_156] : memref<4x1x32xf32, #tpu.memory_space<vmem>>, vector<1x1x32xf32>
    %376 = vector.shape_cast %375 : vector<1x1x32xf32> to vector<1x32xf32>
    %377 = vector.broadcast %376 : vector<1x32xf32> to vector<16x32xf32>
    %378 = arith.addf %374, %377 : vector<16x32xf32>
    %379 = arith.addf %328, %378 : vector<16x32xf32>
    %c2 = arith.constant 2 : index
    %c0_157 = arith.constant 0 : index
    %c0_158 = arith.constant 0 : index
    %380 = vector.load %arg4[%c2, %c0_157, %c0_158] : memref<4x2x32xf32, #tpu.memory_space<vmem>>, vector<1x2x32xf32>
    %381 = vector.shape_cast %380 : vector<1x2x32xf32> to vector<2x32xf32>
    %cst_159 = arith.constant dense<0.000000e+00> : vector<16xf32>
    %382 = vector.multi_reduction <add>, %379, %cst_159 [1] : vector<16x32xf32> to vector<16xf32>
    %383 = vector.shape_cast %382 : vector<16xf32> to vector<16x1xf32>
    %cst_160 = arith.constant 3.200000e+01 : f32
    %384 = vector.broadcast %cst_160 : f32 to vector<16x1xf32>
    %385 = arith.divf %383, %384 : vector<16x1xf32>
    %386 = vector.broadcast %385 : vector<16x1xf32> to vector<16x32xf32>
    %387 = arith.subf %379, %386 : vector<16x32xf32>
    %388 = arith.mulf %387, %387 : vector<16x32xf32>
    %cst_161 = arith.constant dense<0.000000e+00> : vector<16xf32>
    %389 = vector.multi_reduction <add>, %388, %cst_161 [1] : vector<16x32xf32> to vector<16xf32>
    %390 = vector.shape_cast %389 : vector<16xf32> to vector<16x1xf32>
    %cst_162 = arith.constant 3.200000e+01 : f32
    %391 = vector.broadcast %cst_162 : f32 to vector<16x1xf32>
    %392 = arith.divf %390, %391 : vector<16x1xf32>
    %393 = vector.broadcast %385 : vector<16x1xf32> to vector<16x32xf32>
    %394 = arith.subf %379, %393 : vector<16x32xf32>
    %cst_163 = arith.constant 9.99999997E-7 : f32
    %395 = vector.broadcast %cst_163 : f32 to vector<16x1xf32>
    %396 = arith.addf %392, %395 : vector<16x1xf32>
    %397 = math.rsqrt %396 : vector<16x1xf32>
    %398 = vector.broadcast %397 : vector<16x1xf32> to vector<16x32xf32>
    %399 = arith.mulf %394, %398 : vector<16x32xf32>
    %400 = vector.extract_strided_slice %381 {offsets = [0, 0], sizes = [1, 32], strides = [1, 1]} : vector<2x32xf32> to vector<1x32xf32>
    %401 = vector.broadcast %400 : vector<1x32xf32> to vector<16x32xf32>
    %402 = arith.mulf %399, %401 : vector<16x32xf32>
    %403 = vector.extract_strided_slice %381 {offsets = [1, 0], sizes = [1, 32], strides = [1, 1]} : vector<2x32xf32> to vector<1x32xf32>
    %404 = vector.broadcast %403 : vector<1x32xf32> to vector<16x32xf32>
    %405 = arith.addf %402, %404 : vector<16x32xf32>
    %406 = arith.truncf %405 : vector<16x32xf32> to vector<16x32xbf16>
    %c2_164 = arith.constant 2 : index
    %c0_165 = arith.constant 0 : index
    %c0_166 = arith.constant 0 : index
    %407 = vector.load %arg5[%c2_164, %c0_165, %c0_166] : memref<4x32x96xbf16, #tpu.memory_space<vmem>>, vector<1x32x96xbf16>
    %408 = vector.shape_cast %407 : vector<1x32x96xbf16> to vector<32x96xbf16>
    %cst_167 = arith.constant dense<0.000000e+00> : vector<16x96xf32>
    %409 = tpu.matmul %406, %408, %cst_167 {dimension_numbers = #tpu.dot_dimension_numbers<[1], [0], [0], [1], [0, 0, 1, 1], [], []>} : vector<16x32xbf16>, vector<32x96xbf16>, vector<16x96xf32> -> vector<16x96xf32>
    %c2_168 = arith.constant 2 : index
    %c0_169 = arith.constant 0 : index
    %c0_170 = arith.constant 0 : index
    %410 = vector.load %arg6[%c2_168, %c0_169, %c0_170] : memref<4x1x96xf32, #tpu.memory_space<vmem>>, vector<1x1x96xf32>
    %411 = vector.shape_cast %410 : vector<1x1x96xf32> to vector<1x96xf32>
    %412 = vector.broadcast %411 : vector<1x96xf32> to vector<16x96xf32>
    %413 = arith.addf %409, %412 : vector<16x96xf32>
    %414 = vector.extract_strided_slice %413 {offsets = [0, 0], sizes = [16, 8], strides = [1, 1]} : vector<16x96xf32> to vector<16x8xf32>
    %415 = arith.truncf %414 : vector<16x8xf32> to vector<16x8xbf16>
    %416 = vector.extract_strided_slice %413 {offsets = [0, 32], sizes = [16, 8], strides = [1, 1]} : vector<16x96xf32> to vector<16x8xf32>
    %417 = arith.truncf %416 : vector<16x8xf32> to vector<16x8xbf16>
    %418 = vector.extract_strided_slice %413 {offsets = [0, 64], sizes = [16, 8], strides = [1, 1]} : vector<16x96xf32> to vector<16x8xf32>
    %419 = arith.truncf %418 : vector<16x8xf32> to vector<16x8xbf16>
    %cst_171 = arith.constant dense<0.000000e+00> : vector<16x16xf32>
    %420 = tpu.matmul %415, %417, %cst_171 {dimension_numbers = #tpu.dot_dimension_numbers<[1], [1], [0], [0], [0, 0, 1, 0], [], []>} : vector<16x8xbf16>, vector<16x8xbf16>, vector<16x16xf32> -> vector<16x16xf32>
    %cst_172 = arith.constant 0.353553385 : f32
    %421 = vector.broadcast %cst_172 : f32 to vector<16x16xf32>
    %422 = arith.mulf %420, %421 : vector<16x16xf32>
    %423 = arith.addf %422, %5 : vector<16x16xf32>
    %cst_173 = arith.constant dense<0xFF800000> : vector<16xf32>
    %424 = vector.multi_reduction <maximumf>, %423, %cst_173 [1] : vector<16x16xf32> to vector<16xf32>
    %425 = vector.shape_cast %424 : vector<16xf32> to vector<16x1xf32>
    %426 = vector.broadcast %425 : vector<16x1xf32> to vector<16x16xf32>
    %427 = arith.subf %423, %426 : vector<16x16xf32>
    %428 = math.exp %427 : vector<16x16xf32>
    %cst_174 = arith.constant dense<0.000000e+00> : vector<16xf32>
    %429 = vector.multi_reduction <add>, %428, %cst_174 [1] : vector<16x16xf32> to vector<16xf32>
    %430 = vector.shape_cast %429 : vector<16xf32> to vector<16x1xf32>
    %431 = tpu.reciprocal %430 {approx = true} : vector<16x1xf32> -> vector<16x1xf32>
    %432 = vector.broadcast %431 : vector<16x1xf32> to vector<16x16xf32>
    %433 = arith.mulf %428, %432 : vector<16x16xf32>
    %434 = arith.truncf %433 : vector<16x16xf32> to vector<16x16xbf16>
    %cst_175 = arith.constant dense<0.000000e+00> : vector<16x8xf32>
    %435 = tpu.matmul %434, %419, %cst_175 {dimension_numbers = #tpu.dot_dimension_numbers<[1], [0], [0], [1], [0, 0, 1, 1], [], []>} : vector<16x16xbf16>, vector<16x8xbf16>, vector<16x8xf32> -> vector<16x8xf32>
    %c0_176 = arith.constant 0 : index
    %c0_177 = arith.constant 0 : index
    %436 = vector.load %arg15[%c0_176, %c0_177] : memref<16x32xf32, #tpu.memory_space<vmem>>, vector<16x8xf32>
    tpu.vector_store %arg15[%c0_176, %c0_177], %435 {strides = array<i32>} : memref<16x32xf32, #tpu.memory_space<vmem>>, vector<16x8xf32>,
    %437 = vector.extract_strided_slice %413 {offsets = [0, 8], sizes = [16, 8], strides = [1, 1]} : vector<16x96xf32> to vector<16x8xf32>
    %438 = arith.truncf %437 : vector<16x8xf32> to vector<16x8xbf16>
    %439 = vector.extract_strided_slice %413 {offsets = [0, 40], sizes = [16, 8], strides = [1, 1]} : vector<16x96xf32> to vector<16x8xf32>
    %440 = arith.truncf %439 : vector<16x8xf32> to vector<16x8xbf16>
    %441 = vector.extract_strided_slice %413 {offsets = [0, 72], sizes = [16, 8], strides = [1, 1]} : vector<16x96xf32> to vector<16x8xf32>
    %442 = arith.truncf %441 : vector<16x8xf32> to vector<16x8xbf16>
    %cst_178 = arith.constant dense<0.000000e+00> : vector<16x16xf32>
    %443 = tpu.matmul %438, %440, %cst_178 {dimension_numbers = #tpu.dot_dimension_numbers<[1], [1], [0], [0], [0, 0, 1, 0], [], []>} : vector<16x8xbf16>, vector<16x8xbf16>, vector<16x16xf32> -> vector<16x16xf32>
    %cst_179 = arith.constant 0.353553385 : f32
    %444 = vector.broadcast %cst_179 : f32 to vector<16x16xf32>
    %445 = arith.mulf %443, %444 : vector<16x16xf32>
    %446 = arith.addf %445, %5 : vector<16x16xf32>
    %cst_180 = arith.constant dense<0xFF800000> : vector<16xf32>
    %447 = vector.multi_reduction <maximumf>, %446, %cst_180 [1] : vector<16x16xf32> to vector<16xf32>
    %448 = vector.shape_cast %447 : vector<16xf32> to vector<16x1xf32>
    %449 = vector.broadcast %448 : vector<16x1xf32> to vector<16x16xf32>
    %450 = arith.subf %446, %449 : vector<16x16xf32>
    %451 = math.exp %450 : vector<16x16xf32>
    %cst_181 = arith.constant dense<0.000000e+00> : vector<16xf32>
    %452 = vector.multi_reduction <add>, %451, %cst_181 [1] : vector<16x16xf32> to vector<16xf32>
    %453 = vector.shape_cast %452 : vector<16xf32> to vector<16x1xf32>
    %454 = tpu.reciprocal %453 {approx = true} : vector<16x1xf32> -> vector<16x1xf32>
    %455 = vector.broadcast %454 : vector<16x1xf32> to vector<16x16xf32>
    %456 = arith.mulf %451, %455 : vector<16x16xf32>
    %457 = arith.truncf %456 : vector<16x16xf32> to vector<16x16xbf16>
    %cst_182 = arith.constant dense<0.000000e+00> : vector<16x8xf32>
    %458 = tpu.matmul %457, %442, %cst_182 {dimension_numbers = #tpu.dot_dimension_numbers<[1], [0], [0], [1], [0, 0, 1, 1], [], []>} : vector<16x16xbf16>, vector<16x8xbf16>, vector<16x8xf32> -> vector<16x8xf32>
    %c0_183 = arith.constant 0 : index
    %c8_184 = arith.constant 8 : index
    %459 = vector.load %arg15[%c0_183, %c8_184] : memref<16x32xf32, #tpu.memory_space<vmem>>, vector<16x8xf32>
    tpu.vector_store %arg15[%c0_183, %c8_184], %458 {strides = array<i32>} : memref<16x32xf32, #tpu.memory_space<vmem>>, vector<16x8xf32>,
    %460 = vector.extract_strided_slice %413 {offsets = [0, 16], sizes = [16, 8], strides = [1, 1]} : vector<16x96xf32> to vector<16x8xf32>
    %461 = arith.truncf %460 : vector<16x8xf32> to vector<16x8xbf16>
    %462 = vector.extract_strided_slice %413 {offsets = [0, 48], sizes = [16, 8], strides = [1, 1]} : vector<16x96xf32> to vector<16x8xf32>
    %463 = arith.truncf %462 : vector<16x8xf32> to vector<16x8xbf16>
    %464 = vector.extract_strided_slice %413 {offsets = [0, 80], sizes = [16, 8], strides = [1, 1]} : vector<16x96xf32> to vector<16x8xf32>
    %465 = arith.truncf %464 : vector<16x8xf32> to vector<16x8xbf16>
    %cst_185 = arith.constant dense<0.000000e+00> : vector<16x16xf32>
    %466 = tpu.matmul %461, %463, %cst_185 {dimension_numbers = #tpu.dot_dimension_numbers<[1], [1], [0], [0], [0, 0, 1, 0], [], []>} : vector<16x8xbf16>, vector<16x8xbf16>, vector<16x16xf32> -> vector<16x16xf32>
    %cst_186 = arith.constant 0.353553385 : f32
    %467 = vector.broadcast %cst_186 : f32 to vector<16x16xf32>
    %468 = arith.mulf %466, %467 : vector<16x16xf32>
    %469 = arith.addf %468, %5 : vector<16x16xf32>
    %cst_187 = arith.constant dense<0xFF800000> : vector<16xf32>
    %470 = vector.multi_reduction <maximumf>, %469, %cst_187 [1] : vector<16x16xf32> to vector<16xf32>
    %471 = vector.shape_cast %470 : vector<16xf32> to vector<16x1xf32>
    %472 = vector.broadcast %471 : vector<16x1xf32> to vector<16x16xf32>
    %473 = arith.subf %469, %472 : vector<16x16xf32>
    %474 = math.exp %473 : vector<16x16xf32>
    %cst_188 = arith.constant dense<0.000000e+00> : vector<16xf32>
    %475 = vector.multi_reduction <add>, %474, %cst_188 [1] : vector<16x16xf32> to vector<16xf32>
    %476 = vector.shape_cast %475 : vector<16xf32> to vector<16x1xf32>
    %477 = tpu.reciprocal %476 {approx = true} : vector<16x1xf32> -> vector<16x1xf32>
    %478 = vector.broadcast %477 : vector<16x1xf32> to vector<16x16xf32>
    %479 = arith.mulf %474, %478 : vector<16x16xf32>
    %480 = arith.truncf %479 : vector<16x16xf32> to vector<16x16xbf16>
    %cst_189 = arith.constant dense<0.000000e+00> : vector<16x8xf32>
    %481 = tpu.matmul %480, %465, %cst_189 {dimension_numbers = #tpu.dot_dimension_numbers<[1], [0], [0], [1], [0, 0, 1, 1], [], []>} : vector<16x16xbf16>, vector<16x8xbf16>, vector<16x8xf32> -> vector<16x8xf32>
    %c0_190 = arith.constant 0 : index
    %c16_191 = arith.constant 16 : index
    %482 = vector.load %arg15[%c0_190, %c16_191] : memref<16x32xf32, #tpu.memory_space<vmem>>, vector<16x8xf32>
    tpu.vector_store %arg15[%c0_190, %c16_191], %481 {strides = array<i32>} : memref<16x32xf32, #tpu.memory_space<vmem>>, vector<16x8xf32>,
    %483 = vector.extract_strided_slice %413 {offsets = [0, 24], sizes = [16, 8], strides = [1, 1]} : vector<16x96xf32> to vector<16x8xf32>
    %484 = arith.truncf %483 : vector<16x8xf32> to vector<16x8xbf16>
    %485 = vector.extract_strided_slice %413 {offsets = [0, 56], sizes = [16, 8], strides = [1, 1]} : vector<16x96xf32> to vector<16x8xf32>
    %486 = arith.truncf %485 : vector<16x8xf32> to vector<16x8xbf16>
    %487 = vector.extract_strided_slice %413 {offsets = [0, 88], sizes = [16, 8], strides = [1, 1]} : vector<16x96xf32> to vector<16x8xf32>
    %488 = arith.truncf %487 : vector<16x8xf32> to vector<16x8xbf16>
    %cst_192 = arith.constant dense<0.000000e+00> : vector<16x16xf32>
    %489 = tpu.matmul %484, %486, %cst_192 {dimension_numbers = #tpu.dot_dimension_numbers<[1], [1], [0], [0], [0, 0, 1, 0], [], []>} : vector<16x8xbf16>, vector<16x8xbf16>, vector<16x16xf32> -> vector<16x16xf32>
    %cst_193 = arith.constant 0.353553385 : f32
    %490 = vector.broadcast %cst_193 : f32 to vector<16x16xf32>
    %491 = arith.mulf %489, %490 : vector<16x16xf32>
    %492 = arith.addf %491, %5 : vector<16x16xf32>
    %cst_194 = arith.constant dense<0xFF800000> : vector<16xf32>
    %493 = vector.multi_reduction <maximumf>, %492, %cst_194 [1] : vector<16x16xf32> to vector<16xf32>
    %494 = vector.shape_cast %493 : vector<16xf32> to vector<16x1xf32>
    %495 = vector.broadcast %494 : vector<16x1xf32> to vector<16x16xf32>
    %496 = arith.subf %492, %495 : vector<16x16xf32>
    %497 = math.exp %496 : vector<16x16xf32>
    %cst_195 = arith.constant dense<0.000000e+00> : vector<16xf32>
    %498 = vector.multi_reduction <add>, %497, %cst_195 [1] : vector<16x16xf32> to vector<16xf32>
    %499 = vector.shape_cast %498 : vector<16xf32> to vector<16x1xf32>
    %500 = tpu.reciprocal %499 {approx = true} : vector<16x1xf32> -> vector<16x1xf32>
    %501 = vector.broadcast %500 : vector<16x1xf32> to vector<16x16xf32>
    %502 = arith.mulf %497, %501 : vector<16x16xf32>
    %503 = arith.truncf %502 : vector<16x16xf32> to vector<16x16xbf16>
    %cst_196 = arith.constant dense<0.000000e+00> : vector<16x8xf32>
    %504 = tpu.matmul %503, %488, %cst_196 {dimension_numbers = #tpu.dot_dimension_numbers<[1], [0], [0], [1], [0, 0, 1, 1], [], []>} : vector<16x16xbf16>, vector<16x8xbf16>, vector<16x8xf32> -> vector<16x8xf32>
    %c0_197 = arith.constant 0 : index
    %c24_198 = arith.constant 24 : index
    %505 = vector.load %arg15[%c0_197, %c24_198] : memref<16x32xf32, #tpu.memory_space<vmem>>, vector<16x8xf32>
    tpu.vector_store %arg15[%c0_197, %c24_198], %504 {strides = array<i32>} : memref<16x32xf32, #tpu.memory_space<vmem>>, vector<16x8xf32>,
    %c0_199 = arith.constant 0 : index
    %c0_200 = arith.constant 0 : index
    %506 = vector.load %arg15[%c0_199, %c0_200] : memref<16x32xf32, #tpu.memory_space<vmem>>, vector<16x32xf32>
    %507 = arith.truncf %506 : vector<16x32xf32> to vector<16x32xbf16>
    %c2_201 = arith.constant 2 : index
    %c0_202 = arith.constant 0 : index
    %c0_203 = arith.constant 0 : index
    %508 = vector.load %arg7[%c2_201, %c0_202, %c0_203] : memref<4x32x32xbf16, #tpu.memory_space<vmem>>, vector<1x32x32xbf16>
    %509 = vector.shape_cast %508 : vector<1x32x32xbf16> to vector<32x32xbf16>
    %cst_204 = arith.constant dense<0.000000e+00> : vector<16x32xf32>
    %510 = tpu.matmul %507, %509, %cst_204 {dimension_numbers = #tpu.dot_dimension_numbers<[1], [0], [0], [1], [0, 0, 1, 1], [], []>} : vector<16x32xbf16>, vector<32x32xbf16>, vector<16x32xf32> -> vector<16x32xf32>
    %511 = arith.addf %379, %510 : vector<16x32xf32>
    %c2_205 = arith.constant 2 : index
    %c0_206 = arith.constant 0 : index
    %c0_207 = arith.constant 0 : index
    %512 = vector.load %arg8[%c2_205, %c0_206, %c0_207] : memref<4x1x32xf32, #tpu.memory_space<vmem>>, vector<1x1x32xf32>
    %513 = vector.shape_cast %512 : vector<1x1x32xf32> to vector<1x32xf32>
    %514 = vector.broadcast %513 : vector<1x32xf32> to vector<16x32xf32>
    %515 = arith.addf %511, %514 : vector<16x32xf32>
    %c2_208 = arith.constant 2 : index
    %c0_209 = arith.constant 0 : index
    %c0_210 = arith.constant 0 : index
    %516 = vector.load %arg9[%c2_208, %c0_209, %c0_210] : memref<4x2x32xf32, #tpu.memory_space<vmem>>, vector<1x2x32xf32>
    %517 = vector.shape_cast %516 : vector<1x2x32xf32> to vector<2x32xf32>
    %cst_211 = arith.constant dense<0.000000e+00> : vector<16xf32>
    %518 = vector.multi_reduction <add>, %515, %cst_211 [1] : vector<16x32xf32> to vector<16xf32>
    %519 = vector.shape_cast %518 : vector<16xf32> to vector<16x1xf32>
    %cst_212 = arith.constant 3.200000e+01 : f32
    %520 = vector.broadcast %cst_212 : f32 to vector<16x1xf32>
    %521 = arith.divf %519, %520 : vector<16x1xf32>
    %522 = vector.broadcast %521 : vector<16x1xf32> to vector<16x32xf32>
    %523 = arith.subf %515, %522 : vector<16x32xf32>
    %524 = arith.mulf %523, %523 : vector<16x32xf32>
    %cst_213 = arith.constant dense<0.000000e+00> : vector<16xf32>
    %525 = vector.multi_reduction <add>, %524, %cst_213 [1] : vector<16x32xf32> to vector<16xf32>
    %526 = vector.shape_cast %525 : vector<16xf32> to vector<16x1xf32>
    %cst_214 = arith.constant 3.200000e+01 : f32
    %527 = vector.broadcast %cst_214 : f32 to vector<16x1xf32>
    %528 = arith.divf %526, %527 : vector<16x1xf32>
    %529 = vector.broadcast %521 : vector<16x1xf32> to vector<16x32xf32>
    %530 = arith.subf %515, %529 : vector<16x32xf32>
    %cst_215 = arith.constant 9.99999997E-7 : f32
    %531 = vector.broadcast %cst_215 : f32 to vector<16x1xf32>
    %532 = arith.addf %528, %531 : vector<16x1xf32>
    %533 = math.rsqrt %532 : vector<16x1xf32>
    %534 = vector.broadcast %533 : vector<16x1xf32> to vector<16x32xf32>
    %535 = arith.mulf %530, %534 : vector<16x32xf32>
    %536 = vector.extract_strided_slice %517 {offsets = [0, 0], sizes = [1, 32], strides = [1, 1]} : vector<2x32xf32> to vector<1x32xf32>
    %537 = vector.broadcast %536 : vector<1x32xf32> to vector<16x32xf32>
    %538 = arith.mulf %535, %537 : vector<16x32xf32>
    %539 = vector.extract_strided_slice %517 {offsets = [1, 0], sizes = [1, 32], strides = [1, 1]} : vector<2x32xf32> to vector<1x32xf32>
    %540 = vector.broadcast %539 : vector<1x32xf32> to vector<16x32xf32>
    %541 = arith.addf %538, %540 : vector<16x32xf32>
    %542 = arith.truncf %541 : vector<16x32xf32> to vector<16x32xbf16>
    %c2_216 = arith.constant 2 : index
    %c0_217 = arith.constant 0 : index
    %c0_218 = arith.constant 0 : index
    %543 = vector.load %arg10[%c2_216, %c0_217, %c0_218] : memref<4x32x128xbf16, #tpu.memory_space<vmem>>, vector<1x32x128xbf16>
    %544 = vector.shape_cast %543 : vector<1x32x128xbf16> to vector<32x128xbf16>
    %cst_219 = arith.constant dense<0.000000e+00> : vector<16x128xf32>
    %545 = tpu.matmul %542, %544, %cst_219 {dimension_numbers = #tpu.dot_dimension_numbers<[1], [0], [0], [1], [0, 0, 1, 1], [], []>} : vector<16x32xbf16>, vector<32x128xbf16>, vector<16x128xf32> -> vector<16x128xf32>
    %c2_220 = arith.constant 2 : index
    %c0_221 = arith.constant 0 : index
    %c0_222 = arith.constant 0 : index
    %546 = vector.load %arg11[%c2_220, %c0_221, %c0_222] : memref<4x1x128xf32, #tpu.memory_space<vmem>>, vector<1x1x128xf32>
    %547 = vector.shape_cast %546 : vector<1x1x128xf32> to vector<1x128xf32>
    %548 = vector.broadcast %547 : vector<1x128xf32> to vector<16x128xf32>
    %549 = arith.addf %545, %548 : vector<16x128xf32>
    %cst_223 = arith.constant 5.000000e-01 : f32
    %550 = vector.broadcast %cst_223 : f32 to vector<16x128xf32>
    %551 = arith.mulf %550, %549 : vector<16x128xf32>
    %cst_224 = arith.constant 0.707106769 : f32
    %552 = vector.broadcast %cst_224 : f32 to vector<16x128xf32>
    %553 = arith.mulf %549, %552 : vector<16x128xf32>
    %554 = math.erf %553 : vector<16x128xf32>
    %cst_225 = arith.constant 1.000000e+00 : f32
    %555 = vector.broadcast %cst_225 : f32 to vector<16x128xf32>
    %556 = arith.addf %555, %554 : vector<16x128xf32>
    %557 = arith.mulf %551, %556 : vector<16x128xf32>
    %558 = arith.truncf %557 : vector<16x128xf32> to vector<16x128xbf16>
    %c2_226 = arith.constant 2 : index
    %c0_227 = arith.constant 0 : index
    %c0_228 = arith.constant 0 : index
    %559 = vector.load %arg12[%c2_226, %c0_227, %c0_228] : memref<4x128x32xbf16, #tpu.memory_space<vmem>>, vector<1x128x32xbf16>
    %560 = vector.shape_cast %559 : vector<1x128x32xbf16> to vector<128x32xbf16>
    %cst_229 = arith.constant dense<0.000000e+00> : vector<16x32xf32>
    %561 = tpu.matmul %558, %560, %cst_229 {dimension_numbers = #tpu.dot_dimension_numbers<[1], [0], [0], [1], [0, 0, 1, 1], [], []>} : vector<16x128xbf16>, vector<128x32xbf16>, vector<16x32xf32> -> vector<16x32xf32>
    %c2_230 = arith.constant 2 : index
    %c0_231 = arith.constant 0 : index
    %c0_232 = arith.constant 0 : index
    %562 = vector.load %arg13[%c2_230, %c0_231, %c0_232] : memref<4x1x32xf32, #tpu.memory_space<vmem>>, vector<1x1x32xf32>
    %563 = vector.shape_cast %562 : vector<1x1x32xf32> to vector<1x32xf32>
    %564 = vector.broadcast %563 : vector<1x32xf32> to vector<16x32xf32>
    %565 = arith.addf %561, %564 : vector<16x32xf32>
    %566 = arith.addf %515, %565 : vector<16x32xf32>
    %c0_233 = arith.constant 0 : index
    %c0_234 = arith.constant 0 : index
    %c0_235 = arith.constant 0 : index
    %567 = vector.load %arg14[%c0_233, %c0_234, %c0_235] : memref<2x16x32xf32, #tpu.memory_space<vmem>>, vector<1x16x32xf32>
    %568 = vector.shape_cast %567 : vector<1x16x32xf32> to vector<16x32xf32>
    %569 = vector.shape_cast %566 : vector<16x32xf32> to vector<1x16x32xf32>
    tpu.vector_store %arg14[%c0_233, %c0_234, %c0_235], %569 {strides = array<i32>} : memref<2x16x32xf32, #tpu.memory_space<vmem>>, vector<1x16x32xf32>,
    %c3 = arith.constant 3 : index
    %c0_236 = arith.constant 0 : index
    %c0_237 = arith.constant 0 : index
    %570 = vector.load %arg4[%c3, %c0_236, %c0_237] : memref<4x2x32xf32, #tpu.memory_space<vmem>>, vector<1x2x32xf32>
    %571 = vector.shape_cast %570 : vector<1x2x32xf32> to vector<2x32xf32>
    %cst_238 = arith.constant dense<0.000000e+00> : vector<16xf32>
    %572 = vector.multi_reduction <add>, %566, %cst_238 [1] : vector<16x32xf32> to vector<16xf32>
    %573 = vector.shape_cast %572 : vector<16xf32> to vector<16x1xf32>
    %cst_239 = arith.constant 3.200000e+01 : f32
    %574 = vector.broadcast %cst_239 : f32 to vector<16x1xf32>
    %575 = arith.divf %573, %574 : vector<16x1xf32>
    %576 = vector.broadcast %575 : vector<16x1xf32> to vector<16x32xf32>
    %577 = arith.subf %566, %576 : vector<16x32xf32>
    %578 = arith.mulf %577, %577 : vector<16x32xf32>
    %cst_240 = arith.constant dense<0.000000e+00> : vector<16xf32>
    %579 = vector.multi_reduction <add>, %578, %cst_240 [1] : vector<16x32xf32> to vector<16xf32>
    %580 = vector.shape_cast %579 : vector<16xf32> to vector<16x1xf32>
    %cst_241 = arith.constant 3.200000e+01 : f32
    %581 = vector.broadcast %cst_241 : f32 to vector<16x1xf32>
    %582 = arith.divf %580, %581 : vector<16x1xf32>
    %583 = vector.broadcast %575 : vector<16x1xf32> to vector<16x32xf32>
    %584 = arith.subf %566, %583 : vector<16x32xf32>
    %cst_242 = arith.constant 9.99999997E-7 : f32
    %585 = vector.broadcast %cst_242 : f32 to vector<16x1xf32>
    %586 = arith.addf %582, %585 : vector<16x1xf32>
    %587 = math.rsqrt %586 : vector<16x1xf32>
    %588 = vector.broadcast %587 : vector<16x1xf32> to vector<16x32xf32>
    %589 = arith.mulf %584, %588 : vector<16x32xf32>
    %590 = vector.extract_strided_slice %571 {offsets = [0, 0], sizes = [1, 32], strides = [1, 1]} : vector<2x32xf32> to vector<1x32xf32>
    %591 = vector.broadcast %590 : vector<1x32xf32> to vector<16x32xf32>
    %592 = arith.mulf %589, %591 : vector<16x32xf32>
    %593 = vector.extract_strided_slice %571 {offsets = [1, 0], sizes = [1, 32], strides = [1, 1]} : vector<2x32xf32> to vector<1x32xf32>
    %594 = vector.broadcast %593 : vector<1x32xf32> to vector<16x32xf32>
    %595 = arith.addf %592, %594 : vector<16x32xf32>
    %596 = arith.truncf %595 : vector<16x32xf32> to vector<16x32xbf16>
    %c3_243 = arith.constant 3 : index
    %c0_244 = arith.constant 0 : index
    %c0_245 = arith.constant 0 : index
    %597 = vector.load %arg5[%c3_243, %c0_244, %c0_245] : memref<4x32x96xbf16, #tpu.memory_space<vmem>>, vector<1x32x96xbf16>
    %598 = vector.shape_cast %597 : vector<1x32x96xbf16> to vector<32x96xbf16>
    %cst_246 = arith.constant dense<0.000000e+00> : vector<16x96xf32>
    %599 = tpu.matmul %596, %598, %cst_246 {dimension_numbers = #tpu.dot_dimension_numbers<[1], [0], [0], [1], [0, 0, 1, 1], [], []>} : vector<16x32xbf16>, vector<32x96xbf16>, vector<16x96xf32> -> vector<16x96xf32>
    %c3_247 = arith.constant 3 : index
    %c0_248 = arith.constant 0 : index
    %c0_249 = arith.constant 0 : index
    %600 = vector.load %arg6[%c3_247, %c0_248, %c0_249] : memref<4x1x96xf32, #tpu.memory_space<vmem>>, vector<1x1x96xf32>
    %601 = vector.shape_cast %600 : vector<1x1x96xf32> to vector<1x96xf32>
    %602 = vector.broadcast %601 : vector<1x96xf32> to vector<16x96xf32>
    %603 = arith.addf %599, %602 : vector<16x96xf32>
    %604 = vector.extract_strided_slice %603 {offsets = [0, 0], sizes = [16, 8], strides = [1, 1]} : vector<16x96xf32> to vector<16x8xf32>
    %605 = arith.truncf %604 : vector<16x8xf32> to vector<16x8xbf16>
    %606 = vector.extract_strided_slice %603 {offsets = [0, 32], sizes = [16, 8], strides = [1, 1]} : vector<16x96xf32> to vector<16x8xf32>
    %607 = arith.truncf %606 : vector<16x8xf32> to vector<16x8xbf16>
    %608 = vector.extract_strided_slice %603 {offsets = [0, 64], sizes = [16, 8], strides = [1, 1]} : vector<16x96xf32> to vector<16x8xf32>
    %609 = arith.truncf %608 : vector<16x8xf32> to vector<16x8xbf16>
    %cst_250 = arith.constant dense<0.000000e+00> : vector<16x16xf32>
    %610 = tpu.matmul %605, %607, %cst_250 {dimension_numbers = #tpu.dot_dimension_numbers<[1], [1], [0], [0], [0, 0, 1, 0], [], []>} : vector<16x8xbf16>, vector<16x8xbf16>, vector<16x16xf32> -> vector<16x16xf32>
    %cst_251 = arith.constant 0.353553385 : f32
    %611 = vector.broadcast %cst_251 : f32 to vector<16x16xf32>
    %612 = arith.mulf %610, %611 : vector<16x16xf32>
    %613 = arith.addf %612, %5 : vector<16x16xf32>
    %cst_252 = arith.constant dense<0xFF800000> : vector<16xf32>
    %614 = vector.multi_reduction <maximumf>, %613, %cst_252 [1] : vector<16x16xf32> to vector<16xf32>
    %615 = vector.shape_cast %614 : vector<16xf32> to vector<16x1xf32>
    %616 = vector.broadcast %615 : vector<16x1xf32> to vector<16x16xf32>
    %617 = arith.subf %613, %616 : vector<16x16xf32>
    %618 = math.exp %617 : vector<16x16xf32>
    %cst_253 = arith.constant dense<0.000000e+00> : vector<16xf32>
    %619 = vector.multi_reduction <add>, %618, %cst_253 [1] : vector<16x16xf32> to vector<16xf32>
    %620 = vector.shape_cast %619 : vector<16xf32> to vector<16x1xf32>
    %621 = tpu.reciprocal %620 {approx = true} : vector<16x1xf32> -> vector<16x1xf32>
    %622 = vector.broadcast %621 : vector<16x1xf32> to vector<16x16xf32>
    %623 = arith.mulf %618, %622 : vector<16x16xf32>
    %624 = arith.truncf %623 : vector<16x16xf32> to vector<16x16xbf16>
    %cst_254 = arith.constant dense<0.000000e+00> : vector<16x8xf32>
    %625 = tpu.matmul %624, %609, %cst_254 {dimension_numbers = #tpu.dot_dimension_numbers<[1], [0], [0], [1], [0, 0, 1, 1], [], []>} : vector<16x16xbf16>, vector<16x8xbf16>, vector<16x8xf32> -> vector<16x8xf32>
    %c0_255 = arith.constant 0 : index
    %c0_256 = arith.constant 0 : index
    %626 = vector.load %arg15[%c0_255, %c0_256] : memref<16x32xf32, #tpu.memory_space<vmem>>, vector<16x8xf32>
    tpu.vector_store %arg15[%c0_255, %c0_256], %625 {strides = array<i32>} : memref<16x32xf32, #tpu.memory_space<vmem>>, vector<16x8xf32>,
    %627 = vector.extract_strided_slice %603 {offsets = [0, 8], sizes = [16, 8], strides = [1, 1]} : vector<16x96xf32> to vector<16x8xf32>
    %628 = arith.truncf %627 : vector<16x8xf32> to vector<16x8xbf16>
    %629 = vector.extract_strided_slice %603 {offsets = [0, 40], sizes = [16, 8], strides = [1, 1]} : vector<16x96xf32> to vector<16x8xf32>
    %630 = arith.truncf %629 : vector<16x8xf32> to vector<16x8xbf16>
    %631 = vector.extract_strided_slice %603 {offsets = [0, 72], sizes = [16, 8], strides = [1, 1]} : vector<16x96xf32> to vector<16x8xf32>
    %632 = arith.truncf %631 : vector<16x8xf32> to vector<16x8xbf16>
    %cst_257 = arith.constant dense<0.000000e+00> : vector<16x16xf32>
    %633 = tpu.matmul %628, %630, %cst_257 {dimension_numbers = #tpu.dot_dimension_numbers<[1], [1], [0], [0], [0, 0, 1, 0], [], []>} : vector<16x8xbf16>, vector<16x8xbf16>, vector<16x16xf32> -> vector<16x16xf32>
    %cst_258 = arith.constant 0.353553385 : f32
    %634 = vector.broadcast %cst_258 : f32 to vector<16x16xf32>
    %635 = arith.mulf %633, %634 : vector<16x16xf32>
    %636 = arith.addf %635, %5 : vector<16x16xf32>
    %cst_259 = arith.constant dense<0xFF800000> : vector<16xf32>
    %637 = vector.multi_reduction <maximumf>, %636, %cst_259 [1] : vector<16x16xf32> to vector<16xf32>
    %638 = vector.shape_cast %637 : vector<16xf32> to vector<16x1xf32>
    %639 = vector.broadcast %638 : vector<16x1xf32> to vector<16x16xf32>
    %640 = arith.subf %636, %639 : vector<16x16xf32>
    %641 = math.exp %640 : vector<16x16xf32>
    %cst_260 = arith.constant dense<0.000000e+00> : vector<16xf32>
    %642 = vector.multi_reduction <add>, %641, %cst_260 [1] : vector<16x16xf32> to vector<16xf32>
    %643 = vector.shape_cast %642 : vector<16xf32> to vector<16x1xf32>
    %644 = tpu.reciprocal %643 {approx = true} : vector<16x1xf32> -> vector<16x1xf32>
    %645 = vector.broadcast %644 : vector<16x1xf32> to vector<16x16xf32>
    %646 = arith.mulf %641, %645 : vector<16x16xf32>
    %647 = arith.truncf %646 : vector<16x16xf32> to vector<16x16xbf16>
    %cst_261 = arith.constant dense<0.000000e+00> : vector<16x8xf32>
    %648 = tpu.matmul %647, %632, %cst_261 {dimension_numbers = #tpu.dot_dimension_numbers<[1], [0], [0], [1], [0, 0, 1, 1], [], []>} : vector<16x16xbf16>, vector<16x8xbf16>, vector<16x8xf32> -> vector<16x8xf32>
    %c0_262 = arith.constant 0 : index
    %c8_263 = arith.constant 8 : index
    %649 = vector.load %arg15[%c0_262, %c8_263] : memref<16x32xf32, #tpu.memory_space<vmem>>, vector<16x8xf32>
    tpu.vector_store %arg15[%c0_262, %c8_263], %648 {strides = array<i32>} : memref<16x32xf32, #tpu.memory_space<vmem>>, vector<16x8xf32>,
    %650 = vector.extract_strided_slice %603 {offsets = [0, 16], sizes = [16, 8], strides = [1, 1]} : vector<16x96xf32> to vector<16x8xf32>
    %651 = arith.truncf %650 : vector<16x8xf32> to vector<16x8xbf16>
    %652 = vector.extract_strided_slice %603 {offsets = [0, 48], sizes = [16, 8], strides = [1, 1]} : vector<16x96xf32> to vector<16x8xf32>
    %653 = arith.truncf %652 : vector<16x8xf32> to vector<16x8xbf16>
    %654 = vector.extract_strided_slice %603 {offsets = [0, 80], sizes = [16, 8], strides = [1, 1]} : vector<16x96xf32> to vector<16x8xf32>
    %655 = arith.truncf %654 : vector<16x8xf32> to vector<16x8xbf16>
    %cst_264 = arith.constant dense<0.000000e+00> : vector<16x16xf32>
    %656 = tpu.matmul %651, %653, %cst_264 {dimension_numbers = #tpu.dot_dimension_numbers<[1], [1], [0], [0], [0, 0, 1, 0], [], []>} : vector<16x8xbf16>, vector<16x8xbf16>, vector<16x16xf32> -> vector<16x16xf32>
    %cst_265 = arith.constant 0.353553385 : f32
    %657 = vector.broadcast %cst_265 : f32 to vector<16x16xf32>
    %658 = arith.mulf %656, %657 : vector<16x16xf32>
    %659 = arith.addf %658, %5 : vector<16x16xf32>
    %cst_266 = arith.constant dense<0xFF800000> : vector<16xf32>
    %660 = vector.multi_reduction <maximumf>, %659, %cst_266 [1] : vector<16x16xf32> to vector<16xf32>
    %661 = vector.shape_cast %660 : vector<16xf32> to vector<16x1xf32>
    %662 = vector.broadcast %661 : vector<16x1xf32> to vector<16x16xf32>
    %663 = arith.subf %659, %662 : vector<16x16xf32>
    %664 = math.exp %663 : vector<16x16xf32>
    %cst_267 = arith.constant dense<0.000000e+00> : vector<16xf32>
    %665 = vector.multi_reduction <add>, %664, %cst_267 [1] : vector<16x16xf32> to vector<16xf32>
    %666 = vector.shape_cast %665 : vector<16xf32> to vector<16x1xf32>
    %667 = tpu.reciprocal %666 {approx = true} : vector<16x1xf32> -> vector<16x1xf32>
    %668 = vector.broadcast %667 : vector<16x1xf32> to vector<16x16xf32>
    %669 = arith.mulf %664, %668 : vector<16x16xf32>
    %670 = arith.truncf %669 : vector<16x16xf32> to vector<16x16xbf16>
    %cst_268 = arith.constant dense<0.000000e+00> : vector<16x8xf32>
    %671 = tpu.matmul %670, %655, %cst_268 {dimension_numbers = #tpu.dot_dimension_numbers<[1], [0], [0], [1], [0, 0, 1, 1], [], []>} : vector<16x16xbf16>, vector<16x8xbf16>, vector<16x8xf32> -> vector<16x8xf32>
    %c0_269 = arith.constant 0 : index
    %c16_270 = arith.constant 16 : index
    %672 = vector.load %arg15[%c0_269, %c16_270] : memref<16x32xf32, #tpu.memory_space<vmem>>, vector<16x8xf32>
    tpu.vector_store %arg15[%c0_269, %c16_270], %671 {strides = array<i32>} : memref<16x32xf32, #tpu.memory_space<vmem>>, vector<16x8xf32>,
    %673 = vector.extract_strided_slice %603 {offsets = [0, 24], sizes = [16, 8], strides = [1, 1]} : vector<16x96xf32> to vector<16x8xf32>
    %674 = arith.truncf %673 : vector<16x8xf32> to vector<16x8xbf16>
    %675 = vector.extract_strided_slice %603 {offsets = [0, 56], sizes = [16, 8], strides = [1, 1]} : vector<16x96xf32> to vector<16x8xf32>
    %676 = arith.truncf %675 : vector<16x8xf32> to vector<16x8xbf16>
    %677 = vector.extract_strided_slice %603 {offsets = [0, 88], sizes = [16, 8], strides = [1, 1]} : vector<16x96xf32> to vector<16x8xf32>
    %678 = arith.truncf %677 : vector<16x8xf32> to vector<16x8xbf16>
    %cst_271 = arith.constant dense<0.000000e+00> : vector<16x16xf32>
    %679 = tpu.matmul %674, %676, %cst_271 {dimension_numbers = #tpu.dot_dimension_numbers<[1], [1], [0], [0], [0, 0, 1, 0], [], []>} : vector<16x8xbf16>, vector<16x8xbf16>, vector<16x16xf32> -> vector<16x16xf32>
    %cst_272 = arith.constant 0.353553385 : f32
    %680 = vector.broadcast %cst_272 : f32 to vector<16x16xf32>
    %681 = arith.mulf %679, %680 : vector<16x16xf32>
    %682 = arith.addf %681, %5 : vector<16x16xf32>
    %cst_273 = arith.constant dense<0xFF800000> : vector<16xf32>
    %683 = vector.multi_reduction <maximumf>, %682, %cst_273 [1] : vector<16x16xf32> to vector<16xf32>
    %684 = vector.shape_cast %683 : vector<16xf32> to vector<16x1xf32>
    %685 = vector.broadcast %684 : vector<16x1xf32> to vector<16x16xf32>
    %686 = arith.subf %682, %685 : vector<16x16xf32>
    %687 = math.exp %686 : vector<16x16xf32>
    %cst_274 = arith.constant dense<0.000000e+00> : vector<16xf32>
    %688 = vector.multi_reduction <add>, %687, %cst_274 [1] : vector<16x16xf32> to vector<16xf32>
    %689 = vector.shape_cast %688 : vector<16xf32> to vector<16x1xf32>
    %690 = tpu.reciprocal %689 {approx = true} : vector<16x1xf32> -> vector<16x1xf32>
    %691 = vector.broadcast %690 : vector<16x1xf32> to vector<16x16xf32>
    %692 = arith.mulf %687, %691 : vector<16x16xf32>
    %693 = arith.truncf %692 : vector<16x16xf32> to vector<16x16xbf16>
    %cst_275 = arith.constant dense<0.000000e+00> : vector<16x8xf32>
    %694 = tpu.matmul %693, %678, %cst_275 {dimension_numbers = #tpu.dot_dimension_numbers<[1], [0], [0], [1], [0, 0, 1, 1], [], []>} : vector<16x16xbf16>, vector<16x8xbf16>, vector<16x8xf32> -> vector<16x8xf32>
    %c0_276 = arith.constant 0 : index
    %c24_277 = arith.constant 24 : index
    %695 = vector.load %arg15[%c0_276, %c24_277] : memref<16x32xf32, #tpu.memory_space<vmem>>, vector<16x8xf32>
    tpu.vector_store %arg15[%c0_276, %c24_277], %694 {strides = array<i32>} : memref<16x32xf32, #tpu.memory_space<vmem>>, vector<16x8xf32>,
    %c0_278 = arith.constant 0 : index
    %c0_279 = arith.constant 0 : index
    %696 = vector.load %arg15[%c0_278, %c0_279] : memref<16x32xf32, #tpu.memory_space<vmem>>, vector<16x32xf32>
    %697 = arith.truncf %696 : vector<16x32xf32> to vector<16x32xbf16>
    %c3_280 = arith.constant 3 : index
    %c0_281 = arith.constant 0 : index
    %c0_282 = arith.constant 0 : index
    %698 = vector.load %arg7[%c3_280, %c0_281, %c0_282] : memref<4x32x32xbf16, #tpu.memory_space<vmem>>, vector<1x32x32xbf16>
    %699 = vector.shape_cast %698 : vector<1x32x32xbf16> to vector<32x32xbf16>
    %cst_283 = arith.constant dense<0.000000e+00> : vector<16x32xf32>
    %700 = tpu.matmul %697, %699, %cst_283 {dimension_numbers = #tpu.dot_dimension_numbers<[1], [0], [0], [1], [0, 0, 1, 1], [], []>} : vector<16x32xbf16>, vector<32x32xbf16>, vector<16x32xf32> -> vector<16x32xf32>
    %701 = arith.addf %566, %700 : vector<16x32xf32>
    %c3_284 = arith.constant 3 : index
    %c0_285 = arith.constant 0 : index
    %c0_286 = arith.constant 0 : index
    %702 = vector.load %arg8[%c3_284, %c0_285, %c0_286] : memref<4x1x32xf32, #tpu.memory_space<vmem>>, vector<1x1x32xf32>
    %703 = vector.shape_cast %702 : vector<1x1x32xf32> to vector<1x32xf32>
    %704 = vector.broadcast %703 : vector<1x32xf32> to vector<16x32xf32>
    %705 = arith.addf %701, %704 : vector<16x32xf32>
    %c3_287 = arith.constant 3 : index
    %c0_288 = arith.constant 0 : index
    %c0_289 = arith.constant 0 : index
    %706 = vector.load %arg9[%c3_287, %c0_288, %c0_289] : memref<4x2x32xf32, #tpu.memory_space<vmem>>, vector<1x2x32xf32>
    %707 = vector.shape_cast %706 : vector<1x2x32xf32> to vector<2x32xf32>
    %cst_290 = arith.constant dense<0.000000e+00> : vector<16xf32>
    %708 = vector.multi_reduction <add>, %705, %cst_290 [1] : vector<16x32xf32> to vector<16xf32>
    %709 = vector.shape_cast %708 : vector<16xf32> to vector<16x1xf32>
    %cst_291 = arith.constant 3.200000e+01 : f32
    %710 = vector.broadcast %cst_291 : f32 to vector<16x1xf32>
    %711 = arith.divf %709, %710 : vector<16x1xf32>
    %712 = vector.broadcast %711 : vector<16x1xf32> to vector<16x32xf32>
    %713 = arith.subf %705, %712 : vector<16x32xf32>
    %714 = arith.mulf %713, %713 : vector<16x32xf32>
    %cst_292 = arith.constant dense<0.000000e+00> : vector<16xf32>
    %715 = vector.multi_reduction <add>, %714, %cst_292 [1] : vector<16x32xf32> to vector<16xf32>
    %716 = vector.shape_cast %715 : vector<16xf32> to vector<16x1xf32>
    %cst_293 = arith.constant 3.200000e+01 : f32
    %717 = vector.broadcast %cst_293 : f32 to vector<16x1xf32>
    %718 = arith.divf %716, %717 : vector<16x1xf32>
    %719 = vector.broadcast %711 : vector<16x1xf32> to vector<16x32xf32>
    %720 = arith.subf %705, %719 : vector<16x32xf32>
    %cst_294 = arith.constant 9.99999997E-7 : f32
    %721 = vector.broadcast %cst_294 : f32 to vector<16x1xf32>
    %722 = arith.addf %718, %721 : vector<16x1xf32>
    %723 = math.rsqrt %722 : vector<16x1xf32>
    %724 = vector.broadcast %723 : vector<16x1xf32> to vector<16x32xf32>
    %725 = arith.mulf %720, %724 : vector<16x32xf32>
    %726 = vector.extract_strided_slice %707 {offsets = [0, 0], sizes = [1, 32], strides = [1, 1]} : vector<2x32xf32> to vector<1x32xf32>
    %727 = vector.broadcast %726 : vector<1x32xf32> to vector<16x32xf32>
    %728 = arith.mulf %725, %727 : vector<16x32xf32>
    %729 = vector.extract_strided_slice %707 {offsets = [1, 0], sizes = [1, 32], strides = [1, 1]} : vector<2x32xf32> to vector<1x32xf32>
    %730 = vector.broadcast %729 : vector<1x32xf32> to vector<16x32xf32>
    %731 = arith.addf %728, %730 : vector<16x32xf32>
    %732 = arith.truncf %731 : vector<16x32xf32> to vector<16x32xbf16>
    %c3_295 = arith.constant 3 : index
    %c0_296 = arith.constant 0 : index
    %c0_297 = arith.constant 0 : index
    %733 = vector.load %arg10[%c3_295, %c0_296, %c0_297] : memref<4x32x128xbf16, #tpu.memory_space<vmem>>, vector<1x32x128xbf16>
    %734 = vector.shape_cast %733 : vector<1x32x128xbf16> to vector<32x128xbf16>
    %cst_298 = arith.constant dense<0.000000e+00> : vector<16x128xf32>
    %735 = tpu.matmul %732, %734, %cst_298 {dimension_numbers = #tpu.dot_dimension_numbers<[1], [0], [0], [1], [0, 0, 1, 1], [], []>} : vector<16x32xbf16>, vector<32x128xbf16>, vector<16x128xf32> -> vector<16x128xf32>
    %c3_299 = arith.constant 3 : index
    %c0_300 = arith.constant 0 : index
    %c0_301 = arith.constant 0 : index
    %736 = vector.load %arg11[%c3_299, %c0_300, %c0_301] : memref<4x1x128xf32, #tpu.memory_space<vmem>>, vector<1x1x128xf32>
    %737 = vector.shape_cast %736 : vector<1x1x128xf32> to vector<1x128xf32>
    %738 = vector.broadcast %737 : vector<1x128xf32> to vector<16x128xf32>
    %739 = arith.addf %735, %738 : vector<16x128xf32>
    %cst_302 = arith.constant 5.000000e-01 : f32
    %740 = vector.broadcast %cst_302 : f32 to vector<16x128xf32>
    %741 = arith.mulf %740, %739 : vector<16x128xf32>
    %cst_303 = arith.constant 0.707106769 : f32
    %742 = vector.broadcast %cst_303 : f32 to vector<16x128xf32>
    %743 = arith.mulf %739, %742 : vector<16x128xf32>
    %744 = math.erf %743 : vector<16x128xf32>
    %cst_304 = arith.constant 1.000000e+00 : f32
    %745 = vector.broadcast %cst_304 : f32 to vector<16x128xf32>
    %746 = arith.addf %745, %744 : vector<16x128xf32>
    %747 = arith.mulf %741, %746 : vector<16x128xf32>
    %748 = arith.truncf %747 : vector<16x128xf32> to vector<16x128xbf16>
    %c3_305 = arith.constant 3 : index
    %c0_306 = arith.constant 0 : index
    %c0_307 = arith.constant 0 : index
    %749 = vector.load %arg12[%c3_305, %c0_306, %c0_307] : memref<4x128x32xbf16, #tpu.memory_space<vmem>>, vector<1x128x32xbf16>
    %750 = vector.shape_cast %749 : vector<1x128x32xbf16> to vector<128x32xbf16>
    %cst_308 = arith.constant dense<0.000000e+00> : vector<16x32xf32>
    %751 = tpu.matmul %748, %750, %cst_308 {dimension_numbers = #tpu.dot_dimension_numbers<[1], [0], [0], [1], [0, 0, 1, 1], [], []>} : vector<16x128xbf16>, vector<128x32xbf16>, vector<16x32xf32> -> vector<16x32xf32>
    %c3_309 = arith.constant 3 : index
    %c0_310 = arith.constant 0 : index
    %c0_311 = arith.constant 0 : index
    %752 = vector.load %arg13[%c3_309, %c0_310, %c0_311] : memref<4x1x32xf32, #tpu.memory_space<vmem>>, vector<1x1x32xf32>
    %753 = vector.shape_cast %752 : vector<1x1x32xf32> to vector<1x32xf32>
    %754 = vector.broadcast %753 : vector<1x32xf32> to vector<16x32xf32>
    %755 = arith.addf %751, %754 : vector<16x32xf32>
    %756 = arith.addf %705, %755 : vector<16x32xf32>
    %c1_312 = arith.constant 1 : index
    %c0_313 = arith.constant 0 : index
    %c0_314 = arith.constant 0 : index
    %757 = vector.load %arg14[%c1_312, %c0_313, %c0_314] : memref<2x16x32xf32, #tpu.memory_space<vmem>>, vector<1x16x32xf32>
    %758 = vector.shape_cast %757 : vector<1x16x32xf32> to vector<16x32xf32>
    %759 = vector.shape_cast %756 : vector<16x32xf32> to vector<1x16x32xf32>
    tpu.vector_store %arg14[%c1_312, %c0_313, %c0_314], %759 {strides = array<i32>} : memref<2x16x32xf32, #tpu.memory_space<vmem>>, vector<1x16x32xf32>,
    return
  }
}

</mosaic_0001>

<llo_original>
// kernel: tile.9
$region0: #{tile.9}
  %s0 = inlined_call_operand.vmem [shape: f32[2,5,32], index: 0, kind: input, shape index: {}]
  %s1 = inlined_call_operand.vmem [shape: f32[10,32], index: 1, kind: output, shape index: {}]
  %v2 = vld [vmem:[%s0] sm:$0x1f]
  %vm3 = vcmask 261120
  %4 = vst.msk [vmem:[%s1] sm:$0x1f] %vm3, %v2
  %s5 = scalar_lea.vmem %s0, 8
  %v6 = vld [vmem:[%s5] sm:$0x1f]
  %vm7 = vcmask 261120
  %s8 = scalar_lea.vmem %s1, 5
  %9 = vst.msk [vmem:[%s8] sm:$0x1f] %vm7, %v6

// kernel: feature_extractor_mae_forward.1
$region0: #{feature_extractor_mae_forward.1}
  #allocation0 [shape = 'u32[]', space=smem, size = 0x4, offset = 0x4, fixed_abs, tag = 'smem constant byte address 0x4 - core index']
  #allocation1 [shape = 'u32[144,128]{1,0:T(1,128)}', space=vmem, size = 0x12000, scoped, tag = 'internal scratch']
  #allocation2 [shape = 'f32[16,32]{1,0:T(8,128)}', space=vmem, size = 0x2000, scoped, tag = 'scratch operand']
  %s0 = inlined_call_operand.vmem [shape: bf16[16,192], index: 0, kind: input, shape index: {}]
  %s1 = inlined_call_operand.vmem [shape: f32[16,32], index: 1, kind: input, shape index: {}]
  %s2 = inlined_call_operand.vmem [shape: f32[16,16], index: 2, kind: input, shape index: {}]
  %s3 = inlined_call_operand.vmem [shape: bf16[192,32], index: 3, kind: input, shape index: {}]
  %s4 = inlined_call_operand.vmem [shape: f32[4,2,32], index: 4, kind: input, shape index: {}]
  %s5 = inlined_call_operand.vmem [shape: bf16[4,32,96], index: 5, kind: input, shape index: {}]
  %s6 = inlined_call_operand.vmem [shape: f32[4,1,96], index: 6, kind: input, shape index: {}]
  %s7 = inlined_call_operand.vmem [shape: bf16[4,32,32], index: 7, kind: input, shape index: {}]
  %s8 = inlined_call_operand.vmem [shape: f32[4,1,32], index: 8, kind: input, shape index: {}]
  %s9 = inlined_call_operand.vmem [shape: f32[4,2,32], index: 9, kind: input, shape index: {}]
  %s10 = inlined_call_operand.vmem [shape: bf16[4,32,128], index: 10, kind: input, shape index: {}]
  %s11 = inlined_call_operand.vmem [shape: f32[4,1,128], index: 11, kind: input, shape index: {}]
  %s12 = inlined_call_operand.vmem [shape: bf16[4,128,32], index: 12, kind: input, shape index: {}]
  %s13 = inlined_call_operand.vmem [shape: f32[4,1,32], index: 13, kind: input, shape index: {}]
  %s14 = inlined_call_operand.vmem [shape: f32[2,16,32], index: 14, kind: output, shape index: {}]
  %s15 = sld [smem:[#allocation0]]
  $region66: #{feature_extractor_mae_forward.1} parent=0
    _
  %s17 = ssub.s32 1, %s15
  %s18 = scalar_select 0, %s17, %s15
  // Predicated region
  $region2: #{feature_extractor_mae_forward.1} parent=0 // pred_check
    _
  $region3: #{feature_extractor_mae_forward.1} parent=0 // pred_check_branch
    %20 = sbr.rel (0) target = $region5
  $region4: #{feature_extractor_mae_forward.1} parent=0 // pred_region
    _
  $region5: #{feature_extractor_mae_forward.1} parent=0 // pred_fallthru
    _
  // Predicated region
  $region6: #{feature_extractor_mae_forward.1} parent=0 // pred_check
    _
  $region7: #{feature_extractor_mae_forward.1} parent=0 // pred_check_branch
    %22 = sbr.rel (0) target = $region9
  $region8: #{feature_extractor_mae_forward.1} parent=0 // pred_region
    _
  $region9: #{feature_extractor_mae_forward.1} parent=0 // pred_fallthru
    _
  // Predicated region
  $region10: #{feature_extractor_mae_forward.1} parent=0 // pred_check
    _
  $region11: #{feature_extractor_mae_forward.1} parent=0 // pred_check_branch
    %24 = sbr.rel (0) target = $region13
  $region12: #{feature_extractor_mae_forward.1} parent=0 // pred_region
    _
  $region13: #{feature_extractor_mae_forward.1} parent=0 // pred_fallthru
    _
  // Predicated region
  $region14: #{feature_extractor_mae_forward.1} parent=0 // pred_check
    _
  $region15: #{feature_extractor_mae_forward.1} parent=0 // pred_check_branch
    %26 = sbr.rel (0) target = $region17
  $region16: #{feature_extractor_mae_forward.1} parent=0 // pred_region
    _
  $region17: #{feature_extractor_mae_forward.1} parent=0 // pred_fallthru
    _
  // Predicated region
  $region18: #{feature_extractor_mae_forward.1} parent=0 // pred_check
    _
  $region19: #{feature_extractor_mae_forward.1} parent=0 // pred_check_branch
    %28 = sbr.rel (0) target = $region21
  $region20: #{feature_extractor_mae_forward.1} parent=0 // pred_region
    _
  $region21: #{feature_extractor_mae_forward.1} parent=0 // pred_fallthru
    _
  // Predicated region
  $region22: #{feature_extractor_mae_forward.1} parent=0 // pred_check
    _
  $region23: #{feature_extractor_mae_forward.1} parent=0 // pred_check_branch
    %30 = sbr.rel (0) target = $region25
  $region24: #{feature_extractor_mae_forward.1} parent=0 // pred_region
    _
  $region25: #{feature_extractor_mae_forward.1} parent=0 // pred_fallthru
    _
  // Predicated region
  $region26: #{feature_extractor_mae_forward.1} parent=0 // pred_check
    _
  $region27: #{feature_extractor_mae_forward.1} parent=0 // pred_check_branch
    %32 = sbr.rel (0) target = $region29
  $region28: #{feature_extractor_mae_forward.1} parent=0 // pred_region
    _
  $region29: #{feature_extractor_mae_forward.1} parent=0 // pred_fallthru
    _
  // Predicated region
  $region30: #{feature_extractor_mae_forward.1} parent=0 // pred_check
    _
  $region31: #{feature_extractor_mae_forward.1} parent=0 // pred_check_branch
    %34 = sbr.rel (0) target = $region33
  $region32: #{feature_extractor_mae_forward.1} parent=0 // pred_region
    _
  $region33: #{feature_extractor_mae_forward.1} parent=0 // pred_fallthru
    _
  // Predicated region
  $region34: #{feature_extractor_mae_forward.1} parent=0 // pred_check
    _
  $region35: #{feature_extractor_mae_forward.1} parent=0 // pred_check_branch
    %36 = sbr.rel (0) target = $region37
  $region36: #{feature_extractor_mae_forward.1} parent=0 // pred_region
    _
  $region37: #{feature_extractor_mae_forward.1} parent=0 // pred_fallthru
    _
  // Predicated region
  $region38: #{feature_extractor_mae_forward.1} parent=0 // pred_check
    _
  $region39: #{feature_extractor_mae_forward.1} parent=0 // pred_check_branch
    %38 = sbr.rel (0) target = $region41
  $region40: #{feature_extractor_mae_forward.1} parent=0 // pred_region
    _
  $region41: #{feature_extractor_mae_forward.1} parent=0 // pred_fallthru
    _
  // Predicated region
  $region42: #{feature_extractor_mae_forward.1} parent=0 // pred_check
    _
  $region43: #{feature_extractor_mae_forward.1} parent=0 // pred_check_branch
    %40 = sbr.rel (0) target = $region45
  $region44: #{feature_extractor_mae_forward.1} parent=0 // pred_region
    _
  $region45: #{feature_extractor_mae_forward.1} parent=0 // pred_fallthru
    _
  // Predicated region
  $region46: #{feature_extractor_mae_forward.1} parent=0 // pred_check
    _
  $region47: #{feature_extractor_mae_forward.1} parent=0 // pred_check_branch
    %42 = sbr.rel (0) target = $region49
  $region48: #{feature_extractor_mae_forward.1} parent=0 // pred_region
    _
  $region49: #{feature_extractor_mae_forward.1} parent=0 // pred_fallthru
    _
  // Predicated region
  $region50: #{feature_extractor_mae_forward.1} parent=0 // pred_check
    _
  $region51: #{feature_extractor_mae_forward.1} parent=0 // pred_check_branch
    %44 = sbr.rel (0) target = $region53
  $region52: #{feature_extractor_mae_forward.1} parent=0 // pred_region
    _
  $region53: #{feature_extractor_mae_forward.1} parent=0 // pred_fallthru
    _
  // Predicated region
  $region54: #{feature_extractor_mae_forward.1} parent=0 // pred_check
    _
  $region55: #{feature_extractor_mae_forward.1} parent=0 // pred_check_branch
    %46 = sbr.rel (0) target = $region57
  $region56: #{feature_extractor_mae_forward.1} parent=0 // pred_region
    _
  $region57: #{feature_extractor_mae_forward.1} parent=0 // pred_fallthru
    _
  %v48 = vld [vmem:[%s0] sm:$0xff]
  %v49 = vld [vmem:[%s0 + $0x8] sm:$0xff]
  %v50 = vld [vmem:[%s3] sm:$0xf]
  %v51 = vld [vmem:[%s3 + $0x4] sm:$0xf]
  %v52 = vld [vmem:[%s3 + $0x8] sm:$0xf]
  %v53 = vld [vmem:[%s3 + $0xc] sm:$0xf]
  %v54 = vld [vmem:[%s3 + $0x10] sm:$0xf]
  %v55 = vld [vmem:[%s3 + $0x14] sm:$0xf]
  %v56 = vld [vmem:[%s3 + $0x18] sm:$0xf]
  %v57 = vld [vmem:[%s3 + $0x1c] sm:$0xf]
  %v58 = vld [vmem:[%s3 + $0x20] sm:$0xf]
  %v59 = vld [vmem:[%s3 + $0x24] sm:$0xf]
  %v60 = vld [vmem:[%s3 + $0x28] sm:$0xf]
  %v61 = vld [vmem:[%s3 + $0x2c] sm:$0xf]
  %v62 = vld [vmem:[%s3 + $0x30] sm:$0xf]
  %v63 = vld [vmem:[%s3 + $0x34] sm:$0xf]
  %v64 = vld [vmem:[%s3 + $0x38] sm:$0xf]
  %v65 = vld [vmem:[%s3 + $0x3c] sm:$0xf]
  %v66 = vld [vmem:[%s3 + $0x40] sm:$0xf]
  %v67 = vld [vmem:[%s3 + $0x44] sm:$0xf]
  %v68 = vld [vmem:[%s3 + $0x48] sm:$0xf]
  %v69 = vld [vmem:[%s3 + $0x4c] sm:$0xf]
  %v70 = vld [vmem:[%s3 + $0x50] sm:$0xf]
  %v71 = vld [vmem:[%s3 + $0x54] sm:$0xf]
  %v72 = vld [vmem:[%s3 + $0x58] sm:$0xf]
  %v73 = vld [vmem:[%s3 + $0x5c] sm:$0xf]
  %v74 = vld [vmem:[%s1] sm:$0xff]
  %v75 = vld [vmem:[%s1 + $0x8] sm:$0xff]
  %v78 = vunpack.c.l.b16 %v48
  %v79 = vunpack.c.h.b16 %v48
  %v80 = vunpack.c.l.b16 %v49
  %v81 = vunpack.c.h.b16 %v49
  %v82 = vpack.c.b16 %v80, %v78
  %v83 = vpack.c.b16 %v81, %v79
  %v109 = vunpack.c.l.b16 %v50
  %v110 = vunpack.c.l.b16 %v51
  %v111 = vunpack.c.l.b16 %v52
  %v112 = vunpack.c.l.b16 %v53
  %v113 = vunpack.c.l.b16 %v54
  %v114 = vunpack.c.l.b16 %v55
  %v115 = vunpack.c.l.b16 %v56
  %v116 = vunpack.c.l.b16 %v57
  %v117 = vunpack.c.l.b16 %v58
  %v118 = vunpack.c.l.b16 %v59
  %v119 = vunpack.c.l.b16 %v60
  %v120 = vunpack.c.l.b16 %v61
  %v121 = vunpack.c.l.b16 %v62
  %v122 = vunpack.c.l.b16 %v63
  %v123 = vunpack.c.l.b16 %v64
  %v124 = vunpack.c.l.b16 %v65
  %v125 = vunpack.c.l.b16 %v66
  %v126 = vunpack.c.l.b16 %v67
  %v127 = vunpack.c.l.b16 %v68
  %v128 = vunpack.c.l.b16 %v69
  %v129 = vunpack.c.l.b16 %v70
  %v130 = vunpack.c.l.b16 %v71
  %v131 = vunpack.c.l.b16 %v72
  %v132 = vunpack.c.l.b16 %v73
  %v133 = vpack.c.b16 %v110, %v109
  %v134 = vpack.c.b16 %v112, %v111
  %v135 = vpack.c.b16 %v114, %v113
  %v136 = vpack.c.b16 %v116, %v115
  %v137 = vpack.c.b16 %v118, %v117
  %v138 = vpack.c.b16 %v120, %v119
  %v139 = vpack.c.b16 %v122, %v121
  %v140 = vpack.c.b16 %v124, %v123
  %v141 = vpack.c.b16 %v126, %v125
  %v142 = vpack.c.b16 %v128, %v127
  %v143 = vpack.c.b16 %v130, %v129
  %v144 = vpack.c.b16 %v132, %v131
  %vm157 = vcmask 523264
  %v159 = vsel %vm157, %v83, 0
  %161 = vmatprep.subr.bf16.mxu0 0
  %162 = vmatpush1.bf16.msra.mxu0 %v133
  %163 = vmatprep.subr.bf16.mxu0 0
  %164 = vmatpush1.bf16.msra.mxu0 %v134
  %165 = vmatprep.subr.bf16.mxu0 0
  %166 = vmatpush1.bf16.msra.mxu0 %v135
  %167 = vmatprep.subr.bf16.mxu0 0
  %168 = vmatpush1.bf16.msra.mxu0 %v136
  %169 = vmatprep.subr.bf16.mxu0 0
  %170 = vmatpush1.bf16.msra.mxu0 %v137
  %171 = vmatprep.subr.bf16.mxu0 0
  %172 = vmatpush1.bf16.msra.mxu0 %v138
  %173 = vmatprep.subr.bf16.mxu0 0
  %174 = vmatpush1.bf16.msra.mxu0 %v139
  %175 = vmatprep.subr.bf16.mxu0 0
  %176 = vmatpush1.bf16.msra.mxu0 %v140
  %177 = vmatprep.subr.bf16.mxu0 0
  %178 = vmatpush1.bf16.msra.mxu0 %v141
  %179 = vmatprep.subr.bf16.mxu0 0
  %180 = vmatpush1.bf16.msra.mxu0 %v142
  %181 = vmatprep.subr.bf16.mxu0 0
  %182 = vmatpush1.bf16.msra.mxu0 %v143
  %183 = vmatprep.subr.bf16.mxu0 0
  %184 = vmatpush1.bf16.msra.mxu0 %v144
  %185 = vmatprep.subr.bf16.mxu0 0
  %186 = vmatpush1.bf16.msra.mxu0 0
  %187 = vmatprep.subr.bf16.mxu0 0
  %188 = vmatpush1.bf16.msra.mxu0 0
  %189 = vmatprep.subr.bf16.mxu0 0
  %190 = vmatpush1.bf16.msra.mxu0 0
  %191 = vmatprep.subr.bf16.mxu0 0
  %192 = vmatpush1.bf16.msra.mxu0 0
  %193 = vmatprep.mubr.bf16.mxu0 %v159
  %194 = vmatmul.mubr.bf16.gmra.mrb[0].mxu0 %v82
  %v195 = vpop.f32.mrb[0].mxu0
  %v196 = vadd.f32 %v74, %v195
  %v197 = vpop.f32.mrb[0].mxu0
  %v198 = vpop.f32.mrb[0].mxu0
  %v199 = vadd.f32 %v75, %v198
  %v200 = vpop.f32.mrb[0].mxu0
  %201 = vdwg.mxu0
  %v202 = vld [vmem:[%s2] sm:$0xff]
  %v203 = vld [vmem:[%s2 + $0x8] sm:$0xff]
  %v204 = vld [vmem:[%s4] sm:$0x3]
  %vm205 = vcmask 261120
  %v206 = vsel %vm205, %v196, 0.0
  %207 = vadd.xlane.f32.xlu0 %v206
  %v208 = vpop.xlane.xlu0 %207
  %v209 = vsel %vm205, %v199, 0.0
  %210 = vadd.xlane.f32.xlu0 %v209
  %v211 = vpop.xlane.xlu0 %210
  %v212 = vrcp.pop 32.0
  %v213 = vmul.f32 %v208, %v212
  %v214 = vmul.f32 %v211, %v212
  %v215 = vsub.f32 %v196, %v213
  %v216 = vsub.f32 %v199, %v214
  %v217 = vmul.f32 %v215, %v215
  %v218 = vmul.f32 %v216, %v216
  %v219 = vsel %vm205, %v217, 0.0
  %220 = vadd.xlane.f32.xlu0 %v219
  %v221 = vpop.xlane.xlu0 %220
  %v222 = vsel %vm205, %v218, 0.0
  %223 = vadd.xlane.f32.xlu0 %v222
  %v224 = vpop.xlane.xlu0 %223
  %v225 = vmul.f32 %v221, %v212
  %v226 = vmul.f32 %v224, %v212
  %v227 = vadd.f32 %v225, 1e-06
  %v228 = vadd.f32 %v226, 1e-06
  %v229 = vrsqrt.pop %v227
  %v230 = vrsqrt.pop %v228
  %v231 = vmul.f32 %v215, %v229
  %v232 = vmul.f32 %v216, %v230
  %v233 = vlaneseq
  %v234 = vshrl.u32 %v233, 7
  %v235 = vsub.s32 0, %v234
  %v236 = vrot.slane %v204, %v235
  %v237 = vmul.f32 %v231, %v236
  %v238 = vmul.f32 %v232, %v236
  %v239 = vlaneseq
  %v240 = vshrl.u32 %v239, 7
  %v241 = vsub.s32 1, %v240
  %v242 = vrot.slane %v204, %v241
  %v243 = vadd.f32 %v237, %v242
  %v244 = vadd.f32 %v238, %v242
  %v245 = vpack.c.bf16 %v244, %v243
  %v246 = vld [vmem:[%s5] sm:$0xf]
  %v247 = vld [vmem:[%s5 + $0x4] sm:$0xf]
  %v248 = vld [vmem:[%s5 + $0x8] sm:$0xf]
  %v249 = vld [vmem:[%s5 + $0xc] sm:$0xf]
  %v250 = vld [vmem:[%s6] sm:$0x1]
  %v252 = vlaneseq
  %v253 = vshrl.u32 %v252, 7
  %v254 = vsub.s32 0, %v253
  %v255 = vrot.slane %v250, %v254
  %v261 = vunpack.c.l.b16 %v246
  %v262 = vunpack.c.l.b16 %v247
  %v263 = vunpack.c.l.b16 %v248
  %v264 = vunpack.c.l.b16 %v249
  %v265 = vpack.c.b16 %v262, %v261
  %v266 = vpack.c.b16 %v264, %v263
  %v270 = vsel %vm205, %v245, 0
  %272 = vmatprep.subr.bf16.mxu0 0
  %273 = vmatpush1.bf16.msra.mxu0 %v265
  %274 = vmatprep.subr.bf16.mxu0 0
  %275 = vmatpush1.bf16.msra.mxu0 %v266
  %276 = vmatprep.subr.bf16.mxu0 0
  %277 = vmatpush1.bf16.msra.mxu0 0
  %278 = vmatprep.subr.bf16.mxu0 0
  %279 = vmatpush1.bf16.msra.mxu0 0
  %280 = vmatprep.subr.bf16.mxu0 0
  %281 = vmatpush1.bf16.msra.mxu0 0
  %282 = vmatprep.subr.bf16.mxu0 0
  %283 = vmatpush1.bf16.msra.mxu0 0
  %284 = vmatprep.subr.bf16.mxu0 0
  %285 = vmatpush1.bf16.msra.mxu0 0
  %286 = vmatprep.subr.bf16.mxu0 0
  %287 = vmatpush1.bf16.msra.mxu0 0
  %288 = vmatprep.subr.bf16.mxu0 0
  %289 = vmatpush1.bf16.msra.mxu0 0
  %290 = vmatprep.subr.bf16.mxu0 0
  %291 = vmatpush1.bf16.msra.mxu0 0
  %292 = vmatprep.subr.bf16.mxu0 0
  %293 = vmatpush1.bf16.msra.mxu0 0
  %294 = vmatprep.subr.bf16.mxu0 0
  %295 = vmatpush1.bf16.msra.mxu0 0
  %296 = vmatprep.subr.bf16.mxu0 0
  %297 = vmatpush1.bf16.msra.mxu0 0
  %298 = vmatprep.subr.bf16.mxu0 0
  %299 = vmatpush1.bf16.msra.mxu0 0
  %300 = vmatprep.subr.bf16.mxu0 0
  %301 = vmatpush1.bf16.msra.mxu0 0
  %302 = vmatprep.subr.bf16.mxu0 0
  %303 = vmatpush1.bf16.msra.mxu0 0
  %304 = vmatprep.mubr.bf16.mxu0 0
  %305 = vmatmul.mubr.bf16.gmra.mrb[0].mxu0 %v270
  %v306 = vpop.f32.mrb[0].mxu0
  %v307 = vadd.f32 %v255, %v306
  %v308 = vpop.f32.mrb[0].mxu0
  %v309 = vpop.f32.mrb[0].mxu0
  %v310 = vadd.f32 %v255, %v309
  %v311 = vpop.f32.mrb[0].mxu0
  %312 = vdwg.mxu0
  %v313 = vpack.c.bf16 %v310, %v307
  %315 = vrot.lane.b32.xlu0 %v313, 96
  %v316 = vpop.permute.xlu0 %315
  %vm317 = vcmask 64512
  %v319 = vsel %vm317, %v313, 0
  %v322 = vsel %vm317, %v316, 0
  %324 = vmatprep.subr.bf16.mxu0 0
  %325 = vmatpush1.bf16.xpose.msra.mxu0 %v322
  %326 = vmatprep.subr.bf16.mxu0 0
  %327 = vmatpush1.bf16.xpose.msra.mxu0 0
  %328 = vmatprep.subr.bf16.mxu0 0
  %329 = vmatpush1.bf16.xpose.msra.mxu0 0
  %330 = vmatprep.subr.bf16.mxu0 0
  %331 = vmatpush1.bf16.xpose.msra.mxu0 0
  %332 = vmatprep.subr.bf16.mxu0 0
  %333 = vmatpush1.bf16.xpose.msra.mxu0 0
  %334 = vmatprep.subr.bf16.mxu0 0
  %335 = vmatpush1.bf16.xpose.msra.mxu0 0
  %336 = vmatprep.subr.bf16.mxu0 0
  %337 = vmatpush1.bf16.xpose.msra.mxu0 0
  %338 = vmatprep.subr.bf16.mxu0 0
  %339 = vmatpush1.bf16.xpose.msra.mxu0 0
  %340 = vmatprep.subr.bf16.mxu0 0
  %341 = vmatpush1.bf16.xpose.msra.mxu0 0
  %342 = vmatprep.subr.bf16.mxu0 0
  %343 = vmatpush1.bf16.xpose.msra.mxu0 0
  %344 = vmatprep.subr.bf16.mxu0 0
  %345 = vmatpush1.bf16.xpose.msra.mxu0 0
  %346 = vmatprep.subr.bf16.mxu0 0
  %347 = vmatpush1.bf16.xpose.msra.mxu0 0
  %348 = vmatprep.subr.bf16.mxu0 0
  %349 = vmatpush1.bf16.xpose.msra.mxu0 0
  %350 = vmatprep.subr.bf16.mxu0 0
  %351 = vmatpush1.bf16.xpose.msra.mxu0 0
  %352 = vmatprep.subr.bf16.mxu0 0
  %353 = vmatpush1.bf16.xpose.msra.mxu0 0
  %354 = vmatprep.subr.bf16.mxu0 0
  %355 = vmatpush1.bf16.xpose.msra.mxu0 0
  %356 = vmatprep.mubr.bf16.mxu0 0
  %357 = vmatmul.mubr.bf16.gmra.mrb[0].mxu0 %v319
  %v358 = vpop.f32.mrb[0].mxu0
  %v359 = vadd.f32 0.0, %v358
  %v360 = vpop.f32.mrb[0].mxu0
  %v361 = vpop.f32.mrb[0].mxu0
  %v362 = vadd.f32 0.0, %v361
  %v363 = vpop.f32.mrb[0].mxu0
  %364 = vdwg.mxu0
  %v365 = vmul.f32 %v359, 0.35355338
  %v366 = vmul.f32 %v362, 0.35355338
  %v367 = vadd.f32 %v365, %v202
  %v368 = vadd.f32 %v366, %v203
  %vm369 = vcmask 130048
  %v370 = vsel %vm369, %v367, -inf
  %371 = vmax.xlane.f32.xlu0 %v370
  %v372 = vpop.xlane.xlu0 %371
  %v373 = vsel %vm369, %v368, -inf
  %374 = vmax.xlane.f32.xlu0 %v373
  %v375 = vpop.xlane.xlu0 %374
  %v376 = vsub.f32 %v367, %v372
  %v377 = vsub.f32 %v368, %v375
  %v378 = vmul.f32 %v376, 1.442695
  %v379 = vpow.pop %v378
  %v380 = vmul.f32 %v377, 1.442695
  %v381 = vpow.pop %v380
  %v382 = vsel %vm369, %v379, 0.0
  %383 = vadd.xlane.f32.xlu0 %v382
  %v384 = vpop.xlane.xlu0 %383
  %v385 = vsel %vm369, %v381, 0.0
  %386 = vadd.xlane.f32.xlu0 %v385
  %v387 = vpop.xlane.xlu0 %386
  %v388 = vrcp.pop %v384
  %v389 = vrcp.pop %v387
  %v390 = vmul.f32 %v379, %v388
  %v391 = vmul.f32 %v381, %v389
  %v392 = vpack.c.bf16 %v391, %v390
  %393 = vrot.lane.b32.xlu0 %v313, 64
  %v394 = vpop.permute.xlu0 %393
  %v397 = vsel %vm369, %v392, 0
  %399 = vmatprep.subr.bf16.mxu0 0
  %400 = vmatpush1.bf16.msra.mxu0 %v394
  %401 = vmatprep.subr.bf16.mxu0 0
  %402 = vmatpush1.bf16.msra.mxu0 0
  %403 = vmatprep.subr.bf16.mxu0 0
  %404 = vmatpush1.bf16.msra.mxu0 0
  %405 = vmatprep.subr.bf16.mxu0 0
  %406 = vmatpush1.bf16.msra.mxu0 0
  %407 = vmatprep.subr.bf16.mxu0 0
  %408 = vmatpush1.bf16.msra.mxu0 0
  %409 = vmatprep.subr.bf16.mxu0 0
  %410 = vmatpush1.bf16.msra.mxu0 0
  %411 = vmatprep.subr.bf16.mxu0 0
  %412 = vmatpush1.bf16.msra.mxu0 0
  %413 = vmatprep.subr.bf16.mxu0 0
  %414 = vmatpush1.bf16.msra.mxu0 0
  %415 = vmatprep.subr.bf16.mxu0 0
  %416 = vmatpush1.bf16.msra.mxu0 0
  %417 = vmatprep.subr.bf16.mxu0 0
  %418 = vmatpush1.bf16.msra.mxu0 0
  %419 = vmatprep.subr.bf16.mxu0 0
  %420 = vmatpush1.bf16.msra.mxu0 0
  %421 = vmatprep.subr.bf16.mxu0 0
  %422 = vmatpush1.bf16.msra.mxu0 0
  %423 = vmatprep.subr.bf16.mxu0 0
  %424 = vmatpush1.bf16.msra.mxu0 0
  %425 = vmatprep.subr.bf16.mxu0 0
  %426 = vmatpush1.bf16.msra.mxu0 0
  %427 = vmatprep.subr.bf16.mxu0 0
  %428 = vmatpush1.bf16.msra.mxu0 0
  %429 = vmatprep.subr.bf16.mxu0 0
  %430 = vmatpush1.bf16.msra.mxu0 0
  %431 = vmatprep.mubr.bf16.mxu0 0
  %432 = vmatmul.mubr.bf16.gmra.mrb[0].mxu0 %v397
  %v433 = vpop.f32.mrb[0].mxu0
  %v434 = vadd.f32 0.0, %v433
  %v435 = vpop.f32.mrb[0].mxu0
  %v436 = vpop.f32.mrb[0].mxu0
  %v437 = vadd.f32 0.0, %v436
  %v438 = vpop.f32.mrb[0].mxu0
  %439 = vdwg.mxu0
  %440 = vst.msk [vmem:[#allocation2] sm:$0xff] %vm317, %v434
  %441 = vst.msk [vmem:[#allocation2 + $0x8] sm:$0xff] %vm317, %v437
  %442 = vrot.lane.b32.xlu0 %v313, 120
  %v443 = vpop.permute.xlu0 %442
  %444 = vrot.lane.b32.xlu0 %v313, 88
  %v445 = vpop.permute.xlu0 %444
  %v447 = vsel %vm317, %v443, 0
  %v450 = vsel %vm317, %v445, 0
  %452 = vmatprep.subr.bf16.mxu0 0
  %453 = vmatpush1.bf16.xpose.msra.mxu0 %v450
  %454 = vmatprep.subr.bf16.mxu0 0
  %455 = vmatpush1.bf16.xpose.msra.mxu0 0
  %456 = vmatprep.subr.bf16.mxu0 0
  %457 = vmatpush1.bf16.xpose.msra.mxu0 0
  %458 = vmatprep.subr.bf16.mxu0 0
  %459 = vmatpush1.bf16.xpose.msra.mxu0 0
  %460 = vmatprep.subr.bf16.mxu0 0
  %461 = vmatpush1.bf16.xpose.msra.mxu0 0
  %462 = vmatprep.subr.bf16.mxu0 0
  %463 = vmatpush1.bf16.xpose.msra.mxu0 0
  %464 = vmatprep.subr.bf16.mxu0 0
  %465 = vmatpush1.bf16.xpose.msra.mxu0 0
  %466 = vmatprep.subr.bf16.mxu0 0
  %467 = vmatpush1.bf16.xpose.msra.mxu0 0
  %468 = vmatprep.subr.bf16.mxu0 0
  %469 = vmatpush1.bf16.xpose.msra.mxu0 0
  %470 = vmatprep.subr.bf16.mxu0 0
  %471 = vmatpush1.bf16.xpose.msra.mxu0 0
  %472 = vmatprep.subr.bf16.mxu0 0
  %473 = vmatpush1.bf16.xpose.msra.mxu0 0
  %474 = vmatprep.subr.bf16.mxu0 0
  %475 = vmatpush1.bf16.xpose.msra.mxu0 0
  %476 = vmatprep.subr.bf16.mxu0 0
  %477 = vmatpush1.bf16.xpose.msra.mxu0 0
  %478 = vmatprep.subr.bf16.mxu0 0
  %479 = vmatpush1.bf16.xpose.msra.mxu0 0
  %480 = vmatprep.subr.bf16.mxu0 0
  %481 = vmatpush1.bf16.xpose.msra.mxu0 0
  %482 = vmatprep.subr.bf16.mxu0 0
  %483 = vmatpush1.bf16.xpose.msra.mxu0 0
  %484 = vmatprep.mubr.bf16.mxu0 0
  %485 = vmatmul.mubr.bf16.gmra.mrb[0].mxu0 %v447
  %v486 = vpop.f32.mrb[0].mxu0
  %v487 = vadd.f32 0.0, %v486
  %v488 = vpop.f32.mrb[0].mxu0
  %v489 = vpop.f32.mrb[0].mxu0
  %v490 = vadd.f32 0.0, %v489
  %v491 = vpop.f32.mrb[0].mxu0
  %492 = vdwg.mxu0
  %v493 = vmul.f32 %v487, 0.35355338
  %v494 = vmul.f32 %v490, 0.35355338
  %v495 = vadd.f32 %v493, %v202
  %v496 = vadd.f32 %v494, %v203
  %v497 = vsel %vm369, %v495, -inf
  %498 = vmax.xlane.f32.xlu0 %v497
  %v499 = vpop.xlane.xlu0 %498
  %v500 = vsel %vm369, %v496, -inf
  %501 = vmax.xlane.f32.xlu0 %v500
  %v502 = vpop.xlane.xlu0 %501
  %v503 = vsub.f32 %v495, %v499
  %v504 = vsub.f32 %v496, %v502
  %v505 = vmul.f32 %v503, 1.442695
  %v506 = vpow.pop %v505
  %v507 = vmul.f32 %v504, 1.442695
  %v508 = vpow.pop %v507
  %v509 = vsel %vm369, %v506, 0.0
  %510 = vadd.xlane.f32.xlu0 %v509
  %v511 = vpop.xlane.xlu0 %510
  %v512 = vsel %vm369, %v508, 0.0
  %513 = vadd.xlane.f32.xlu0 %v512
  %v514 = vpop.xlane.xlu0 %513
  %v515 = vrcp.pop %v511
  %v516 = vrcp.pop %v514
  %v517 = vmul.f32 %v506, %v515
  %v518 = vmul.f32 %v508, %v516
  %v519 = vpack.c.bf16 %v518, %v517
  %520 = vrot.lane.b32.xlu0 %v313, 56
  %v521 = vpop.permute.xlu0 %520
  %v524 = vsel %vm369, %v519, 0
  %526 = vmatprep.subr.bf16.mxu0 0
  %527 = vmatpush1.bf16.msra.mxu0 %v521
  %528 = vmatprep.subr.bf16.mxu0 0
  %529 = vmatpush1.bf16.msra.mxu0 0
  %530 = vmatprep.subr.bf16.mxu0 0
  %531 = vmatpush1.bf16.msra.mxu0 0
  %532 = vmatprep.subr.bf16.mxu0 0
  %533 = vmatpush1.bf16.msra.mxu0 0
  %534 = vmatprep.subr.bf16.mxu0 0
  %535 = vmatpush1.bf16.msra.mxu0 0
  %536 = vmatprep.subr.bf16.mxu0 0
  %537 = vmatpush1.bf16.msra.mxu0 0
  %538 = vmatprep.subr.bf16.mxu0 0
  %539 = vmatpush1.bf16.msra.mxu0 0
  %540 = vmatprep.subr.bf16.mxu0 0
  %541 = vmatpush1.bf16.msra.mxu0 0
  %542 = vmatprep.subr.bf16.mxu0 0
  %543 = vmatpush1.bf16.msra.mxu0 0
  %544 = vmatprep.subr.bf16.mxu0 0
  %545 = vmatpush1.bf16.msra.mxu0 0
  %546 = vmatprep.subr.bf16.mxu0 0
  %547 = vmatpush1.bf16.msra.mxu0 0
  %548 = vmatprep.subr.bf16.mxu0 0
  %549 = vmatpush1.bf16.msra.mxu0 0
  %550 = vmatprep.subr.bf16.mxu0 0
  %551 = vmatpush1.bf16.msra.mxu0 0
  %552 = vmatprep.subr.bf16.mxu0 0
  %553 = vmatpush1.bf16.msra.mxu0 0
  %554 = vmatprep.subr.bf16.mxu0 0
  %555 = vmatpush1.bf16.msra.mxu0 0
  %556 = vmatprep.subr.bf16.mxu0 0
  %557 = vmatpush1.bf16.msra.mxu0 0
  %558 = vmatprep.mubr.bf16.mxu0 0
  %559 = vmatmul.mubr.bf16.gmra.mrb[0].mxu0 %v524
  %v560 = vpop.f32.mrb[0].mxu0
  %v561 = vadd.f32 0.0, %v560
  %v562 = vpop.f32.mrb[0].mxu0
  %v563 = vpop.f32.mrb[0].mxu0
  %v564 = vadd.f32 0.0, %v563
  %v565 = vpop.f32.mrb[0].mxu0
  %566 = vdwg.mxu0
  %569 = vrot.lane.b32.xlu0 %v561, 8
  %v570 = vpop.permute.xlu0 %569
  %571 = vrot.lane.b32.xlu0 %v564, 8
  %v572 = vpop.permute.xlu0 %571
  %vm575 = vcmask 130112
  %576 = vst.msk [vmem:[#allocation2] sm:$0xff] %vm575, %v570
  %577 = vst.msk [vmem:[#allocation2 + $0x8] sm:$0xff] %vm575, %v572
  %578 = vrot.lane.b32.xlu0 %v313, 112
  %v579 = vpop.permute.xlu0 %578
  %580 = vrot.lane.b32.xlu0 %v313, 80
  %v581 = vpop.permute.xlu0 %580
  %v583 = vsel %vm317, %v579, 0
  %v586 = vsel %vm317, %v581, 0
  %588 = vmatprep.subr.bf16.mxu0 0
  %589 = vmatpush1.bf16.xpose.msra.mxu0 %v586
  %590 = vmatprep.subr.bf16.mxu0 0
  %591 = vmatpush1.bf16.xpose.msra.mxu0 0
  %592 = vmatprep.subr.bf16.mxu0 0
  %593 = vmatpush1.bf16.xpose.msra.mxu0 0
  %594 = vmatprep.subr.bf16.mxu0 0
  %595 = vmatpush1.bf16.xpose.msra.mxu0 0
  %596 = vmatprep.subr.bf16.mxu0 0
  %597 = vmatpush1.bf16.xpose.msra.mxu0 0
  %598 = vmatprep.subr.bf16.mxu0 0
  %599 = vmatpush1.bf16.xpose.msra.mxu0 0
  %600 = vmatprep.subr.bf16.mxu0 0
  %601 = vmatpush1.bf16.xpose.msra.mxu0 0
  %602 = vmatprep.subr.bf16.mxu0 0
  %603 = vmatpush1.bf16.xpose.msra.mxu0 0
  %604 = vmatprep.subr.bf16.mxu0 0
  %605 = vmatpush1.bf16.xpose.msra.mxu0 0
  %606 = vmatprep.subr.bf16.mxu0 0
  %607 = vmatpush1.bf16.xpose.msra.mxu0 0
  %608 = vmatprep.subr.bf16.mxu0 0
  %609 = vmatpush1.bf16.xpose.msra.mxu0 0
  %610 = vmatprep.subr.bf16.mxu0 0
  %611 = vmatpush1.bf16.xpose.msra.mxu0 0
  %612 = vmatprep.subr.bf16.mxu0 0
  %613 = vmatpush1.bf16.xpose.msra.mxu0 0
  %614 = vmatprep.subr.bf16.mxu0 0
  %615 = vmatpush1.bf16.xpose.msra.mxu0 0
  %616 = vmatprep.subr.bf16.mxu0 0
  %617 = vmatpush1.bf16.xpose.msra.mxu0 0
  %618 = vmatprep.subr.bf16.mxu0 0
  %619 = vmatpush1.bf16.xpose.msra.mxu0 0
  %620 = vmatprep.mubr.bf16.mxu0 0
  %621 = vmatmul.mubr.bf16.gmra.mrb[0].mxu0 %v583
  %v622 = vpop.f32.mrb[0].mxu0
  %v623 = vadd.f32 0.0, %v622
  %v624 = vpop.f32.mrb[0].mxu0
  %v625 = vpop.f32.mrb[0].mxu0
  %v626 = vadd.f32 0.0, %v625
  %v627 = vpop.f32.mrb[0].mxu0
  %628 = vdwg.mxu0
  %v629 = vmul.f32 %v623, 0.35355338
  %v630 = vmul.f32 %v626, 0.35355338
  %v631 = vadd.f32 %v629, %v202
  %v632 = vadd.f32 %v630, %v203
  %v633 = vsel %vm369, %v631, -inf
  %634 = vmax.xlane.f32.xlu0 %v633
  %v635 = vpop.xlane.xlu0 %634
  %v636 = vsel %vm369, %v632, -inf
  %637 = vmax.xlane.f32.xlu0 %v636
  %v638 = vpop.xlane.xlu0 %637
  %v639 = vsub.f32 %v631, %v635
  %v640 = vsub.f32 %v632, %v638
  %v641 = vmul.f32 %v639, 1.442695
  %v642 = vpow.pop %v641
  %v643 = vmul.f32 %v640, 1.442695
  %v644 = vpow.pop %v643
  %v645 = vsel %vm369, %v642, 0.0
  %646 = vadd.xlane.f32.xlu0 %v645
  %v647 = vpop.xlane.xlu0 %646
  %v648 = vsel %vm369, %v644, 0.0
  %649 = vadd.xlane.f32.xlu0 %v648
  %v650 = vpop.xlane.xlu0 %649
  %v651 = vrcp.pop %v647
  %v652 = vrcp.pop %v650
  %v653 = vmul.f32 %v642, %v651
  %v654 = vmul.f32 %v644, %v652
  %v655 = vpack.c.bf16 %v654, %v653
  %656 = vrot.lane.b32.xlu0 %v313, 48
  %v657 = vpop.permute.xlu0 %656
  %v660 = vsel %vm369, %v655, 0
  %662 = vmatprep.subr.bf16.mxu0 0
  %663 = vmatpush1.bf16.msra.mxu0 %v657
  %664 = vmatprep.subr.bf16.mxu0 0
  %665 = vmatpush1.bf16.msra.mxu0 0
  %666 = vmatprep.subr.bf16.mxu0 0
  %667 = vmatpush1.bf16.msra.mxu0 0
  %668 = vmatprep.subr.bf16.mxu0 0
  %669 = vmatpush1.bf16.msra.mxu0 0
  %670 = vmatprep.subr.bf16.mxu0 0
  %671 = vmatpush1.bf16.msra.mxu0 0
  %672 = vmatprep.subr.bf16.mxu0 0
  %673 = vmatpush1.bf16.msra.mxu0 0
  %674 = vmatprep.subr.bf16.mxu0 0
  %675 = vmatpush1.bf16.msra.mxu0 0
  %676 = vmatprep.subr.bf16.mxu0 0
  %677 = vmatpush1.bf16.msra.mxu0 0
  %678 = vmatprep.subr.bf16.mxu0 0
  %679 = vmatpush1.bf16.msra.mxu0 0
  %680 = vmatprep.subr.bf16.mxu0 0
  %681 = vmatpush1.bf16.msra.mxu0 0
  %682 = vmatprep.subr.bf16.mxu0 0
  %683 = vmatpush1.bf16.msra.mxu0 0
  %684 = vmatprep.subr.bf16.mxu0 0
  %685 = vmatpush1.bf16.msra.mxu0 0
  %686 = vmatprep.subr.bf16.mxu0 0
  %687 = vmatpush1.bf16.msra.mxu0 0
  %688 = vmatprep.subr.bf16.mxu0 0
  %689 = vmatpush1.bf16.msra.mxu0 0
  %690 = vmatprep.subr.bf16.mxu0 0
  %691 = vmatpush1.bf16.msra.mxu0 0
  %692 = vmatprep.subr.bf16.mxu0 0
  %693 = vmatpush1.bf16.msra.mxu0 0
  %694 = vmatprep.mubr.bf16.mxu0 0
  %695 = vmatmul.mubr.bf16.gmra.mrb[0].mxu0 %v660
  %v696 = vpop.f32.mrb[0].mxu0
  %v697 = vadd.f32 0.0, %v696
  %v698 = vpop.f32.mrb[0].mxu0
  %v699 = vpop.f32.mrb[0].mxu0
  %v700 = vadd.f32 0.0, %v699
  %v701 = vpop.f32.mrb[0].mxu0
  %702 = vdwg.mxu0
  %705 = vrot.lane.b32.xlu0 %v697, 16
  %v706 = vpop.permute.xlu0 %705
  %707 = vrot.lane.b32.xlu0 %v700, 16
  %v708 = vpop.permute.xlu0 %707
  %vm711 = vcmask 195712
  %712 = vst.msk [vmem:[#allocation2] sm:$0xff] %vm711, %v706
  %713 = vst.msk [vmem:[#allocation2 + $0x8] sm:$0xff] %vm711, %v708
  %714 = vrot.lane.b32.xlu0 %v313, 104
  %v715 = vpop.permute.xlu0 %714
  %716 = vrot.lane.b32.xlu0 %v313, 72
  %v717 = vpop.permute.xlu0 %716
  %v719 = vsel %vm317, %v715, 0
  %v722 = vsel %vm317, %v717, 0
  %724 = vmatprep.subr.bf16.mxu0 0
  %725 = vmatpush1.bf16.xpose.msra.mxu0 %v722
  %726 = vmatprep.subr.bf16.mxu0 0
  %727 = vmatpush1.bf16.xpose.msra.mxu0 0
  %728 = vmatprep.subr.bf16.mxu0 0
  %729 = vmatpush1.bf16.xpose.msra.mxu0 0
  %730 = vmatprep.subr.bf16.mxu0 0
  %731 = vmatpush1.bf16.xpose.msra.mxu0 0
  %732 = vmatprep.subr.bf16.mxu0 0
  %733 = vmatpush1.bf16.xpose.msra.mxu0 0
  %734 = vmatprep.subr.bf16.mxu0 0
  %735 = vmatpush1.bf16.xpose.msra.mxu0 0
  %736 = vmatprep.subr.bf16.mxu0 0
  %737 = vmatpush1.bf16.xpose.msra.mxu0 0
  %738 = vmatprep.subr.bf16.mxu0 0
  %739 = vmatpush1.bf16.xpose.msra.mxu0 0
  %740 = vmatprep.subr.bf16.mxu0 0
  %741 = vmatpush1.bf16.xpose.msra.mxu0 0
  %742 = vmatprep.subr.bf16.mxu0 0
  %743 = vmatpush1.bf16.xpose.msra.mxu0 0
  %744 = vmatprep.subr.bf16.mxu0 0
  %745 = vmatpush1.bf16.xpose.msra.mxu0 0
  %746 = vmatprep.subr.bf16.mxu0 0
  %747 = vmatpush1.bf16.xpose.msra.mxu0 0
  %748 = vmatprep.subr.bf16.mxu0 0
  %749 = vmatpush1.bf16.xpose.msra.mxu0 0
  %750 = vmatprep.subr.bf16.mxu0 0
  %751 = vmatpush1.bf16.xpose.msra.mxu0 0
  %752 = vmatprep.subr.bf16.mxu0 0
  %753 = vmatpush1.bf16.xpose.msra.mxu0 0
  %754 = vmatprep.subr.bf16.mxu0 0
  %755 = vmatpush1.bf16.xpose.msra.mxu0 0
  %756 = vmatprep.mubr.bf16.mxu0 0
  %757 = vmatmul.mubr.bf16.gmra.mrb[0].mxu0 %v719
  %v758 = vpop.f32.mrb[0].mxu0
  %v759 = vadd.f32 0.0, %v758
  %v760 = vpop.f32.mrb[0].mxu0
  %v761 = vpop.f32.mrb[0].mxu0
  %v762 = vadd.f32 0.0, %v761
  %v763 = vpop.f32.mrb[0].mxu0
  %764 = vdwg.mxu0
  %v765 = vmul.f32 %v759, 0.35355338
  %v766 = vmul.f32 %v762, 0.35355338
  %v767 = vadd.f32 %v765, %v202
  %v768 = vadd.f32 %v766, %v203
  %v769 = vsel %vm369, %v767, -inf
  %770 = vmax.xlane.f32.xlu0 %v769
  %v771 = vpop.xlane.xlu0 %770
  %v772 = vsel %vm369, %v768, -inf
  %773 = vmax.xlane.f32.xlu0 %v772
  %v774 = vpop.xlane.xlu0 %773
  %v775 = vsub.f32 %v767, %v771
  %v776 = vsub.f32 %v768, %v774
  %v777 = vmul.f32 %v775, 1.442695
  %v778 = vpow.pop %v777
  %v779 = vmul.f32 %v776, 1.442695
  %v780 = vpow.pop %v779
  %v781 = vsel %vm369, %v778, 0.0
  %782 = vadd.xlane.f32.xlu0 %v781
  %v783 = vpop.xlane.xlu0 %782
  %v784 = vsel %vm369, %v780, 0.0
  %785 = vadd.xlane.f32.xlu0 %v784
  %v786 = vpop.xlane.xlu0 %785
  %v787 = vrcp.pop %v783
  %v788 = vrcp.pop %v786
  %v789 = vmul.f32 %v778, %v787
  %v790 = vmul.f32 %v780, %v788
  %v791 = vpack.c.bf16 %v790, %v789
  %792 = vrot.lane.b32.xlu0 %v313, 40
  %v793 = vpop.permute.xlu0 %792
  %v796 = vsel %vm369, %v791, 0
  %798 = vmatprep.subr.bf16.mxu0 0
  %799 = vmatpush1.bf16.msra.mxu0 %v793
  %800 = vmatprep.subr.bf16.mxu0 0
  %801 = vmatpush1.bf16.msra.mxu0 0
  %802 = vmatprep.subr.bf16.mxu0 0
  %803 = vmatpush1.bf16.msra.mxu0 0
  %804 = vmatprep.subr.bf16.mxu0 0
  %805 = vmatpush1.bf16.msra.mxu0 0
  %806 = vmatprep.subr.bf16.mxu0 0
  %807 = vmatpush1.bf16.msra.mxu0 0
  %808 = vmatprep.subr.bf16.mxu0 0
  %809 = vmatpush1.bf16.msra.mxu0 0
  %810 = vmatprep.subr.bf16.mxu0 0
  %811 = vmatpush1.bf16.msra.mxu0 0
  %812 = vmatprep.subr.bf16.mxu0 0
  %813 = vmatpush1.bf16.msra.mxu0 0
  %814 = vmatprep.subr.bf16.mxu0 0
  %815 = vmatpush1.bf16.msra.mxu0 0
  %816 = vmatprep.subr.bf16.mxu0 0
  %817 = vmatpush1.bf16.msra.mxu0 0
  %818 = vmatprep.subr.bf16.mxu0 0
  %819 = vmatpush1.bf16.msra.mxu0 0
  %820 = vmatprep.subr.bf16.mxu0 0
  %821 = vmatpush1.bf16.msra.mxu0 0
  %822 = vmatprep.subr.bf16.mxu0 0
  %823 = vmatpush1.bf16.msra.mxu0 0
  %824 = vmatprep.subr.bf16.mxu0 0
  %825 = vmatpush1.bf16.msra.mxu0 0
  %826 = vmatprep.subr.bf16.mxu0 0
  %827 = vmatpush1.bf16.msra.mxu0 0
  %828 = vmatprep.subr.bf16.mxu0 0
  %829 = vmatpush1.bf16.msra.mxu0 0
  %830 = vmatprep.mubr.bf16.mxu0 0
  %831 = vmatmul.mubr.bf16.gmra.mrb[0].mxu0 %v796
  %v832 = vpop.f32.mrb[0].mxu0
  %v833 = vadd.f32 0.0, %v832
  %v834 = vpop.f32.mrb[0].mxu0
  %v835 = vpop.f32.mrb[0].mxu0
  %v836 = vadd.f32 0.0, %v835
  %v837 = vpop.f32.mrb[0].mxu0
  %838 = vdwg.mxu0
  %841 = vrot.lane.b32.xlu0 %v833, 24
  %v842 = vpop.permute.xlu0 %841
  %843 = vrot.lane.b32.xlu0 %v836, 24
  %v844 = vpop.permute.xlu0 %843
  %vm847 = vcmask 261312
  %848 = vst.msk [vmem:[#allocation2] sm:$0xff] %vm847, %v842
  %849 = vst.msk [vmem:[#allocation2 + $0x8] sm:$0xff] %vm847, %v844
  %v850 = vld [vmem:[#allocation2] sm:$0xff]
  %v851 = vld [vmem:[#allocation2 + $0x8] sm:$0xff]
  %v852 = vpack.c.bf16 %v851, %v850
  %v853 = vld [vmem:[%s7] sm:$0xf]
  %v854 = vld [vmem:[%s7 + $0x4] sm:$0xf]
  %v855 = vld [vmem:[%s7 + $0x8] sm:$0xf]
  %v856 = vld [vmem:[%s7 + $0xc] sm:$0xf]
  %v861 = vunpack.c.l.b16 %v853
  %v862 = vunpack.c.l.b16 %v854
  %v863 = vunpack.c.l.b16 %v855
  %v864 = vunpack.c.l.b16 %v856
  %v865 = vpack.c.b16 %v862, %v861
  %v866 = vpack.c.b16 %v864, %v863
  %v870 = vsel %vm205, %v852, 0
  %872 = vmatprep.subr.bf16.mxu0 0
  %873 = vmatpush1.bf16.msra.mxu0 %v865
  %874 = vmatprep.subr.bf16.mxu0 0
  %875 = vmatpush1.bf16.msra.mxu0 %v866
  %876 = vmatprep.subr.bf16.mxu0 0
  %877 = vmatpush1.bf16.msra.mxu0 0
  %878 = vmatprep.subr.bf16.mxu0 0
  %879 = vmatpush1.bf16.msra.mxu0 0
  %880 = vmatprep.subr.bf16.mxu0 0
  %881 = vmatpush1.bf16.msra.mxu0 0
  %882 = vmatprep.subr.bf16.mxu0 0
  %883 = vmatpush1.bf16.msra.mxu0 0
  %884 = vmatprep.subr.bf16.mxu0 0
  %885 = vmatpush1.bf16.msra.mxu0 0
  %886 = vmatprep.subr.bf16.mxu0 0
  %887 = vmatpush1.bf16.msra.mxu0 0
  %888 = vmatprep.subr.bf16.mxu0 0
  %889 = vmatpush1.bf16.msra.mxu0 0
  %890 = vmatprep.subr.bf16.mxu0 0
  %891 = vmatpush1.bf16.msra.mxu0 0
  %892 = vmatprep.subr.bf16.mxu0 0
  %893 = vmatpush1.bf16.msra.mxu0 0
  %894 = vmatprep.subr.bf16.mxu0 0
  %895 = vmatpush1.bf16.msra.mxu0 0
  %896 = vmatprep.subr.bf16.mxu0 0
  %897 = vmatpush1.bf16.msra.mxu0 0
  %898 = vmatprep.subr.bf16.mxu0 0
  %899 = vmatpush1.bf16.msra.mxu0 0
  %900 = vmatprep.subr.bf16.mxu0 0
  %901 = vmatpush1.bf16.msra.mxu0 0
  %902 = vmatprep.subr.bf16.mxu0 0
  %903 = vmatpush1.bf16.msra.mxu0 0
  %904 = vmatprep.mubr.bf16.mxu0 0
  %905 = vmatmul.mubr.bf16.gmra.mrb[0].mxu0 %v870
  %v906 = vpop.f32.mrb[0].mxu0
  %v907 = vadd.f32 0.0, %v906
  %v908 = vpop.f32.mrb[0].mxu0
  %v909 = vpop.f32.mrb[0].mxu0
  %v910 = vadd.f32 0.0, %v909
  %v911 = vpop.f32.mrb[0].mxu0
  %912 = vdwg.mxu0
  %v913 = vadd.f32 %v196, %v907
  %v914 = vadd.f32 %v199, %v910
  %v915 = vld [vmem:[%s8] sm:$0x1]
  %v917 = vlaneseq
  %v918 = vshrl.u32 %v917, 7
  %v919 = vsub.s32 0, %v918
  %v920 = vrot.slane %v915, %v919
  %v922 = vadd.f32 %v913, %v920
  %v923 = vadd.f32 %v914, %v920
  %v924 = vld [vmem:[%s9] sm:$0x3]
  %v925 = vsel %vm205, %v922, 0.0
  %926 = vadd.xlane.f32.xlu0 %v925
  %v927 = vpop.xlane.xlu0 %926
  %v928 = vsel %vm205, %v923, 0.0
  %929 = vadd.xlane.f32.xlu0 %v928
  %v930 = vpop.xlane.xlu0 %929
  %v931 = vmul.f32 %v927, %v212
  %v932 = vmul.f32 %v930, %v212
  %v933 = vsub.f32 %v922, %v931
  %v934 = vsub.f32 %v923, %v932
  %v935 = vmul.f32 %v933, %v933
  %v936 = vmul.f32 %v934, %v934
  %v937 = vsel %vm205, %v935, 0.0
  %938 = vadd.xlane.f32.xlu0 %v937
  %v939 = vpop.xlane.xlu0 %938
  %v940 = vsel %vm205, %v936, 0.0
  %941 = vadd.xlane.f32.xlu0 %v940
  %v942 = vpop.xlane.xlu0 %941
  %v943 = vmul.f32 %v939, %v212
  %v944 = vmul.f32 %v942, %v212
  %v945 = vadd.f32 %v943, 1e-06
  %v946 = vadd.f32 %v944, 1e-06
  %v947 = vrsqrt.pop %v945
  %v948 = vrsqrt.pop %v946
  %v949 = vmul.f32 %v933, %v947
  %v950 = vmul.f32 %v934, %v948
  %v951 = vlaneseq
  %v952 = vshrl.u32 %v951, 7
  %v953 = vsub.s32 0, %v952
  %v954 = vrot.slane %v924, %v953
  %v955 = vmul.f32 %v949, %v954
  %v956 = vmul.f32 %v950, %v954
  %v957 = vlaneseq
  %v958 = vshrl.u32 %v957, 7
  %v959 = vsub.s32 1, %v958
  %v960 = vrot.slane %v924, %v959
  %v961 = vadd.f32 %v955, %v960
  %v962 = vadd.f32 %v956, %v960
  %v963 = vpack.c.bf16 %v962, %v961
  %v964 = vld [vmem:[%s10] sm:$0xf]
  %v965 = vld [vmem:[%s10 + $0x4] sm:$0xf]
  %v966 = vld [vmem:[%s10 + $0x8] sm:$0xf]
  %v967 = vld [vmem:[%s10 + $0xc] sm:$0xf]
  %v968 = vld [vmem:[%s11] sm:$0x1]
  %v970 = vlaneseq
  %v971 = vshrl.u32 %v970, 7
  %v972 = vsub.s32 0, %v971
  %v973 = vrot.slane %v968, %v972
  %v979 = vunpack.c.l.b16 %v964
  %v980 = vunpack.c.l.b16 %v965
  %v981 = vunpack.c.l.b16 %v966
  %v982 = vunpack.c.l.b16 %v967
  %v983 = vpack.c.b16 %v980, %v979
  %v984 = vpack.c.b16 %v982, %v981
  %v988 = vsel %vm205, %v963, 0
  %990 = vmatprep.subr.bf16.mxu0 0
  %991 = vmatpush1.bf16.msra.mxu0 %v983
  %992 = vmatprep.subr.bf16.mxu0 0
  %993 = vmatpush1.bf16.msra.mxu0 %v984
  %994 = vmatprep.subr.bf16.mxu0 0
  %995 = vmatpush1.bf16.msra.mxu0 0
  %996 = vmatprep.subr.bf16.mxu0 0
  %997 = vmatpush1.bf16.msra.mxu0 0
  %998 = vmatprep.subr.bf16.mxu0 0
  %999 = vmatpush1.bf16.msra.mxu0 0
  %1000 = vmatprep.subr.bf16.mxu0 0
  %1001 = vmatpush1.bf16.msra.mxu0 0
  %1002 = vmatprep.subr.bf16.mxu0 0
  %1003 = vmatpush1.bf16.msra.mxu0 0
  %1004 = vmatprep.subr.bf16.mxu0 0
  %1005 = vmatpush1.bf16.msra.mxu0 0
  %1006 = vmatprep.subr.bf16.mxu0 0
  %1007 = vmatpush1.bf16.msra.mxu0 0
  %1008 = vmatprep.subr.bf16.mxu0 0
  %1009 = vmatpush1.bf16.msra.mxu0 0
  %1010 = vmatprep.subr.bf16.mxu0 0
  %1011 = vmatpush1.bf16.msra.mxu0 0
  %1012 = vmatprep.subr.bf16.mxu0 0
  %1013 = vmatpush1.bf16.msra.mxu0 0
  %1014 = vmatprep.subr.bf16.mxu0 0
  %1015 = vmatpush1.bf16.msra.mxu0 0
  %1016 = vmatprep.subr.bf16.mxu0 0
  %1017 = vmatpush1.bf16.msra.mxu0 0
  %1018 = vmatprep.subr.bf16.mxu0 0
  %1019 = vmatpush1.bf16.msra.mxu0 0
  %1020 = vmatprep.subr.bf16.mxu0 0
  %1021 = vmatpush1.bf16.msra.mxu0 0
  %1022 = vmatprep.mubr.bf16.mxu0 0
  %1023 = vmatmul.mubr.bf16.gmra.mrb[0].mxu0 %v988
  %v1024 = vpop.f32.mrb[0].mxu0
  %v1025 = vadd.f32 %v973, %v1024
  %v1026 = vpop.f32.mrb[0].mxu0
  %v1027 = vpop.f32.mrb[0].mxu0
  %v1028 = vadd.f32 %v973, %v1027
  %v1029 = vpop.f32.mrb[0].mxu0
  %1030 = vdwg.mxu0
  %v1031 = vmul.f32 %v1025, 0.5
  %v1032 = vmul.f32 %v1028, 0.5
  %v1033 = vmul.f32 %v1025, 0.70710677
  %v1034 = vmul.f32 %v1028, 0.70710677
  %v1035 = verf.f32.pop %v1033
  %v1036 = verf.f32.pop %v1034
  %v1037 = vadd.f32 %v1035, 1.0
  %v1038 = vadd.f32 %v1036, 1.0
  %v1039 = vmul.f32 %v1031, %v1037
  %v1040 = vmul.f32 %v1032, %v1038
  %v1041 = vpack.c.bf16 %v1040, %v1039
  %v1042 = vld [vmem:[%s12] sm:$0xf]
  %v1043 = vld [vmem:[%s12 + $0x4] sm:$0xf]
  %v1044 = vld [vmem:[%s12 + $0x8] sm:$0xf]
  %v1045 = vld [vmem:[%s12 + $0xc] sm:$0xf]
  %v1046 = vld [vmem:[%s12 + $0x10] sm:$0xf]
  %v1047 = vld [vmem:[%s12 + $0x14] sm:$0xf]
  %v1048 = vld [vmem:[%s12 + $0x18] sm:$0xf]
  %v1049 = vld [vmem:[%s12 + $0x1c] sm:$0xf]
  %v1050 = vld [vmem:[%s12 + $0x20] sm:$0xf]
  %v1051 = vld [vmem:[%s12 + $0x24] sm:$0xf]
  %v1052 = vld [vmem:[%s12 + $0x28] sm:$0xf]
  %v1053 = vld [vmem:[%s12 + $0x2c] sm:$0xf]
  %v1054 = vld [vmem:[%s12 + $0x30] sm:$0xf]
  %v1055 = vld [vmem:[%s12 + $0x34] sm:$0xf]
  %v1056 = vld [vmem:[%s12 + $0x38] sm:$0xf]
  %v1057 = vld [vmem:[%s12 + $0x3c] sm:$0xf]
  %v1058 = vld [vmem:[%s13] sm:$0x1]
  %v1060 = vlaneseq
  %v1061 = vshrl.u32 %v1060, 7
  %v1062 = vsub.s32 0, %v1061
  %v1063 = vrot.slane %v1058, %v1062
  %v1081 = vunpack.c.l.b16 %v1042
  %v1082 = vunpack.c.l.b16 %v1043
  %v1083 = vunpack.c.l.b16 %v1044
  %v1084 = vunpack.c.l.b16 %v1045
  %v1085 = vunpack.c.l.b16 %v1046
  %v1086 = vunpack.c.l.b16 %v1047
  %v1087 = vunpack.c.l.b16 %v1048
  %v1088 = vunpack.c.l.b16 %v1049
  %v1089 = vunpack.c.l.b16 %v1050
  %v1090 = vunpack.c.l.b16 %v1051
  %v1091 = vunpack.c.l.b16 %v1052
  %v1092 = vunpack.c.l.b16 %v1053
  %v1093 = vunpack.c.l.b16 %v1054
  %v1094 = vunpack.c.l.b16 %v1055
  %v1095 = vunpack.c.l.b16 %v1056
  %v1096 = vunpack.c.l.b16 %v1057
  %v1097 = vpack.c.b16 %v1082, %v1081
  %v1098 = vpack.c.b16 %v1084, %v1083
  %v1099 = vpack.c.b16 %v1086, %v1085
  %v1100 = vpack.c.b16 %v1088, %v1087
  %v1101 = vpack.c.b16 %v1090, %v1089
  %v1102 = vpack.c.b16 %v1092, %v1091
  %v1103 = vpack.c.b16 %v1094, %v1093
  %v1104 = vpack.c.b16 %v1096, %v1095
  %1113 = vmatprep.subr.bf16.mxu0 0
  %1114 = vmatpush1.bf16.msra.mxu0 %v1097
  %1115 = vmatprep.subr.bf16.mxu0 0
  %1116 = vmatpush1.bf16.msra.mxu0 %v1098
  %1117 = vmatprep.subr.bf16.mxu0 0
  %1118 = vmatpush1.bf16.msra.mxu0 %v1099
  %1119 = vmatprep.subr.bf16.mxu0 0
  %1120 = vmatpush1.bf16.msra.mxu0 %v1100
  %1121 = vmatprep.subr.bf16.mxu0 0
  %1122 = vmatpush1.bf16.msra.mxu0 %v1101
  %1123 = vmatprep.subr.bf16.mxu0 0
  %1124 = vmatpush1.bf16.msra.mxu0 %v1102
  %1125 = vmatprep.subr.bf16.mxu0 0
  %1126 = vmatpush1.bf16.msra.mxu0 %v1103
  %1127 = vmatprep.subr.bf16.mxu0 0
  %1128 = vmatpush1.bf16.msra.mxu0 %v1104
  %1129 = vmatprep.subr.bf16.mxu0 0
  %1130 = vmatpush1.bf16.msra.mxu0 0
  %1131 = vmatprep.subr.bf16.mxu0 0
  %1132 = vmatpush1.bf16.msra.mxu0 0
  %1133 = vmatprep.subr.bf16.mxu0 0
  %1134 = vmatpush1.bf16.msra.mxu0 0
  %1135 = vmatprep.subr.bf16.mxu0 0
  %1136 = vmatpush1.bf16.msra.mxu0 0
  %1137 = vmatprep.subr.bf16.mxu0 0
  %1138 = vmatpush1.bf16.msra.mxu0 0
  %1139 = vmatprep.subr.bf16.mxu0 0
  %1140 = vmatpush1.bf16.msra.mxu0 0
  %1141 = vmatprep.subr.bf16.mxu0 0
  %1142 = vmatpush1.bf16.msra.mxu0 0
  %1143 = vmatprep.subr.bf16.mxu0 0
  %1144 = vmatpush1.bf16.msra.mxu0 0
  %1145 = vmatprep.mubr.bf16.mxu0 0
  %1146 = vmatmul.mubr.bf16.gmra.mrb[0].mxu0 %v1041
  %v1147 = vpop.f32.mrb[0].mxu0
  %v1148 = vadd.f32 %v1063, %v1147
  %v1149 = vpop.f32.mrb[0].mxu0
  %v1150 = vpop.f32.mrb[0].mxu0
  %v1151 = vadd.f32 %v1063, %v1150
  %v1152 = vpop.f32.mrb[0].mxu0
  %1153 = vdwg.mxu0
  %v1154 = vadd.f32 %v922, %v1148
  %v1155 = vadd.f32 %v923, %v1151
  %s1156 = scalar_lea.vmem %s4, 2
  %v1157 = vld [vmem:[%s1156] sm:$0x3]
  %v1158 = vsel %vm205, %v1154, 0.0
  %1159 = vadd.xlane.f32.xlu0 %v1158
  %v1160 = vpop.xlane.xlu0 %1159
  %v1161 = vsel %vm205, %v1155, 0.0
  %1162 = vadd.xlane.f32.xlu0 %v1161
  %v1163 = vpop.xlane.xlu0 %1162
  %v1164 = vmul.f32 %v1160, %v212
  %v1165 = vmul.f32 %v1163, %v212
  %v1166 = vsub.f32 %v1154, %v1164
  %v1167 = vsub.f32 %v1155, %v1165
  %v1168 = vmul.f32 %v1166, %v1166
  %v1169 = vmul.f32 %v1167, %v1167
  %v1170 = vsel %vm205, %v1168, 0.0
  %1171 = vadd.xlane.f32.xlu0 %v1170
  %v1172 = vpop.xlane.xlu0 %1171
  %v1173 = vsel %vm205, %v1169, 0.0
  %1174 = vadd.xlane.f32.xlu0 %v1173
  %v1175 = vpop.xlane.xlu0 %1174
  %v1176 = vmul.f32 %v1172, %v212
  %v1177 = vmul.f32 %v1175, %v212
  %v1178 = vadd.f32 %v1176, 1e-06
  %v1179 = vadd.f32 %v1177, 1e-06
  %v1180 = vrsqrt.pop %v1178
  %v1181 = vrsqrt.pop %v1179
  %v1182 = vmul.f32 %v1166, %v1180
  %v1183 = vmul.f32 %v1167, %v1181
  %v1184 = vlaneseq
  %v1185 = vshrl.u32 %v1184, 7
  %v1186 = vsub.s32 0, %v1185
  %v1187 = vrot.slane %v1157, %v1186
  %v1188 = vmul.f32 %v1182, %v1187
  %v1189 = vmul.f32 %v1183, %v1187
  %v1190 = vlaneseq
  %v1191 = vshrl.u32 %v1190, 7
  %v1192 = vsub.s32 1, %v1191
  %v1193 = vrot.slane %v1157, %v1192
  %v1194 = vadd.f32 %v1188, %v1193
  %v1195 = vadd.f32 %v1189, %v1193
  %v1196 = vpack.c.bf16 %v1195, %v1194
  %s1197 = scalar_lea.vmem %s5, 16
  %v1198 = vld [vmem:[%s1197] sm:$0xf]
  %v1199 = vld [vmem:[%s1197 + $0x4] sm:$0xf]
  %v1200 = vld [vmem:[%s1197 + $0x8] sm:$0xf]
  %v1201 = vld [vmem:[%s1197 + $0xc] sm:$0xf]
  %s1202 = scalar_lea.vmem %s6, 1
  %v1203 = vld [vmem:[%s1202] sm:$0x1]
  %v1205 = vlaneseq
  %v1206 = vshrl.u32 %v1205, 7
  %v1207 = vsub.s32 0, %v1206
  %v1208 = vrot.slane %v1203, %v1207
  %v1214 = vunpack.c.l.b16 %v1198
  %v1215 = vunpack.c.l.b16 %v1199
  %v1216 = vunpack.c.l.b16 %v1200
  %v1217 = vunpack.c.l.b16 %v1201
  %v1218 = vpack.c.b16 %v1215, %v1214
  %v1219 = vpack.c.b16 %v1217, %v1216
  %v1223 = vsel %vm205, %v1196, 0
  %1225 = vmatprep.subr.bf16.mxu0 0
  %1226 = vmatpush1.bf16.msra.mxu0 %v1218
  %1227 = vmatprep.subr.bf16.mxu0 0
  %1228 = vmatpush1.bf16.msra.mxu0 %v1219
  %1229 = vmatprep.subr.bf16.mxu0 0
  %1230 = vmatpush1.bf16.msra.mxu0 0
  %1231 = vmatprep.subr.bf16.mxu0 0
  %1232 = vmatpush1.bf16.msra.mxu0 0
  %1233 = vmatprep.subr.bf16.mxu0 0
  %1234 = vmatpush1.bf16.msra.mxu0 0
  %1235 = vmatprep.subr.bf16.mxu0 0
  %1236 = vmatpush1.bf16.msra.mxu0 0
  %1237 = vmatprep.subr.bf16.mxu0 0
  %1238 = vmatpush1.bf16.msra.mxu0 0
  %1239 = vmatprep.subr.bf16.mxu0 0
  %1240 = vmatpush1.bf16.msra.mxu0 0
  %1241 = vmatprep.subr.bf16.mxu0 0
  %1242 = vmatpush1.bf16.msra.mxu0 0
  %1243 = vmatprep.subr.bf16.mxu0 0
  %1244 = vmatpush1.bf16.msra.mxu0 0
  %1245 = vmatprep.subr.bf16.mxu0 0
  %1246 = vmatpush1.bf16.msra.mxu0 0
  %1247 = vmatprep.subr.bf16.mxu0 0
  %1248 = vmatpush1.bf16.msra.mxu0 0
  %1249 = vmatprep.subr.bf16.mxu0 0
  %1250 = vmatpush1.bf16.msra.mxu0 0
  %1251 = vmatprep.subr.bf16.mxu0 0
  %1252 = vmatpush1.bf16.msra.mxu0 0
  %1253 = vmatprep.subr.bf16.mxu0 0
  %1254 = vmatpush1.bf16.msra.mxu0 0
  %1255 = vmatprep.subr.bf16.mxu0 0
  %1256 = vmatpush1.bf16.msra.mxu0 0
  %1257 = vmatprep.mubr.bf16.mxu0 0
  %1258 = vmatmul.mubr.bf16.gmra.mrb[0].mxu0 %v1223
  %v1259 = vpop.f32.mrb[0].mxu0
  %v1260 = vadd.f32 %v1208, %v1259
  %v1261 = vpop.f32.mrb[0].mxu0
  %v1262 = vpop.f32.mrb[0].mxu0
  %v1263 = vadd.f32 %v1208, %v1262
  %v1264 = vpop.f32.mrb[0].mxu0
  %1265 = vdwg.mxu0
  %v1266 = vpack.c.bf16 %v1263, %v1260
  %1268 = vrot.lane.b32.xlu0 %v1266, 96
  %v1269 = vpop.permute.xlu0 %1268
  %v1271 = vsel %vm317, %v1266, 0
  %v1274 = vsel %vm317, %v1269, 0
  %1276 = vmatprep.subr.bf16.mxu0 0
  %1277 = vmatpush1.bf16.xpose.msra.mxu0 %v1274
  %1278 = vmatprep.subr.bf16.mxu0 0
  %1279 = vmatpush1.bf16.xpose.msra.mxu0 0
  %1280 = vmatprep.subr.bf16.mxu0 0
  %1281 = vmatpush1.bf16.xpose.msra.mxu0 0
  %1282 = vmatprep.subr.bf16.mxu0 0
  %1283 = vmatpush1.bf16.xpose.msra.mxu0 0
  %1284 = vmatprep.subr.bf16.mxu0 0
  %1285 = vmatpush1.bf16.xpose.msra.mxu0 0
  %1286 = vmatprep.subr.bf16.mxu0 0
  %1287 = vmatpush1.bf16.xpose.msra.mxu0 0
  %1288 = vmatprep.subr.bf16.mxu0 0
  %1289 = vmatpush1.bf16.xpose.msra.mxu0 0
  %1290 = vmatprep.subr.bf16.mxu0 0
  %1291 = vmatpush1.bf16.xpose.msra.mxu0 0
  %1292 = vmatprep.subr.bf16.mxu0 0
  %1293 = vmatpush1.bf16.xpose.msra.mxu0 0
  %1294 = vmatprep.subr.bf16.mxu0 0
  %1295 = vmatpush1.bf16.xpose.msra.mxu0 0
  %1296 = vmatprep.subr.bf16.mxu0 0
  %1297 = vmatpush1.bf16.xpose.msra.mxu0 0
  %1298 = vmatprep.subr.bf16.mxu0 0
  %1299 = vmatpush1.bf16.xpose.msra.mxu0 0
  %1300 = vmatprep.subr.bf16.mxu0 0
  %1301 = vmatpush1.bf16.xpose.msra.mxu0 0
  %1302 = vmatprep.subr.bf16.mxu0 0
  %1303 = vmatpush1.bf16.xpose.msra.mxu0 0
  %1304 = vmatprep.subr.bf16.mxu0 0
  %1305 = vmatpush1.bf16.xpose.msra.mxu0 0
  %1306 = vmatprep.subr.bf16.mxu0 0
  %1307 = vmatpush1.bf16.xpose.msra.mxu0 0
  %1308 = vmatprep.mubr.bf16.mxu0 0
  %1309 = vmatmul.mubr.bf16.gmra.mrb[0].mxu0 %v1271
  %v1310 = vpop.f32.mrb[0].mxu0
  %v1311 = vadd.f32 0.0, %v1310
  %v1312 = vpop.f32.mrb[0].mxu0
  %v1313 = vpop.f32.mrb[0].mxu0
  %v1314 = vadd.f32 0.0, %v1313
  %v1315 = vpop.f32.mrb[0].mxu0
  %1316 = vdwg.mxu0
  %v1317 = vmul.f32 %v1311, 0.35355338
  %v1318 = vmul.f32 %v1314, 0.35355338
  %v1319 = vadd.f32 %v1317, %v202
  %v1320 = vadd.f32 %v1318, %v203
  %v1321 = vsel %vm369, %v1319, -inf
  %1322 = vmax.xlane.f32.xlu0 %v1321
  %v1323 = vpop.xlane.xlu0 %1322
  %v1324 = vsel %vm369, %v1320, -inf
  %1325 = vmax.xlane.f32.xlu0 %v1324
  %v1326 = vpop.xlane.xlu0 %1325
  %v1327 = vsub.f32 %v1319, %v1323
  %v1328 = vsub.f32 %v1320, %v1326
  %v1329 = vmul.f32 %v1327, 1.442695
  %v1330 = vpow.pop %v1329
  %v1331 = vmul.f32 %v1328, 1.442695
  %v1332 = vpow.pop %v1331
  %v1333 = vsel %vm369, %v1330, 0.0
  %1334 = vadd.xlane.f32.xlu0 %v1333
  %v1335 = vpop.xlane.xlu0 %1334
  %v1336 = vsel %vm369, %v1332, 0.0
  %1337 = vadd.xlane.f32.xlu0 %v1336
  %v1338 = vpop.xlane.xlu0 %1337
  %v1339 = vrcp.pop %v1335
  %v1340 = vrcp.pop %v1338
  %v1341 = vmul.f32 %v1330, %v1339
  %v1342 = vmul.f32 %v1332, %v1340
  %v1343 = vpack.c.bf16 %v1342, %v1341
  %1344 = vrot.lane.b32.xlu0 %v1266, 64
  %v1345 = vpop.permute.xlu0 %1344
  %v1348 = vsel %vm369, %v1343, 0
  %1350 = vmatprep.subr.bf16.mxu0 0
  %1351 = vmatpush1.bf16.msra.mxu0 %v1345
  %1352 = vmatprep.subr.bf16.mxu0 0
  %1353 = vmatpush1.bf16.msra.mxu0 0
  %1354 = vmatprep.subr.bf16.mxu0 0
  %1355 = vmatpush1.bf16.msra.mxu0 0
  %1356 = vmatprep.subr.bf16.mxu0 0
  %1357 = vmatpush1.bf16.msra.mxu0 0
  %1358 = vmatprep.subr.bf16.mxu0 0
  %1359 = vmatpush1.bf16.msra.mxu0 0
  %1360 = vmatprep.subr.bf16.mxu0 0
  %1361 = vmatpush1.bf16.msra.mxu0 0
  %1362 = vmatprep.subr.bf16.mxu0 0
  %1363 = vmatpush1.bf16.msra.mxu0 0
  %1364 = vmatprep.subr.bf16.mxu0 0
  %1365 = vmatpush1.bf16.msra.mxu0 0
  %1366 = vmatprep.subr.bf16.mxu0 0
  %1367 = vmatpush1.bf16.msra.mxu0 0
  %1368 = vmatprep.subr.bf16.mxu0 0
  %1369 = vmatpush1.bf16.msra.mxu0 0
  %1370 = vmatprep.subr.bf16.mxu0 0
  %1371 = vmatpush1.bf16.msra.mxu0 0
  %1372 = vmatprep.subr.bf16.mxu0 0
  %1373 = vmatpush1.bf16.msra.mxu0 0
  %1374 = vmatprep.subr.bf16.mxu0 0
  %1375 = vmatpush1.bf16.msra.mxu0 0
  %1376 = vmatprep.subr.bf16.mxu0 0
  %1377 = vmatpush1.bf16.msra.mxu0 0
  %1378 = vmatprep.subr.bf16.mxu0 0
  %1379 = vmatpush1.bf16.msra.mxu0 0
  %1380 = vmatprep.subr.bf16.mxu0 0
  %1381 = vmatpush1.bf16.msra.mxu0 0
  %1382 = vmatprep.mubr.bf16.mxu0 0
  %1383 = vmatmul.mubr.bf16.gmra.mrb[0].mxu0 %v1348
  %v1384 = vpop.f32.mrb[0].mxu0
  %v1385 = vadd.f32 0.0, %v1384
  %v1386 = vpop.f32.mrb[0].mxu0
  %v1387 = vpop.f32.mrb[0].mxu0
  %v1388 = vadd.f32 0.0, %v1387
  %v1389 = vpop.f32.mrb[0].mxu0
  %1390 = vdwg.mxu0
  %1391 = vst.msk [vmem:[#allocation2] sm:$0xff] %vm317, %v1385
  %1392 = vst.msk [vmem:[#allocation2 + $0x8] sm:$0xff] %vm317, %v1388
  %1393 = vrot.lane.b32.xlu0 %v1266, 120
  %v1394 = vpop.permute.xlu0 %1393
  %1395 = vrot.lane.b32.xlu0 %v1266, 88
  %v1396 = vpop.permute.xlu0 %1395
  %v1398 = vsel %vm317, %v1394, 0
  %v1401 = vsel %vm317, %v1396, 0
  %1403 = vmatprep.subr.bf16.mxu0 0
  %1404 = vmatpush1.bf16.xpose.msra.mxu0 %v1401
  %1405 = vmatprep.subr.bf16.mxu0 0
  %1406 = vmatpush1.bf16.xpose.msra.mxu0 0
  %1407 = vmatprep.subr.bf16.mxu0 0
  %1408 = vmatpush1.bf16.xpose.msra.mxu0 0
  %1409 = vmatprep.subr.bf16.mxu0 0
  %1410 = vmatpush1.bf16.xpose.msra.mxu0 0
  %1411 = vmatprep.subr.bf16.mxu0 0
  %1412 = vmatpush1.bf16.xpose.msra.mxu0 0
  %1413 = vmatprep.subr.bf16.mxu0 0
  %1414 = vmatpush1.bf16.xpose.msra.mxu0 0
  %1415 = vmatprep.subr.bf16.mxu0 0
  %1416 = vmatpush1.bf16.xpose.msra.mxu0 0
  %1417 = vmatprep.subr.bf16.mxu0 0
  %1418 = vmatpush1.bf16.xpose.msra.mxu0 0
  %1419 = vmatprep.subr.bf16.mxu0 0
  %1420 = vmatpush1.bf16.xpose.msra.mxu0 0
  %1421 = vmatprep.subr.bf16.mxu0 0
  %1422 = vmatpush1.bf16.xpose.msra.mxu0 0
  %1423 = vmatprep.subr.bf16.mxu0 0
  %1424 = vmatpush1.bf16.xpose.msra.mxu0 0
  %1425 = vmatprep.subr.bf16.mxu0 0
  %1426 = vmatpush1.bf16.xpose.msra.mxu0 0
  %1427 = vmatprep.subr.bf16.mxu0 0
  %1428 = vmatpush1.bf16.xpose.msra.mxu0 0
  %1429 = vmatprep.subr.bf16.mxu0 0
  %1430 = vmatpush1.bf16.xpose.msra.mxu0 0
  %1431 = vmatprep.subr.bf16.mxu0 0
  %1432 = vmatpush1.bf16.xpose.msra.mxu0 0
  %1433 = vmatprep.subr.bf16.mxu0 0
  %1434 = vmatpush1.bf16.xpose.msra.mxu0 0
  %1435 = vmatprep.mubr.bf16.mxu0 0
  %1436 = vmatmul.mubr.bf16.gmra.mrb[0].mxu0 %v1398
  %v1437 = vpop.f32.mrb[0].mxu0
  %v1438 = vadd.f32 0.0, %v1437
  %v1439 = vpop.f32.mrb[0].mxu0
  %v1440 = vpop.f32.mrb[0].mxu0
  %v1441 = vadd.f32 0.0, %v1440
  %v1442 = vpop.f32.mrb[0].mxu0
  %1443 = vdwg.mxu0
  %v1444 = vmul.f32 %v1438, 0.35355338
  %v1445 = vmul.f32 %v1441, 0.35355338
  %v1446 = vadd.f32 %v1444, %v202
  %v1447 = vadd.f32 %v1445, %v203
  %v1448 = vsel %vm369, %v1446, -inf
  %1449 = vmax.xlane.f32.xlu0 %v1448
  %v1450 = vpop.xlane.xlu0 %1449
  %v1451 = vsel %vm369, %v1447, -inf
  %1452 = vmax.xlane.f32.xlu0 %v1451
  %v1453 = vpop.xlane.xlu0 %1452
  %v1454 = vsub.f32 %v1446, %v1450
  %v1455 = vsub.f32 %v1447, %v1453
  %v1456 = vmul.f32 %v1454, 1.442695
  %v1457 = vpow.pop %v1456
  %v1458 = vmul.f32 %v1455, 1.442695
  %v1459 = vpow.pop %v1458
  %v1460 = vsel %vm369, %v1457, 0.0
  %1461 = vadd.xlane.f32.xlu0 %v1460
  %v1462 = vpop.xlane.xlu0 %1461
  %v1463 = vsel %vm369, %v1459, 0.0
  %1464 = vadd.xlane.f32.xlu0 %v1463
  %v1465 = vpop.xlane.xlu0 %1464
  %v1466 = vrcp.pop %v1462
  %v1467 = vrcp.pop %v1465
  %v1468 = vmul.f32 %v1457, %v1466
  %v1469 = vmul.f32 %v1459, %v1467
  %v1470 = vpack.c.bf16 %v1469, %v1468
  %1471 = vrot.lane.b32.xlu0 %v1266, 56
  %v1472 = vpop.permute.xlu0 %1471
  %v1475 = vsel %vm369, %v1470, 0
  %1477 = vmatprep.subr.bf16.mxu0 0
  %1478 = vmatpush1.bf16.msra.mxu0 %v1472
  %1479 = vmatprep.subr.bf16.mxu0 0
  %1480 = vmatpush1.bf16.msra.mxu0 0
  %1481 = vmatprep.subr.bf16.mxu0 0
  %1482 = vmatpush1.bf16.msra.mxu0 0
  %1483 = vmatprep.subr.bf16.mxu0 0
  %1484 = vmatpush1.bf16.msra.mxu0 0
  %1485 = vmatprep.subr.bf16.mxu0 0
  %1486 = vmatpush1.bf16.msra.mxu0 0
  %1487 = vmatprep.subr.bf16.mxu0 0
  %1488 = vmatpush1.bf16.msra.mxu0 0
  %1489 = vmatprep.subr.bf16.mxu0 0
  %1490 = vmatpush1.bf16.msra.mxu0 0
  %1491 = vmatprep.subr.bf16.mxu0 0
  %1492 = vmatpush1.bf16.msra.mxu0 0
  %1493 = vmatprep.subr.bf16.mxu0 0
  %1494 = vmatpush1.bf16.msra.mxu0 0
  %1495 = vmatprep.subr.bf16.mxu0 0
  %1496 = vmatpush1.bf16.msra.mxu0 0
  %1497 = vmatprep.subr.bf16.mxu0 0
  %1498 = vmatpush1.bf16.msra.mxu0 0
  %1499 = vmatprep.subr.bf16.mxu0 0
  %1500 = vmatpush1.bf16.msra.mxu0 0
  %1501 = vmatprep.subr.bf16.mxu0 0
  %1502 = vmatpush1.bf16.msra.mxu0 0
  %1503 = vmatprep.subr.bf16.mxu0 0
  %1504 = vmatpush1.bf16.msra.mxu0 0
  %1505 = vmatprep.subr.bf16.mxu0 0
  %1506 = vmatpush1.bf16.msra.mxu0 0
  %1507 = vmatprep.subr.bf16.mxu0 0
  %1508 = vmatpush1.bf16.msra.mxu0 0
  %1509 = vmatprep.mubr.bf16.mxu0 0
  %1510 = vmatmul.mubr.bf16.gmra.mrb[0].mxu0 %v1475
  %v1511 = vpop.f32.mrb[0].mxu0
  %v1512 = vadd.f32 0.0, %v1511
  %v1513 = vpop.f32.mrb[0].mxu0
  %v1514 = vpop.f32.mrb[0].mxu0
  %v1515 = vadd.f32 0.0, %v1514
  %v1516 = vpop.f32.mrb[0].mxu0
  %1517 = vdwg.mxu0
  %1520 = vrot.lane.b32.xlu0 %v1512, 8
  %v1521 = vpop.permute.xlu0 %1520
  %1522 = vrot.lane.b32.xlu0 %v1515, 8
  %v1523 = vpop.permute.xlu0 %1522
  %1526 = vst.msk [vmem:[#allocation2] sm:$0xff] %vm575, %v1521
  %1527 = vst.msk [vmem:[#allocation2 + $0x8] sm:$0xff] %vm575, %v1523
  %1528 = vrot.lane.b32.xlu0 %v1266, 112
  %v1529 = vpop.permute.xlu0 %1528
  %1530 = vrot.lane.b32.xlu0 %v1266, 80
  %v1531 = vpop.permute.xlu0 %1530
  %v1533 = vsel %vm317, %v1529, 0
  %v1536 = vsel %vm317, %v1531, 0
  %1538 = vmatprep.subr.bf16.mxu0 0
  %1539 = vmatpush1.bf16.xpose.msra.mxu0 %v1536
  %1540 = vmatprep.subr.bf16.mxu0 0
  %1541 = vmatpush1.bf16.xpose.msra.mxu0 0
  %1542 = vmatprep.subr.bf16.mxu0 0
  %1543 = vmatpush1.bf16.xpose.msra.mxu0 0
  %1544 = vmatprep.subr.bf16.mxu0 0
  %1545 = vmatpush1.bf16.xpose.msra.mxu0 0
  %1546 = vmatprep.subr.bf16.mxu0 0
  %1547 = vmatpush1.bf16.xpose.msra.mxu0 0
  %1548 = vmatprep.subr.bf16.mxu0 0
  %1549 = vmatpush1.bf16.xpose.msra.mxu0 0
  %1550 = vmatprep.subr.bf16.mxu0 0
  %1551 = vmatpush1.bf16.xpose.msra.mxu0 0
  %1552 = vmatprep.subr.bf16.mxu0 0
  %1553 = vmatpush1.bf16.xpose.msra.mxu0 0
  %1554 = vmatprep.subr.bf16.mxu0 0
  %1555 = vmatpush1.bf16.xpose.msra.mxu0 0
  %1556 = vmatprep.subr.bf16.mxu0 0
  %1557 = vmatpush1.bf16.xpose.msra.mxu0 0
  %1558 = vmatprep.subr.bf16.mxu0 0
  %1559 = vmatpush1.bf16.xpose.msra.mxu0 0
  %1560 = vmatprep.subr.bf16.mxu0 0
  %1561 = vmatpush1.bf16.xpose.msra.mxu0 0
  %1562 = vmatprep.subr.bf16.mxu0 0
  %1563 = vmatpush1.bf16.xpose.msra.mxu0 0
  %1564 = vmatprep.subr.bf16.mxu0 0
  %1565 = vmatpush1.bf16.xpose.msra.mxu0 0
  %1566 = vmatprep.subr.bf16.mxu0 0
  %1567 = vmatpush1.bf16.xpose.msra.mxu0 0
  %1568 = vmatprep.subr.bf16.mxu0 0
  %1569 = vmatpush1.bf16.xpose.msra.mxu0 0
  %1570 = vmatprep.mubr.bf16.mxu0 0
  %1571 = vmatmul.mubr.bf16.gmra.mrb[0].mxu0 %v1533
  %v1572 = vpop.f32.mrb[0].mxu0
  %v1573 = vadd.f32 0.0, %v1572
  %v1574 = vpop.f32.mrb[0].mxu0
  %v1575 = vpop.f32.mrb[0].mxu0
  %v1576 = vadd.f32 0.0, %v1575
  %v1577 = vpop.f32.mrb[0].mxu0
  %1578 = vdwg.mxu0
  %v1579 = vmul.f32 %v1573, 0.35355338
  %v1580 = vmul.f32 %v1576, 0.35355338
  %v1581 = vadd.f32 %v1579, %v202
  %v1582 = vadd.f32 %v1580, %v203
  %v1583 = vsel %vm369, %v1581, -inf
  %1584 = vmax.xlane.f32.xlu0 %v1583
  %v1585 = vpop.xlane.xlu0 %1584
  %v1586 = vsel %vm369, %v1582, -inf
  %1587 = vmax.xlane.f32.xlu0 %v1586
  %v1588 = vpop.xlane.xlu0 %1587
  %v1589 = vsub.f32 %v1581, %v1585
  %v1590 = vsub.f32 %v1582, %v1588
  %v1591 = vmul.f32 %v1589, 1.442695
  %v1592 = vpow.pop %v1591
  %v1593 = vmul.f32 %v1590, 1.442695
  %v1594 = vpow.pop %v1593
  %v1595 = vsel %vm369, %v1592, 0.0
  %1596 = vadd.xlane.f32.xlu0 %v1595
  %v1597 = vpop.xlane.xlu0 %1596
  %v1598 = vsel %vm369, %v1594, 0.0
  %1599 = vadd.xlane.f32.xlu0 %v1598
  %v1600 = vpop.xlane.xlu0 %1599
  %v1601 = vrcp.pop %v1597
  %v1602 = vrcp.pop %v1600
  %v1603 = vmul.f32 %v1592, %v1601
  %v1604 = vmul.f32 %v1594, %v1602
  %v1605 = vpack.c.bf16 %v1604, %v1603
  %1606 = vrot.lane.b32.xlu0 %v1266, 48
  %v1607 = vpop.permute.xlu0 %1606
  %v1610 = vsel %vm369, %v1605, 0
  %1612 = vmatprep.subr.bf16.mxu0 0
  %1613 = vmatpush1.bf16.msra.mxu0 %v1607
  %1614 = vmatprep.subr.bf16.mxu0 0
  %1615 = vmatpush1.bf16.msra.mxu0 0
  %1616 = vmatprep.subr.bf16.mxu0 0
  %1617 = vmatpush1.bf16.msra.mxu0 0
  %1618 = vmatprep.subr.bf16.mxu0 0
  %1619 = vmatpush1.bf16.msra.mxu0 0
  %1620 = vmatprep.subr.bf16.mxu0 0
  %1621 = vmatpush1.bf16.msra.mxu0 0
  %1622 = vmatprep.subr.bf16.mxu0 0
  %1623 = vmatpush1.bf16.msra.mxu0 0
  %1624 = vmatprep.subr.bf16.mxu0 0
  %1625 = vmatpush1.bf16.msra.mxu0 0
  %1626 = vmatprep.subr.bf16.mxu0 0
  %1627 = vmatpush1.bf16.msra.mxu0 0
  %1628 = vmatprep.subr.bf16.mxu0 0
  %1629 = vmatpush1.bf16.msra.mxu0 0
  %1630 = vmatprep.subr.bf16.mxu0 0
  %1631 = vmatpush1.bf16.msra.mxu0 0
  %1632 = vmatprep.subr.bf16.mxu0 0
  %1633 = vmatpush1.bf16.msra.mxu0 0
  %1634 = vmatprep.subr.bf16.mxu0 0
  %1635 = vmatpush1.bf16.msra.mxu0 0
  %1636 = vmatprep.subr.bf16.mxu0 0
  %1637 = vmatpush1.bf16.msra.mxu0 0
  %1638 = vmatprep.subr.bf16.mxu0 0
  %1639 = vmatpush1.bf16.msra.mxu0 0
  %1640 = vmatprep.subr.bf16.mxu0 0
  %1641 = vmatpush1.bf16.msra.mxu0 0
  %1642 = vmatprep.subr.bf16.mxu0 0
  %1643 = vmatpush1.bf16.msra.mxu0 0
  %1644 = vmatprep.mubr.bf16.mxu0 0
  %1645 = vmatmul.mubr.bf16.gmra.mrb[0].mxu0 %v1610
  %v1646 = vpop.f32.mrb[0].mxu0
  %v1647 = vadd.f32 0.0, %v1646
  %v1648 = vpop.f32.mrb[0].mxu0
  %v1649 = vpop.f32.mrb[0].mxu0
  %v1650 = vadd.f32 0.0, %v1649
  %v1651 = vpop.f32.mrb[0].mxu0
  %1652 = vdwg.mxu0
  %1655 = vrot.lane.b32.xlu0 %v1647, 16
  %v1656 = vpop.permute.xlu0 %1655
  %1657 = vrot.lane.b32.xlu0 %v1650, 16
  %v1658 = vpop.permute.xlu0 %1657
  %1661 = vst.msk [vmem:[#allocation2] sm:$0xff] %vm711, %v1656
  %1662 = vst.msk [vmem:[#allocation2 + $0x8] sm:$0xff] %vm711, %v1658
  %1663 = vrot.lane.b32.xlu0 %v1266, 104
  %v1664 = vpop.permute.xlu0 %1663
  %1665 = vrot.lane.b32.xlu0 %v1266, 72
  %v1666 = vpop.permute.xlu0 %1665
  %v1668 = vsel %vm317, %v1664, 0
  %v1671 = vsel %vm317, %v1666, 0
  %1673 = vmatprep.subr.bf16.mxu0 0
  %1674 = vmatpush1.bf16.xpose.msra.mxu0 %v1671
  %1675 = vmatprep.subr.bf16.mxu0 0
  %1676 = vmatpush1.bf16.xpose.msra.mxu0 0
  %1677 = vmatprep.subr.bf16.mxu0 0
  %1678 = vmatpush1.bf16.xpose.msra.mxu0 0
  %1679 = vmatprep.subr.bf16.mxu0 0
  %1680 = vmatpush1.bf16.xpose.msra.mxu0 0
  %1681 = vmatprep.subr.bf16.mxu0 0
  %1682 = vmatpush1.bf16.xpose.msra.mxu0 0
  %1683 = vmatprep.subr.bf16.mxu0 0
  %1684 = vmatpush1.bf16.xpose.msra.mxu0 0
  %1685 = vmatprep.subr.bf16.mxu0 0
  %1686 = vmatpush1.bf16.xpose.msra.mxu0 0
  %1687 = vmatprep.subr.bf16.mxu0 0
  %1688 = vmatpush1.bf16.xpose.msra.mxu0 0
  %1689 = vmatprep.subr.bf16.mxu0 0
  %1690 = vmatpush1.bf16.xpose.msra.mxu0 0
  %1691 = vmatprep.subr.bf16.mxu0 0
  %1692 = vmatpush1.bf16.xpose.msra.mxu0 0
  %1693 = vmatprep.subr.bf16.mxu0 0
  %1694 = vmatpush1.bf16.xpose.msra.mxu0 0
  %1695 = vmatprep.subr.bf16.mxu0 0
  %1696 = vmatpush1.bf16.xpose.msra.mxu0 0
  %1697 = vmatprep.subr.bf16.mxu0 0
  %1698 = vmatpush1.bf16.xpose.msra.mxu0 0
  %1699 = vmatprep.subr.bf16.mxu0 0
  %1700 = vmatpush1.bf16.xpose.msra.mxu0 0
  %1701 = vmatprep.subr.bf16.mxu0 0
  %1702 = vmatpush1.bf16.xpose.msra.mxu0 0
  %1703 = vmatprep.subr.bf16.mxu0 0
  %1704 = vmatpush1.bf16.xpose.msra.mxu0 0
  %1705 = vmatprep.mubr.bf16.mxu0 0
  %1706 = vmatmul.mubr.bf16.gmra.mrb[0].mxu0 %v1668
  %v1707 = vpop.f32.mrb[0].mxu0
  %v1708 = vadd.f32 0.0, %v1707
  %v1709 = vpop.f32.mrb[0].mxu0
  %v1710 = vpop.f32.mrb[0].mxu0
  %v1711 = vadd.f32 0.0, %v1710
  %v1712 = vpop.f32.mrb[0].mxu0
  %1713 = vdwg.mxu0
  %v1714 = vmul.f32 %v1708, 0.35355338
  %v1715 = vmul.f32 %v1711, 0.35355338
  %v1716 = vadd.f32 %v1714, %v202
  %v1717 = vadd.f32 %v1715, %v203
  %v1718 = vsel %vm369, %v1716, -inf
  %1719 = vmax.xlane.f32.xlu0 %v1718
  %v1720 = vpop.xlane.xlu0 %1719
  %v1721 = vsel %vm369, %v1717, -inf
  %1722 = vmax.xlane.f32.xlu0 %v1721
  %v1723 = vpop.xlane.xlu0 %1722
  %v1724 = vsub.f32 %v1716, %v1720
  %v1725 = vsub.f32 %v1717, %v1723
  %v1726 = vmul.f32 %v1724, 1.442695
  %v1727 = vpow.pop %v1726
  %v1728 = vmul.f32 %v1725, 1.442695
  %v1729 = vpow.pop %v1728
  %v1730 = vsel %vm369, %v1727, 0.0
  %1731 = vadd.xlane.f32.xlu0 %v1730
  %v1732 = vpop.xlane.xlu0 %1731
  %v1733 = vsel %vm369, %v1729, 0.0
  %1734 = vadd.xlane.f32.xlu0 %v1733
  %v1735 = vpop.xlane.xlu0 %1734
  %v1736 = vrcp.pop %v1732
  %v1737 = vrcp.pop %v1735
  %v1738 = vmul.f32 %v1727, %v1736
  %v1739 = vmul.f32 %v1729, %v1737
  %v1740 = vpack.c.bf16 %v1739, %v1738
  %1741 = vrot.lane.b32.xlu0 %v1266, 40
  %v1742 = vpop.permute.xlu0 %1741
  %v1745 = vsel %vm369, %v1740, 0
  %1747 = vmatprep.subr.bf16.mxu0 0
  %1748 = vmatpush1.bf16.msra.mxu0 %v1742
  %1749 = vmatprep.subr.bf16.mxu0 0
  %1750 = vmatpush1.bf16.msra.mxu0 0
  %1751 = vmatprep.subr.bf16.mxu0 0
  %1752 = vmatpush1.bf16.msra.mxu0 0
  %1753 = vmatprep.subr.bf16.mxu0 0
  %1754 = vmatpush1.bf16.msra.mxu0 0
  %1755 = vmatprep.subr.bf16.mxu0 0
  %1756 = vmatpush1.bf16.msra.mxu0 0
  %1757 = vmatprep.subr.bf16.mxu0 0
  %1758 = vmatpush1.bf16.msra.mxu0 0
  %1759 = vmatprep.subr.bf16.mxu0 0
  %1760 = vmatpush1.bf16.msra.mxu0 0
  %1761 = vmatprep.subr.bf16.mxu0 0
  %1762 = vmatpush1.bf16.msra.mxu0 0
  %1763 = vmatprep.subr.bf16.mxu0 0
  %1764 = vmatpush1.bf16.msra.mxu0 0
  %1765 = vmatprep.subr.bf16.mxu0 0
  %1766 = vmatpush1.bf16.msra.mxu0 0
  %1767 = vmatprep.subr.bf16.mxu0 0
  %1768 = vmatpush1.bf16.msra.mxu0 0
  %1769 = vmatprep.subr.bf16.mxu0 0
  %1770 = vmatpush1.bf16.msra.mxu0 0
  %1771 = vmatprep.subr.bf16.mxu0 0
  %1772 = vmatpush1.bf16.msra.mxu0 0
  %1773 = vmatprep.subr.bf16.mxu0 0
  %1774 = vmatpush1.bf16.msra.mxu0 0
  %1775 = vmatprep.subr.bf16.mxu0 0
  %1776 = vmatpush1.bf16.msra.mxu0 0
  %1777 = vmatprep.subr.bf16.mxu0 0
  %1778 = vmatpush1.bf16.msra.mxu0 0
  %1779 = vmatprep.mubr.bf16.mxu0 0
  %1780 = vmatmul.mubr.bf16.gmra.mrb[0].mxu0 %v1745
  %v1781 = vpop.f32.mrb[0].mxu0
  %v1782 = vadd.f32 0.0, %v1781
  %v1783 = vpop.f32.mrb[0].mxu0
  %v1784 = vpop.f32.mrb[0].mxu0
  %v1785 = vadd.f32 0.0, %v1784
  %v1786 = vpop.f32.mrb[0].mxu0
  %1787 = vdwg.mxu0
  %1790 = vrot.lane.b32.xlu0 %v1782, 24
  %v1791 = vpop.permute.xlu0 %1790
  %1792 = vrot.lane.b32.xlu0 %v1785, 24
  %v1793 = vpop.permute.xlu0 %1792
  %1796 = vst.msk [vmem:[#allocation2] sm:$0xff] %vm847, %v1791
  %1797 = vst.msk [vmem:[#allocation2 + $0x8] sm:$0xff] %vm847, %v1793
  %v1798 = vld [vmem:[#allocation2] sm:$0xff]
  %v1799 = vld [vmem:[#allocation2 + $0x8] sm:$0xff]
  %v1800 = vpack.c.bf16 %v1799, %v1798
  %s1801 = scalar_lea.vmem %s7, 16
  %v1802 = vld [vmem:[%s1801] sm:$0xf]
  %v1803 = vld [vmem:[%s1801 + $0x4] sm:$0xf]
  %v1804 = vld [vmem:[%s1801 + $0x8] sm:$0xf]
  %v1805 = vld [vmem:[%s1801 + $0xc] sm:$0xf]
  %v1810 = vunpack.c.l.b16 %v1802
  %v1811 = vunpack.c.l.b16 %v1803
  %v1812 = vunpack.c.l.b16 %v1804
  %v1813 = vunpack.c.l.b16 %v1805
  %v1814 = vpack.c.b16 %v1811, %v1810
  %v1815 = vpack.c.b16 %v1813, %v1812
  %v1819 = vsel %vm205, %v1800, 0
  %1821 = vmatprep.subr.bf16.mxu0 0
  %1822 = vmatpush1.bf16.msra.mxu0 %v1814
  %1823 = vmatprep.subr.bf16.mxu0 0
  %1824 = vmatpush1.bf16.msra.mxu0 %v1815
  %1825 = vmatprep.subr.bf16.mxu0 0
  %1826 = vmatpush1.bf16.msra.mxu0 0
  %1827 = vmatprep.subr.bf16.mxu0 0
  %1828 = vmatpush1.bf16.msra.mxu0 0
  %1829 = vmatprep.subr.bf16.mxu0 0
  %1830 = vmatpush1.bf16.msra.mxu0 0
  %1831 = vmatprep.subr.bf16.mxu0 0
  %1832 = vmatpush1.bf16.msra.mxu0 0
  %1833 = vmatprep.subr.bf16.mxu0 0
  %1834 = vmatpush1.bf16.msra.mxu0 0
  %1835 = vmatprep.subr.bf16.mxu0 0
  %1836 = vmatpush1.bf16.msra.mxu0 0
  %1837 = vmatprep.subr.bf16.mxu0 0
  %1838 = vmatpush1.bf16.msra.mxu0 0
  %1839 = vmatprep.subr.bf16.mxu0 0
  %1840 = vmatpush1.bf16.msra.mxu0 0
  %1841 = vmatprep.subr.bf16.mxu0 0
  %1842 = vmatpush1.bf16.msra.mxu0 0
  %1843 = vmatprep.subr.bf16.mxu0 0
  %1844 = vmatpush1.bf16.msra.mxu0 0
  %1845 = vmatprep.subr.bf16.mxu0 0
  %1846 = vmatpush1.bf16.msra.mxu0 0
  %1847 = vmatprep.subr.bf16.mxu0 0
  %1848 = vmatpush1.bf16.msra.mxu0 0
  %1849 = vmatprep.subr.bf16.mxu0 0
  %1850 = vmatpush1.bf16.msra.mxu0 0
  %1851 = vmatprep.subr.bf16.mxu0 0
  %1852 = vmatpush1.bf16.msra.mxu0 0
  %1853 = vmatprep.mubr.bf16.mxu0 0
  %1854 = vmatmul.mubr.bf16.gmra.mrb[0].mxu0 %v1819
  %v1855 = vpop.f32.mrb[0].mxu0
  %v1856 = vadd.f32 0.0, %v1855
  %v1857 = vpop.f32.mrb[0].mxu0
  %v1858 = vpop.f32.mrb[0].mxu0
  %v1859 = vadd.f32 0.0, %v1858
  %v1860 = vpop.f32.mrb[0].mxu0
  %1861 = vdwg.mxu0
  %v1862 = vadd.f32 %v1154, %v1856
  %v1863 = vadd.f32 %v1155, %v1859
  %s1864 = scalar_lea.vmem %s8, 1
  %v1865 = vld [vmem:[%s1864] sm:$0x1]
  %v1867 = vlaneseq
  %v1868 = vshrl.u32 %v1867, 7
  %v1869 = vsub.s32 0, %v1868
  %v1870 = vrot.slane %v1865, %v1869
  %v1872 = vadd.f32 %v1862, %v1870
  %v1873 = vadd.f32 %v1863, %v1870
  %s1874 = scalar_lea.vmem %s9, 2
  %v1875 = vld [vmem:[%s1874] sm:$0x3]
  %v1876 = vsel %vm205, %v1872, 0.0
  %1877 = vadd.xlane.f32.xlu0 %v1876
  %v1878 = vpop.xlane.xlu0 %1877
  %v1879 = vsel %vm205, %v1873, 0.0
  %1880 = vadd.xlane.f32.xlu0 %v1879
  %v1881 = vpop.xlane.xlu0 %1880
  %v1882 = vmul.f32 %v1878, %v212
  %v1883 = vmul.f32 %v1881, %v212
  %v1884 = vsub.f32 %v1872, %v1882
  %v1885 = vsub.f32 %v1873, %v1883
  %v1886 = vmul.f32 %v1884, %v1884
  %v1887 = vmul.f32 %v1885, %v1885
  %v1888 = vsel %vm205, %v1886, 0.0
  %1889 = vadd.xlane.f32.xlu0 %v1888
  %v1890 = vpop.xlane.xlu0 %1889
  %v1891 = vsel %vm205, %v1887, 0.0
  %1892 = vadd.xlane.f32.xlu0 %v1891
  %v1893 = vpop.xlane.xlu0 %1892
  %v1894 = vmul.f32 %v1890, %v212
  %v1895 = vmul.f32 %v1893, %v212
  %v1896 = vadd.f32 %v1894, 1e-06
  %v1897 = vadd.f32 %v1895, 1e-06
  %v1898 = vrsqrt.pop %v1896
  %v1899 = vrsqrt.pop %v1897
  %v1900 = vmul.f32 %v1884, %v1898
  %v1901 = vmul.f32 %v1885, %v1899
  %v1902 = vlaneseq
  %v1903 = vshrl.u32 %v1902, 7
  %v1904 = vsub.s32 0, %v1903
  %v1905 = vrot.slane %v1875, %v1904
  %v1906 = vmul.f32 %v1900, %v1905
  %v1907 = vmul.f32 %v1901, %v1905
  %v1908 = vlaneseq
  %v1909 = vshrl.u32 %v1908, 7
  %v1910 = vsub.s32 1, %v1909
  %v1911 = vrot.slane %v1875, %v1910
  %v1912 = vadd.f32 %v1906, %v1911
  %v1913 = vadd.f32 %v1907, %v1911
  %v1914 = vpack.c.bf16 %v1913, %v1912
  %s1915 = scalar_lea.vmem %s10, 16
  %v1916 = vld [vmem:[%s1915] sm:$0xf]
  %v1917 = vld [vmem:[%s1915 + $0x4] sm:$0xf]
  %v1918 = vld [vmem:[%s1915 + $0x8] sm:$0xf]
  %v1919 = vld [vmem:[%s1915 + $0xc] sm:$0xf]
  %s1920 = scalar_lea.vmem %s11, 1
  %v1921 = vld [vmem:[%s1920] sm:$0x1]
  %v1923 = vlaneseq
  %v1924 = vshrl.u32 %v1923, 7
  %v1925 = vsub.s32 0, %v1924
  %v1926 = vrot.slane %v1921, %v1925
  %v1932 = vunpack.c.l.b16 %v1916
  %v1933 = vunpack.c.l.b16 %v1917
  %v1934 = vunpack.c.l.b16 %v1918
  %v1935 = vunpack.c.l.b16 %v1919
  %v1936 = vpack.c.b16 %v1933, %v1932
  %v1937 = vpack.c.b16 %v1935, %v1934
  %v1941 = vsel %vm205, %v1914, 0
  %1943 = vmatprep.subr.bf16.mxu0 0
  %1944 = vmatpush1.bf16.msra.mxu0 %v1936
  %1945 = vmatprep.subr.bf16.mxu0 0
  %1946 = vmatpush1.bf16.msra.mxu0 %v1937
  %1947 = vmatprep.subr.bf16.mxu0 0
  %1948 = vmatpush1.bf16.msra.mxu0 0
  %1949 = vmatprep.subr.bf16.mxu0 0
  %1950 = vmatpush1.bf16.msra.mxu0 0
  %1951 = vmatprep.subr.bf16.mxu0 0
  %1952 = vmatpush1.bf16.msra.mxu0 0
  %1953 = vmatprep.subr.bf16.mxu0 0
  %1954 = vmatpush1.bf16.msra.mxu0 0
  %1955 = vmatprep.subr.bf16.mxu0 0
  %1956 = vmatpush1.bf16.msra.mxu0 0
  %1957 = vmatprep.subr.bf16.mxu0 0
  %1958 = vmatpush1.bf16.msra.mxu0 0
  %1959 = vmatprep.subr.bf16.mxu0 0
  %1960 = vmatpush1.bf16.msra.mxu0 0
  %1961 = vmatprep.subr.bf16.mxu0 0
  %1962 = vmatpush1.bf16.msra.mxu0 0
  %1963 = vmatprep.subr.bf16.mxu0 0
  %1964 = vmatpush1.bf16.msra.mxu0 0
  %1965 = vmatprep.subr.bf16.mxu0 0
  %1966 = vmatpush1.bf16.msra.mxu0 0
  %1967 = vmatprep.subr.bf16.mxu0 0
  %1968 = vmatpush1.bf16.msra.mxu0 0
  %1969 = vmatprep.subr.bf16.mxu0 0
  %1970 = vmatpush1.bf16.msra.mxu0 0
  %1971 = vmatprep.subr.bf16.mxu0 0
  %1972 = vmatpush1.bf16.msra.mxu0 0
  %1973 = vmatprep.subr.bf16.mxu0 0
  %1974 = vmatpush1.bf16.msra.mxu0 0
  %1975 = vmatprep.mubr.bf16.mxu0 0
  %1976 = vmatmul.mubr.bf16.gmra.mrb[0].mxu0 %v1941
  %v1977 = vpop.f32.mrb[0].mxu0
  %v1978 = vadd.f32 %v1926, %v1977
  %v1979 = vpop.f32.mrb[0].mxu0
  %v1980 = vpop.f32.mrb[0].mxu0
  %v1981 = vadd.f32 %v1926, %v1980
  %v1982 = vpop.f32.mrb[0].mxu0
  %1983 = vdwg.mxu0
  %v1984 = vmul.f32 %v1978, 0.5
  %v1985 = vmul.f32 %v1981, 0.5
  %v1986 = vmul.f32 %v1978, 0.70710677
  %v1987 = vmul.f32 %v1981, 0.70710677
  %v1988 = verf.f32.pop %v1986
  %v1989 = verf.f32.pop %v1987
  %v1990 = vadd.f32 %v1988, 1.0
  %v1991 = vadd.f32 %v1989, 1.0
  %v1992 = vmul.f32 %v1984, %v1990
  %v1993 = vmul.f32 %v1985, %v1991
  %v1994 = vpack.c.bf16 %v1993, %v1992
  %s1995 = scalar_lea.vmem %s12, 64
  %v1996 = vld [vmem:[%s1995] sm:$0xf]
  %v1997 = vld [vmem:[%s1995 + $0x4] sm:$0xf]
  %v1998 = vld [vmem:[%s1995 + $0x8] sm:$0xf]
  %v1999 = vld [vmem:[%s1995 + $0xc] sm:$0xf]
  %v2000 = vld [vmem:[%s1995 + $0x10] sm:$0xf]
  %v2001 = vld [vmem:[%s1995 + $0x14] sm:$0xf]
  %v2002 = vld [vmem:[%s1995 + $0x18] sm:$0xf]
  %v2003 = vld [vmem:[%s1995 + $0x1c] sm:$0xf]
  %v2004 = vld [vmem:[%s1995 + $0x20] sm:$0xf]
  %v2005 = vld [vmem:[%s1995 + $0x24] sm:$0xf]
  %v2006 = vld [vmem:[%s1995 + $0x28] sm:$0xf]
  %v2007 = vld [vmem:[%s1995 + $0x2c] sm:$0xf]
  %v2008 = vld [vmem:[%s1995 + $0x30] sm:$0xf]
  %v2009 = vld [vmem:[%s1995 + $0x34] sm:$0xf]
  %v2010 = vld [vmem:[%s1995 + $0x38] sm:$0xf]
  %v2011 = vld [vmem:[%s1995 + $0x3c] sm:$0xf]
  %s2012 = scalar_lea.vmem %s13, 1
  %v2013 = vld [vmem:[%s2012] sm:$0x1]
  %v2015 = vlaneseq
  %v2016 = vshrl.u32 %v2015, 7
  %v2017 = vsub.s32 0, %v2016
  %v2018 = vrot.slane %v2013, %v2017
  %v2036 = vunpack.c.l.b16 %v1996
  %v2037 = vunpack.c.l.b16 %v1997
  %v2038 = vunpack.c.l.b16 %v1998
  %v2039 = vunpack.c.l.b16 %v1999
  %v2040 = vunpack.c.l.b16 %v2000
  %v2041 = vunpack.c.l.b16 %v2001
  %v2042 = vunpack.c.l.b16 %v2002
  %v2043 = vunpack.c.l.b16 %v2003
  %v2044 = vunpack.c.l.b16 %v2004
  %v2045 = vunpack.c.l.b16 %v2005
  %v2046 = vunpack.c.l.b16 %v2006
  %v2047 = vunpack.c.l.b16 %v2007
  %v2048 = vunpack.c.l.b16 %v2008
  %v2049 = vunpack.c.l.b16 %v2009
  %v2050 = vunpack.c.l.b16 %v2010
  %v2051 = vunpack.c.l.b16 %v2011
  %v2052 = vpack.c.b16 %v2037, %v2036
  %v2053 = vpack.c.b16 %v2039, %v2038
  %v2054 = vpack.c.b16 %v2041, %v2040
  %v2055 = vpack.c.b16 %v2043, %v2042
  %v2056 = vpack.c.b16 %v2045, %v2044
  %v2057 = vpack.c.b16 %v2047, %v2046
  %v2058 = vpack.c.b16 %v2049, %v2048
  %v2059 = vpack.c.b16 %v2051, %v2050
  %2068 = vmatprep.subr.bf16.mxu0 0
  %2069 = vmatpush1.bf16.msra.mxu0 %v2052
  %2070 = vmatprep.subr.bf16.mxu0 0
  %2071 = vmatpush1.bf16.msra.mxu0 %v2053
  %2072 = vmatprep.subr.bf16.mxu0 0
  %2073 = vmatpush1.bf16.msra.mxu0 %v2054
  %2074 = vmatprep.subr.bf16.mxu0 0
  %2075 = vmatpush1.bf16.msra.mxu0 %v2055
  %2076 = vmatprep.subr.bf16.mxu0 0
  %2077 = vmatpush1.bf16.msra.mxu0 %v2056
  %2078 = vmatprep.subr.bf16.mxu0 0
  %2079 = vmatpush1.bf16.msra.mxu0 %v2057
  %2080 = vmatprep.subr.bf16.mxu0 0
  %2081 = vmatpush1.bf16.msra.mxu0 %v2058
  %2082 = vmatprep.subr.bf16.mxu0 0
  %2083 = vmatpush1.bf16.msra.mxu0 %v2059
  %2084 = vmatprep.subr.bf16.mxu0 0
  %2085 = vmatpush1.bf16.msra.mxu0 0
  %2086 = vmatprep.subr.bf16.mxu0 0
  %2087 = vmatpush1.bf16.msra.mxu0 0
  %2088 = vmatprep.subr.bf16.mxu0 0
  %2089 = vmatpush1.bf16.msra.mxu0 0
  %2090 = vmatprep.subr.bf16.mxu0 0
  %2091 = vmatpush1.bf16.msra.mxu0 0
  %2092 = vmatprep.subr.bf16.mxu0 0
  %2093 = vmatpush1.bf16.msra.mxu0 0
  %2094 = vmatprep.subr.bf16.mxu0 0
  %2095 = vmatpush1.bf16.msra.mxu0 0
  %2096 = vmatprep.subr.bf16.mxu0 0
  %2097 = vmatpush1.bf16.msra.mxu0 0
  %2098 = vmatprep.subr.bf16.mxu0 0
  %2099 = vmatpush1.bf16.msra.mxu0 0
  %2100 = vmatprep.mubr.bf16.mxu0 0
  %2101 = vmatmul.mubr.bf16.gmra.mrb[0].mxu0 %v1994
  %v2102 = vpop.f32.mrb[0].mxu0
  %v2103 = vadd.f32 %v2018, %v2102
  %v2104 = vpop.f32.mrb[0].mxu0
  %v2105 = vpop.f32.mrb[0].mxu0
  %v2106 = vadd.f32 %v2018, %v2105
  %v2107 = vpop.f32.mrb[0].mxu0
  %2108 = vdwg.mxu0
  %v2109 = vadd.f32 %v1872, %v2103
  %v2110 = vadd.f32 %v1873, %v2106
  %s2111 = scalar_lea.vmem %s4, 4
  %v2112 = vld [vmem:[%s2111] sm:$0x3]
  %v2113 = vsel %vm205, %v2109, 0.0
  %2114 = vadd.xlane.f32.xlu0 %v2113
  %v2115 = vpop.xlane.xlu0 %2114
  %v2116 = vsel %vm205, %v2110, 0.0
  %2117 = vadd.xlane.f32.xlu0 %v2116
  %v2118 = vpop.xlane.xlu0 %2117
  %v2119 = vmul.f32 %v2115, %v212
  %v2120 = vmul.f32 %v2118, %v212
  %v2121 = vsub.f32 %v2109, %v2119
  %v2122 = vsub.f32 %v2110, %v2120
  %v2123 = vmul.f32 %v2121, %v2121
  %v2124 = vmul.f32 %v2122, %v2122
  %v2125 = vsel %vm205, %v2123, 0.0
  %2126 = vadd.xlane.f32.xlu0 %v2125
  %v2127 = vpop.xlane.xlu0 %2126
  %v2128 = vsel %vm205, %v2124, 0.0
  %2129 = vadd.xlane.f32.xlu0 %v2128
  %v2130 = vpop.xlane.xlu0 %2129
  %v2131 = vmul.f32 %v2127, %v212
  %v2132 = vmul.f32 %v2130, %v212
  %v2133 = vadd.f32 %v2131, 1e-06
  %v2134 = vadd.f32 %v2132, 1e-06
  %v2135 = vrsqrt.pop %v2133
  %v2136 = vrsqrt.pop %v2134
  %v2137 = vmul.f32 %v2121, %v2135
  %v2138 = vmul.f32 %v2122, %v2136
  %v2139 = vlaneseq
  %v2140 = vshrl.u32 %v2139, 7
  %v2141 = vsub.s32 0, %v2140
  %v2142 = vrot.slane %v2112, %v2141
  %v2143 = vmul.f32 %v2137, %v2142
  %v2144 = vmul.f32 %v2138, %v2142
  %v2145 = vlaneseq
  %v2146 = vshrl.u32 %v2145, 7
  %v2147 = vsub.s32 1, %v2146
  %v2148 = vrot.slane %v2112, %v2147
  %v2149 = vadd.f32 %v2143, %v2148
  %v2150 = vadd.f32 %v2144, %v2148
  %v2151 = vpack.c.bf16 %v2150, %v2149
  %s2152 = scalar_lea.vmem %s5, 32
  %v2153 = vld [vmem:[%s2152] sm:$0xf]
  %v2154 = vld [vmem:[%s2152 + $0x4] sm:$0xf]
  %v2155 = vld [vmem:[%s2152 + $0x8] sm:$0xf]
  %v2156 = vld [vmem:[%s2152 + $0xc] sm:$0xf]
  %s2157 = scalar_lea.vmem %s6, 2
  %v2158 = vld [vmem:[%s2157] sm:$0x1]
  %v2160 = vlaneseq
  %v2161 = vshrl.u32 %v2160, 7
  %v2162 = vsub.s32 0, %v2161
  %v2163 = vrot.slane %v2158, %v2162
  %v2169 = vunpack.c.l.b16 %v2153
  %v2170 = vunpack.c.l.b16 %v2154
  %v2171 = vunpack.c.l.b16 %v2155
  %v2172 = vunpack.c.l.b16 %v2156
  %v2173 = vpack.c.b16 %v2170, %v2169
  %v2174 = vpack.c.b16 %v2172, %v2171
  %v2178 = vsel %vm205, %v2151, 0
  %2180 = vmatprep.subr.bf16.mxu0 0
  %2181 = vmatpush1.bf16.msra.mxu0 %v2173
  %2182 = vmatprep.subr.bf16.mxu0 0
  %2183 = vmatpush1.bf16.msra.mxu0 %v2174
  %2184 = vmatprep.subr.bf16.mxu0 0
  %2185 = vmatpush1.bf16.msra.mxu0 0
  %2186 = vmatprep.subr.bf16.mxu0 0
  %2187 = vmatpush1.bf16.msra.mxu0 0
  %2188 = vmatprep.subr.bf16.mxu0 0
  %2189 = vmatpush1.bf16.msra.mxu0 0
  %2190 = vmatprep.subr.bf16.mxu0 0
  %2191 = vmatpush1.bf16.msra.mxu0 0
  %2192 = vmatprep.subr.bf16.mxu0 0
  %2193 = vmatpush1.bf16.msra.mxu0 0
  %2194 = vmatprep.subr.bf16.mxu0 0
  %2195 = vmatpush1.bf16.msra.mxu0 0
  %2196 = vmatprep.subr.bf16.mxu0 0
  %2197 = vmatpush1.bf16.msra.mxu0 0
  %2198 = vmatprep.subr.bf16.mxu0 0
  %2199 = vmatpush1.bf16.msra.mxu0 0
  %2200 = vmatprep.subr.bf16.mxu0 0
  %2201 = vmatpush1.bf16.msra.mxu0 0
  %2202 = vmatprep.subr.bf16.mxu0 0
  %2203 = vmatpush1.bf16.msra.mxu0 0
  %2204 = vmatprep.subr.bf16.mxu0 0
  %2205 = vmatpush1.bf16.msra.mxu0 0
  %2206 = vmatprep.subr.bf16.mxu0 0
  %2207 = vmatpush1.bf16.msra.mxu0 0
  %2208 = vmatprep.subr.bf16.mxu0 0
  %2209 = vmatpush1.bf16.msra.mxu0 0
  %2210 = vmatprep.subr.bf16.mxu0 0
  %2211 = vmatpush1.bf16.msra.mxu0 0
  %2212 = vmatprep.mubr.bf16.mxu0 0
  %2213 = vmatmul.mubr.bf16.gmra.mrb[0].mxu0 %v2178
  %v2214 = vpop.f32.mrb[0].mxu0
  %v2215 = vadd.f32 %v2163, %v2214
  %v2216 = vpop.f32.mrb[0].mxu0
  %v2217 = vpop.f32.mrb[0].mxu0
  %v2218 = vadd.f32 %v2163, %v2217
  %v2219 = vpop.f32.mrb[0].mxu0
  %2220 = vdwg.mxu0
  %v2221 = vpack.c.bf16 %v2218, %v2215
  %2223 = vrot.lane.b32.xlu0 %v2221, 96
  %v2224 = vpop.permute.xlu0 %2223
  %v2226 = vsel %vm317, %v2221, 0
  %v2229 = vsel %vm317, %v2224, 0
  %2231 = vmatprep.subr.bf16.mxu0 0
  %2232 = vmatpush1.bf16.xpose.msra.mxu0 %v2229
  %2233 = vmatprep.subr.bf16.mxu0 0
  %2234 = vmatpush1.bf16.xpose.msra.mxu0 0
  %2235 = vmatprep.subr.bf16.mxu0 0
  %2236 = vmatpush1.bf16.xpose.msra.mxu0 0
  %2237 = vmatprep.subr.bf16.mxu0 0
  %2238 = vmatpush1.bf16.xpose.msra.mxu0 0
  %2239 = vmatprep.subr.bf16.mxu0 0
  %2240 = vmatpush1.bf16.xpose.msra.mxu0 0
  %2241 = vmatprep.subr.bf16.mxu0 0
  %2242 = vmatpush1.bf16.xpose.msra.mxu0 0
  %2243 = vmatprep.subr.bf16.mxu0 0
  %2244 = vmatpush1.bf16.xpose.msra.mxu0 0
  %2245 = vmatprep.subr.bf16.mxu0 0
  %2246 = vmatpush1.bf16.xpose.msra.mxu0 0
  %2247 = vmatprep.subr.bf16.mxu0 0
  %2248 = vmatpush1.bf16.xpose.msra.mxu0 0
  %2249 = vmatprep.subr.bf16.mxu0 0
  %2250 = vmatpush1.bf16.xpose.msra.mxu0 0
  %2251 = vmatprep.subr.bf16.mxu0 0
  %2252 = vmatpush1.bf16.xpose.msra.mxu0 0
  %2253 = vmatprep.subr.bf16.mxu0 0
  %2254 = vmatpush1.bf16.xpose.msra.mxu0 0
  %2255 = vmatprep.subr.bf16.mxu0 0
  %2256 = vmatpush1.bf16.xpose.msra.mxu0 0
  %2257 = vmatprep.subr.bf16.mxu0 0
  %2258 = vmatpush1.bf16.xpose.msra.mxu0 0
  %2259 = vmatprep.subr.bf16.mxu0 0
  %2260 = vmatpush1.bf16.xpose.msra.mxu0 0
  %2261 = vmatprep.subr.bf16.mxu0 0
  %2262 = vmatpush1.bf16.xpose.msra.mxu0 0
  %2263 = vmatprep.mubr.bf16.mxu0 0
  %2264 = vmatmul.mubr.bf16.gmra.mrb[0].mxu0 %v2226
  %v2265 = vpop.f32.mrb[0].mxu0
  %v2266 = vadd.f32 0.0, %v2265
  %v2267 = vpop.f32.mrb[0].mxu0
  %v2268 = vpop.f32.mrb[0].mxu0
  %v2269 = vadd.f32 0.0, %v2268
  %v2270 = vpop.f32.mrb[0].mxu0
  %2271 = vdwg.mxu0
  %v2272 = vmul.f32 %v2266, 0.35355338
  %v2273 = vmul.f32 %v2269, 0.35355338
  %v2274 = vadd.f32 %v2272, %v202
  %v2275 = vadd.f32 %v2273, %v203
  %v2276 = vsel %vm369, %v2274, -inf
  %2277 = vmax.xlane.f32.xlu0 %v2276
  %v2278 = vpop.xlane.xlu0 %2277
  %v2279 = vsel %vm369, %v2275, -inf
  %2280 = vmax.xlane.f32.xlu0 %v2279
  %v2281 = vpop.xlane.xlu0 %2280
  %v2282 = vsub.f32 %v2274, %v2278
  %v2283 = vsub.f32 %v2275, %v2281
  %v2284 = vmul.f32 %v2282, 1.442695
  %v2285 = vpow.pop %v2284
  %v2286 = vmul.f32 %v2283, 1.442695
  %v2287 = vpow.pop %v2286
  %v2288 = vsel %vm369, %v2285, 0.0
  %2289 = vadd.xlane.f32.xlu0 %v2288
  %v2290 = vpop.xlane.xlu0 %2289
  %v2291 = vsel %vm369, %v2287, 0.0
  %2292 = vadd.xlane.f32.xlu0 %v2291
  %v2293 = vpop.xlane.xlu0 %2292
  %v2294 = vrcp.pop %v2290
  %v2295 = vrcp.pop %v2293
  %v2296 = vmul.f32 %v2285, %v2294
  %v2297 = vmul.f32 %v2287, %v2295
  %v2298 = vpack.c.bf16 %v2297, %v2296
  %2299 = vrot.lane.b32.xlu0 %v2221, 64
  %v2300 = vpop.permute.xlu0 %2299
  %v2303 = vsel %vm369, %v2298, 0
  %2305 = vmatprep.subr.bf16.mxu0 0
  %2306 = vmatpush1.bf16.msra.mxu0 %v2300
  %2307 = vmatprep.subr.bf16.mxu0 0
  %2308 = vmatpush1.bf16.msra.mxu0 0
  %2309 = vmatprep.subr.bf16.mxu0 0
  %2310 = vmatpush1.bf16.msra.mxu0 0
  %2311 = vmatprep.subr.bf16.mxu0 0
  %2312 = vmatpush1.bf16.msra.mxu0 0
  %2313 = vmatprep.subr.bf16.mxu0 0
  %2314 = vmatpush1.bf16.msra.mxu0 0
  %2315 = vmatprep.subr.bf16.mxu0 0
  %2316 = vmatpush1.bf16.msra.mxu0 0
  %2317 = vmatprep.subr.bf16.mxu0 0
  %2318 = vmatpush1.bf16.msra.mxu0 0
  %2319 = vmatprep.subr.bf16.mxu0 0
  %2320 = vmatpush1.bf16.msra.mxu0 0
  %2321 = vmatprep.subr.bf16.mxu0 0
  %2322 = vmatpush1.bf16.msra.mxu0 0
  %2323 = vmatprep.subr.bf16.mxu0 0
  %2324 = vmatpush1.bf16.msra.mxu0 0
  %2325 = vmatprep.subr.bf16.mxu0 0
  %2326 = vmatpush1.bf16.msra.mxu0 0
  %2327 = vmatprep.subr.bf16.mxu0 0
  %2328 = vmatpush1.bf16.msra.mxu0 0
  %2329 = vmatprep.subr.bf16.mxu0 0
  %2330 = vmatpush1.bf16.msra.mxu0 0
  %2331 = vmatprep.subr.bf16.mxu0 0
  %2332 = vmatpush1.bf16.msra.mxu0 0
  %2333 = vmatprep.subr.bf16.mxu0 0
  %2334 = vmatpush1.bf16.msra.mxu0 0
  %2335 = vmatprep.subr.bf16.mxu0 0
  %2336 = vmatpush1.bf16.msra.mxu0 0
  %2337 = vmatprep.mubr.bf16.mxu0 0
  %2338 = vmatmul.mubr.bf16.gmra.mrb[0].mxu0 %v2303
  %v2339 = vpop.f32.mrb[0].mxu0
  %v2340 = vadd.f32 0.0, %v2339
  %v2341 = vpop.f32.mrb[0].mxu0
  %v2342 = vpop.f32.mrb[0].mxu0
  %v2343 = vadd.f32 0.0, %v2342
  %v2344 = vpop.f32.mrb[0].mxu0
  %2345 = vdwg.mxu0
  %2346 = vst.msk [vmem:[#allocation2] sm:$0xff] %vm317, %v2340
  %2347 = vst.msk [vmem:[#allocation2 + $0x8] sm:$0xff] %vm317, %v2343
  %2348 = vrot.lane.b32.xlu0 %v2221, 120
  %v2349 = vpop.permute.xlu0 %2348
  %2350 = vrot.lane.b32.xlu0 %v2221, 88
  %v2351 = vpop.permute.xlu0 %2350
  %v2353 = vsel %vm317, %v2349, 0
  %v2356 = vsel %vm317, %v2351, 0
  %2358 = vmatprep.subr.bf16.mxu0 0
  %2359 = vmatpush1.bf16.xpose.msra.mxu0 %v2356
  %2360 = vmatprep.subr.bf16.mxu0 0
  %2361 = vmatpush1.bf16.xpose.msra.mxu0 0
  %2362 = vmatprep.subr.bf16.mxu0 0
  %2363 = vmatpush1.bf16.xpose.msra.mxu0 0
  %2364 = vmatprep.subr.bf16.mxu0 0
  %2365 = vmatpush1.bf16.xpose.msra.mxu0 0
  %2366 = vmatprep.subr.bf16.mxu0 0
  %2367 = vmatpush1.bf16.xpose.msra.mxu0 0
  %2368 = vmatprep.subr.bf16.mxu0 0
  %2369 = vmatpush1.bf16.xpose.msra.mxu0 0
  %2370 = vmatprep.subr.bf16.mxu0 0
  %2371 = vmatpush1.bf16.xpose.msra.mxu0 0
  %2372 = vmatprep.subr.bf16.mxu0 0
  %2373 = vmatpush1.bf16.xpose.msra.mxu0 0
  %2374 = vmatprep.subr.bf16.mxu0 0
  %2375 = vmatpush1.bf16.xpose.msra.mxu0 0
  %2376 = vmatprep.subr.bf16.mxu0 0
  %2377 = vmatpush1.bf16.xpose.msra.mxu0 0
  %2378 = vmatprep.subr.bf16.mxu0 0
  %2379 = vmatpush1.bf16.xpose.msra.mxu0 0
  %2380 = vmatprep.subr.bf16.mxu0 0
  %2381 = vmatpush1.bf16.xpose.msra.mxu0 0
  %2382 = vmatprep.subr.bf16.mxu0 0
  %2383 = vmatpush1.bf16.xpose.msra.mxu0 0
  %2384 = vmatprep.subr.bf16.mxu0 0
  %2385 = vmatpush1.bf16.xpose.msra.mxu0 0
  %2386 = vmatprep.subr.bf16.mxu0 0
  %2387 = vmatpush1.bf16.xpose.msra.mxu0 0
  %2388 = vmatprep.subr.bf16.mxu0 0
  %2389 = vmatpush1.bf16.xpose.msra.mxu0 0
  %2390 = vmatprep.mubr.bf16.mxu0 0
  %2391 = vmatmul.mubr.bf16.gmra.mrb[0].mxu0 %v2353
  %v2392 = vpop.f32.mrb[0].mxu0
  %v2393 = vadd.f32 0.0, %v2392
  %v2394 = vpop.f32.mrb[0].mxu0
  %v2395 = vpop.f32.mrb[0].mxu0
  %v2396 = vadd.f32 0.0, %v2395
  %v2397 = vpop.f32.mrb[0].mxu0
  %2398 = vdwg.mxu0
  %v2399 = vmul.f32 %v2393, 0.35355338
  %v2400 = vmul.f32 %v2396, 0.35355338
  %v2401 = vadd.f32 %v2399, %v202
  %v2402 = vadd.f32 %v2400, %v203
  %v2403 = vsel %vm369, %v2401, -inf
  %2404 = vmax.xlane.f32.xlu0 %v2403
  %v2405 = vpop.xlane.xlu0 %2404
  %v2406 = vsel %vm369, %v2402, -inf
  %2407 = vmax.xlane.f32.xlu0 %v2406
  %v2408 = vpop.xlane.xlu0 %2407
  %v2409 = vsub.f32 %v2401, %v2405
  %v2410 = vsub.f32 %v2402, %v2408
  %v2411 = vmul.f32 %v2409, 1.442695
  %v2412 = vpow.pop %v2411
  %v2413 = vmul.f32 %v2410, 1.442695
  %v2414 = vpow.pop %v2413
  %v2415 = vsel %vm369, %v2412, 0.0
  %2416 = vadd.xlane.f32.xlu0 %v2415
  %v2417 = vpop.xlane.xlu0 %2416
  %v2418 = vsel %vm369, %v2414, 0.0
  %2419 = vadd.xlane.f32.xlu0 %v2418
  %v2420 = vpop.xlane.xlu0 %2419
  %v2421 = vrcp.pop %v2417
  %v2422 = vrcp.pop %v2420
  %v2423 = vmul.f32 %v2412, %v2421
  %v2424 = vmul.f32 %v2414, %v2422
  %v2425 = vpack.c.bf16 %v2424, %v2423
  %2426 = vrot.lane.b32.xlu0 %v2221, 56
  %v2427 = vpop.permute.xlu0 %2426
  %v2430 = vsel %vm369, %v2425, 0
  %2432 = vmatprep.subr.bf16.mxu0 0
  %2433 = vmatpush1.bf16.msra.mxu0 %v2427
  %2434 = vmatprep.subr.bf16.mxu0 0
  %2435 = vmatpush1.bf16.msra.mxu0 0
  %2436 = vmatprep.subr.bf16.mxu0 0
  %2437 = vmatpush1.bf16.msra.mxu0 0
  %2438 = vmatprep.subr.bf16.mxu0 0
  %2439 = vmatpush1.bf16.msra.mxu0 0
  %2440 = vmatprep.subr.bf16.mxu0 0
  %2441 = vmatpush1.bf16.msra.mxu0 0
  %2442 = vmatprep.subr.bf16.mxu0 0
  %2443 = vmatpush1.bf16.msra.mxu0 0
  %2444 = vmatprep.subr.bf16.mxu0 0
  %2445 = vmatpush1.bf16.msra.mxu0 0
  %2446 = vmatprep.subr.bf16.mxu0 0
  %2447 = vmatpush1.bf16.msra.mxu0 0
  %2448 = vmatprep.subr.bf16.mxu0 0
  %2449 = vmatpush1.bf16.msra.mxu0 0
  %2450 = vmatprep.subr.bf16.mxu0 0
  %2451 = vmatpush1.bf16.msra.mxu0 0
  %2452 = vmatprep.subr.bf16.mxu0 0
  %2453 = vmatpush1.bf16.msra.mxu0 0
  %2454 = vmatprep.subr.bf16.mxu0 0
  %2455 = vmatpush1.bf16.msra.mxu0 0
  %2456 = vmatprep.subr.bf16.mxu0 0
  %2457 = vmatpush1.bf16.msra.mxu0 0
  %2458 = vmatprep.subr.bf16.mxu0 0
  %2459 = vmatpush1.bf16.msra.mxu0 0
  %2460 = vmatprep.subr.bf16.mxu0 0
  %2461 = vmatpush1.bf16.msra.mxu0 0
  %2462 = vmatprep.subr.bf16.mxu0 0
  %2463 = vmatpush1.bf16.msra.mxu0 0
  %2464 = vmatprep.mubr.bf16.mxu0 0
  %2465 = vmatmul.mubr.bf16.gmra.mrb[0].mxu0 %v2430
  %v2466 = vpop.f32.mrb[0].mxu0
  %v2467 = vadd.f32 0.0, %v2466
  %v2468 = vpop.f32.mrb[0].mxu0
  %v2469 = vpop.f32.mrb[0].mxu0
  %v2470 = vadd.f32 0.0, %v2469
  %v2471 = vpop.f32.mrb[0].mxu0
  %2472 = vdwg.mxu0
  %2475 = vrot.lane.b32.xlu0 %v2467, 8
  %v2476 = vpop.permute.xlu0 %2475
  %2477 = vrot.lane.b32.xlu0 %v2470, 8
  %v2478 = vpop.permute.xlu0 %2477
  %2481 = vst.msk [vmem:[#allocation2] sm:$0xff] %vm575, %v2476
  %2482 = vst.msk [vmem:[#allocation2 + $0x8] sm:$0xff] %vm575, %v2478
  %2483 = vrot.lane.b32.xlu0 %v2221, 112
  %v2484 = vpop.permute.xlu0 %2483
  %2485 = vrot.lane.b32.xlu0 %v2221, 80
  %v2486 = vpop.permute.xlu0 %2485
  %v2488 = vsel %vm317, %v2484, 0
  %v2491 = vsel %vm317, %v2486, 0
  %2493 = vmatprep.subr.bf16.mxu0 0
  %2494 = vmatpush1.bf16.xpose.msra.mxu0 %v2491
  %2495 = vmatprep.subr.bf16.mxu0 0
  %2496 = vmatpush1.bf16.xpose.msra.mxu0 0
  %2497 = vmatprep.subr.bf16.mxu0 0
  %2498 = vmatpush1.bf16.xpose.msra.mxu0 0
  %2499 = vmatprep.subr.bf16.mxu0 0
  %2500 = vmatpush1.bf16.xpose.msra.mxu0 0
  %2501 = vmatprep.subr.bf16.mxu0 0
  %2502 = vmatpush1.bf16.xpose.msra.mxu0 0
  %2503 = vmatprep.subr.bf16.mxu0 0
  %2504 = vmatpush1.bf16.xpose.msra.mxu0 0
  %2505 = vmatprep.subr.bf16.mxu0 0
  %2506 = vmatpush1.bf16.xpose.msra.mxu0 0
  %2507 = vmatprep.subr.bf16.mxu0 0
  %2508 = vmatpush1.bf16.xpose.msra.mxu0 0
  %2509 = vmatprep.subr.bf16.mxu0 0
  %2510 = vmatpush1.bf16.xpose.msra.mxu0 0
  %2511 = vmatprep.subr.bf16.mxu0 0
  %2512 = vmatpush1.bf16.xpose.msra.mxu0 0
  %2513 = vmatprep.subr.bf16.mxu0 0
  %2514 = vmatpush1.bf16.xpose.msra.mxu0 0
  %2515 = vmatprep.subr.bf16.mxu0 0
  %2516 = vmatpush1.bf16.xpose.msra.mxu0 0
  %2517 = vmatprep.subr.bf16.mxu0 0
  %2518 = vmatpush1.bf16.xpose.msra.mxu0 0
  %2519 = vmatprep.subr.bf16.mxu0 0
  %2520 = vmatpush1.bf16.xpose.msra.mxu0 0
  %2521 = vmatprep.subr.bf16.mxu0 0
  %2522 = vmatpush1.bf16.xpose.msra.mxu0 0
  %2523 = vmatprep.subr.bf16.mxu0 0
  %2524 = vmatpush1.bf16.xpose.msra.mxu0 0
  %2525 = vmatprep.mubr.bf16.mxu0 0
  %2526 = vmatmul.mubr.bf16.gmra.mrb[0].mxu0 %v2488
  %v2527 = vpop.f32.mrb[0].mxu0
  %v2528 = vadd.f32 0.0, %v2527
  %v2529 = vpop.f32.mrb[0].mxu0
  %v2530 = vpop.f32.mrb[0].mxu0
  %v2531 = vadd.f32 0.0, %v2530
  %v2532 = vpop.f32.mrb[0].mxu0
  %2533 = vdwg.mxu0
  %v2534 = vmul.f32 %v2528, 0.35355338
  %v2535 = vmul.f32 %v2531, 0.35355338
  %v2536 = vadd.f32 %v2534, %v202
  %v2537 = vadd.f32 %v2535, %v203
  %v2538 = vsel %vm369, %v2536, -inf
  %2539 = vmax.xlane.f32.xlu0 %v2538
  %v2540 = vpop.xlane.xlu0 %2539
  %v2541 = vsel %vm369, %v2537, -inf
  %2542 = vmax.xlane.f32.xlu0 %v2541
  %v2543 = vpop.xlane.xlu0 %2542
  %v2544 = vsub.f32 %v2536, %v2540
  %v2545 = vsub.f32 %v2537, %v2543
  %v2546 = vmul.f32 %v2544, 1.442695
  %v2547 = vpow.pop %v2546
  %v2548 = vmul.f32 %v2545, 1.442695
  %v2549 = vpow.pop %v2548
  %v2550 = vsel %vm369, %v2547, 0.0
  %2551 = vadd.xlane.f32.xlu0 %v2550
  %v2552 = vpop.xlane.xlu0 %2551
  %v2553 = vsel %vm369, %v2549, 0.0
  %2554 = vadd.xlane.f32.xlu0 %v2553
  %v2555 = vpop.xlane.xlu0 %2554
  %v2556 = vrcp.pop %v2552
  %v2557 = vrcp.pop %v2555
  %v2558 = vmul.f32 %v2547, %v2556
  %v2559 = vmul.f32 %v2549, %v2557
  %v2560 = vpack.c.bf16 %v2559, %v2558
  %2561 = vrot.lane.b32.xlu0 %v2221, 48
  %v2562 = vpop.permute.xlu0 %2561
  %v2565 = vsel %vm369, %v2560, 0
  %2567 = vmatprep.subr.bf16.mxu0 0
  %2568 = vmatpush1.bf16.msra.mxu0 %v2562
  %2569 = vmatprep.subr.bf16.mxu0 0
  %2570 = vmatpush1.bf16.msra.mxu0 0
  %2571 = vmatprep.subr.bf16.mxu0 0
  %2572 = vmatpush1.bf16.msra.mxu0 0
  %2573 = vmatprep.subr.bf16.mxu0 0
  %2574 = vmatpush1.bf16.msra.mxu0 0
  %2575 = vmatprep.subr.bf16.mxu0 0
  %2576 = vmatpush1.bf16.msra.mxu0 0
  %2577 = vmatprep.subr.bf16.mxu0 0
  %2578 = vmatpush1.bf16.msra.mxu0 0
  %2579 = vmatprep.subr.bf16.mxu0 0
  %2580 = vmatpush1.bf16.msra.mxu0 0
  %2581 = vmatprep.subr.bf16.mxu0 0
  %2582 = vmatpush1.bf16.msra.mxu0 0
  %2583 = vmatprep.subr.bf16.mxu0 0
  %2584 = vmatpush1.bf16.msra.mxu0 0
  %2585 = vmatprep.subr.bf16.mxu0 0
  %2586 = vmatpush1.bf16.msra.mxu0 0
  %2587 = vmatprep.subr.bf16.mxu0 0
  %2588 = vmatpush1.bf16.msra.mxu0 0
  %2589 = vmatprep.subr.bf16.mxu0 0
  %2590 = vmatpush1.bf16.msra.mxu0 0
  %2591 = vmatprep.subr.bf16.mxu0 0
  %2592 = vmatpush1.bf16.msra.mxu0 0
  %2593 = vmatprep.subr.bf16.mxu0 0
  %2594 = vmatpush1.bf16.msra.mxu0 0
  %2595 = vmatprep.subr.bf16.mxu0 0
  %2596 = vmatpush1.bf16.msra.mxu0 0
  %2597 = vmatprep.subr.bf16.mxu0 0
  %2598 = vmatpush1.bf16.msra.mxu0 0
  %2599 = vmatprep.mubr.bf16.mxu0 0
  %2600 = vmatmul.mubr.bf16.gmra.mrb[0].mxu0 %v2565
  %v2601 = vpop.f32.mrb[0].mxu0
  %v2602 = vadd.f32 0.0, %v2601
  %v2603 = vpop.f32.mrb[0].mxu0
  %v2604 = vpop.f32.mrb[0].mxu0
  %v2605 = vadd.f32 0.0, %v2604
  %v2606 = vpop.f32.mrb[0].mxu0
  %2607 = vdwg.mxu0
  %2610 = vrot.lane.b32.xlu0 %v2602, 16
  %v2611 = vpop.permute.xlu0 %2610
  %2612 = vrot.lane.b32.xlu0 %v2605, 16
  %v2613 = vpop.permute.xlu0 %2612
  %2616 = vst.msk [vmem:[#allocation2] sm:$0xff] %vm711, %v2611
  %2617 = vst.msk [vmem:[#allocation2 + $0x8] sm:$0xff] %vm711, %v2613
  %2618 = vrot.lane.b32.xlu0 %v2221, 104
  %v2619 = vpop.permute.xlu0 %2618
  %2620 = vrot.lane.b32.xlu0 %v2221, 72
  %v2621 = vpop.permute.xlu0 %2620
  %v2623 = vsel %vm317, %v2619, 0
  %v2626 = vsel %vm317, %v2621, 0
  %2628 = vmatprep.subr.bf16.mxu0 0
  %2629 = vmatpush1.bf16.xpose.msra.mxu0 %v2626
  %2630 = vmatprep.subr.bf16.mxu0 0
  %2631 = vmatpush1.bf16.xpose.msra.mxu0 0
  %2632 = vmatprep.subr.bf16.mxu0 0
  %2633 = vmatpush1.bf16.xpose.msra.mxu0 0
  %2634 = vmatprep.subr.bf16.mxu0 0
  %2635 = vmatpush1.bf16.xpose.msra.mxu0 0
  %2636 = vmatprep.subr.bf16.mxu0 0
  %2637 = vmatpush1.bf16.xpose.msra.mxu0 0
  %2638 = vmatprep.subr.bf16.mxu0 0
  %2639 = vmatpush1.bf16.xpose.msra.mxu0 0
  %2640 = vmatprep.subr.bf16.mxu0 0
  %2641 = vmatpush1.bf16.xpose.msra.mxu0 0
  %2642 = vmatprep.subr.bf16.mxu0 0
  %2643 = vmatpush1.bf16.xpose.msra.mxu0 0
  %2644 = vmatprep.subr.bf16.mxu0 0
  %2645 = vmatpush1.bf16.xpose.msra.mxu0 0
  %2646 = vmatprep.subr.bf16.mxu0 0
  %2647 = vmatpush1.bf16.xpose.msra.mxu0 0
  %2648 = vmatprep.subr.bf16.mxu0 0
  %2649 = vmatpush1.bf16.xpose.msra.mxu0 0
  %2650 = vmatprep.subr.bf16.mxu0 0
  %2651 = vmatpush1.bf16.xpose.msra.mxu0 0
  %2652 = vmatprep.subr.bf16.mxu0 0
  %2653 = vmatpush1.bf16.xpose.msra.mxu0 0
  %2654 = vmatprep.subr.bf16.mxu0 0
  %2655 = vmatpush1.bf16.xpose.msra.mxu0 0
  %2656 = vmatprep.subr.bf16.mxu0 0
  %2657 = vmatpush1.bf16.xpose.msra.mxu0 0
  %2658 = vmatprep.subr.bf16.mxu0 0
  %2659 = vmatpush1.bf16.xpose.msra.mxu0 0
  %2660 = vmatprep.mubr.bf16.mxu0 0
  %2661 = vmatmul.mubr.bf16.gmra.mrb[0].mxu0 %v2623
  %v2662 = vpop.f32.mrb[0].mxu0
  %v2663 = vadd.f32 0.0, %v2662
  %v2664 = vpop.f32.mrb[0].mxu0
  %v2665 = vpop.f32.mrb[0].mxu0
  %v2666 = vadd.f32 0.0, %v2665
  %v2667 = vpop.f32.mrb[0].mxu0
  %2668 = vdwg.mxu0
  %v2669 = vmul.f32 %v2663, 0.35355338
  %v2670 = vmul.f32 %v2666, 0.35355338
  %v2671 = vadd.f32 %v2669, %v202
  %v2672 = vadd.f32 %v2670, %v203
  %v2673 = vsel %vm369, %v2671, -inf
  %2674 = vmax.xlane.f32.xlu0 %v2673
  %v2675 = vpop.xlane.xlu0 %2674
  %v2676 = vsel %vm369, %v2672, -inf
  %2677 = vmax.xlane.f32.xlu0 %v2676
  %v2678 = vpop.xlane.xlu0 %2677
  %v2679 = vsub.f32 %v2671, %v2675
  %v2680 = vsub.f32 %v2672, %v2678
  %v2681 = vmul.f32 %v2679, 1.442695
  %v2682 = vpow.pop %v2681
  %v2683 = vmul.f32 %v2680, 1.442695
  %v2684 = vpow.pop %v2683
  %v2685 = vsel %vm369, %v2682, 0.0
  %2686 = vadd.xlane.f32.xlu0 %v2685
  %v2687 = vpop.xlane.xlu0 %2686
  %v2688 = vsel %vm369, %v2684, 0.0
  %2689 = vadd.xlane.f32.xlu0 %v2688
  %v2690 = vpop.xlane.xlu0 %2689
  %v2691 = vrcp.pop %v2687
  %v2692 = vrcp.pop %v2690
  %v2693 = vmul.f32 %v2682, %v2691
  %v2694 = vmul.f32 %v2684, %v2692
  %v2695 = vpack.c.bf16 %v2694, %v2693
  %2696 = vrot.lane.b32.xlu0 %v2221, 40
  %v2697 = vpop.permute.xlu0 %2696
  %v2700 = vsel %vm369, %v2695, 0
  %2702 = vmatprep.subr.bf16.mxu0 0
  %2703 = vmatpush1.bf16.msra.mxu0 %v2697
  %2704 = vmatprep.subr.bf16.mxu0 0
  %2705 = vmatpush1.bf16.msra.mxu0 0
  %2706 = vmatprep.subr.bf16.mxu0 0
  %2707 = vmatpush1.bf16.msra.mxu0 0
  %2708 = vmatprep.subr.bf16.mxu0 0
  %2709 = vmatpush1.bf16.msra.mxu0 0
  %2710 = vmatprep.subr.bf16.mxu0 0
  %2711 = vmatpush1.bf16.msra.mxu0 0
  %2712 = vmatprep.subr.bf16.mxu0 0
  %2713 = vmatpush1.bf16.msra.mxu0 0
  %2714 = vmatprep.subr.bf16.mxu0 0
  %2715 = vmatpush1.bf16.msra.mxu0 0
  %2716 = vmatprep.subr.bf16.mxu0 0
  %2717 = vmatpush1.bf16.msra.mxu0 0
  %2718 = vmatprep.subr.bf16.mxu0 0
  %2719 = vmatpush1.bf16.msra.mxu0 0
  %2720 = vmatprep.subr.bf16.mxu0 0
  %2721 = vmatpush1.bf16.msra.mxu0 0
  %2722 = vmatprep.subr.bf16.mxu0 0
  %2723 = vmatpush1.bf16.msra.mxu0 0
  %2724 = vmatprep.subr.bf16.mxu0 0
  %2725 = vmatpush1.bf16.msra.mxu0 0
  %2726 = vmatprep.subr.bf16.mxu0 0
  %2727 = vmatpush1.bf16.msra.mxu0 0
  %2728 = vmatprep.subr.bf16.mxu0 0
  %2729 = vmatpush1.bf16.msra.mxu0 0
  %2730 = vmatprep.subr.bf16.mxu0 0
  %2731 = vmatpush1.bf16.msra.mxu0 0
  %2732 = vmatprep.subr.bf16.mxu0 0
  %2733 = vmatpush1.bf16.msra.mxu0 0
  %2734 = vmatprep.mubr.bf16.mxu0 0
  %2735 = vmatmul.mubr.bf16.gmra.mrb[0].mxu0 %v2700
  %v2736 = vpop.f32.mrb[0].mxu0
  %v2737 = vadd.f32 0.0, %v2736
  %v2738 = vpop.f32.mrb[0].mxu0
  %v2739 = vpop.f32.mrb[0].mxu0
  %v2740 = vadd.f32 0.0, %v2739
  %v2741 = vpop.f32.mrb[0].mxu0
  %2742 = vdwg.mxu0
  %2745 = vrot.lane.b32.xlu0 %v2737, 24
  %v2746 = vpop.permute.xlu0 %2745
  %2747 = vrot.lane.b32.xlu0 %v2740, 24
  %v2748 = vpop.permute.xlu0 %2747
  %2751 = vst.msk [vmem:[#allocation2] sm:$0xff] %vm847, %v2746
  %2752 = vst.msk [vmem:[#allocation2 + $0x8] sm:$0xff] %vm847, %v2748
  %v2753 = vld [vmem:[#allocation2] sm:$0xff]
  %v2754 = vld [vmem:[#allocation2 + $0x8] sm:$0xff]
  %v2755 = vpack.c.bf16 %v2754, %v2753
  %s2756 = scalar_lea.vmem %s7, 32
  %v2757 = vld [vmem:[%s2756] sm:$0xf]
  %v2758 = vld [vmem:[%s2756 + $0x4] sm:$0xf]
  %v2759 = vld [vmem:[%s2756 + $0x8] sm:$0xf]
  %v2760 = vld [vmem:[%s2756 + $0xc] sm:$0xf]
  %v2765 = vunpack.c.l.b16 %v2757
  %v2766 = vunpack.c.l.b16 %v2758
  %v2767 = vunpack.c.l.b16 %v2759
  %v2768 = vunpack.c.l.b16 %v2760
  %v2769 = vpack.c.b16 %v2766, %v2765
  %v2770 = vpack.c.b16 %v2768, %v2767
  %v2774 = vsel %vm205, %v2755, 0
  %2776 = vmatprep.subr.bf16.mxu0 0
  %2777 = vmatpush1.bf16.msra.mxu0 %v2769
  %2778 = vmatprep.subr.bf16.mxu0 0
  %2779 = vmatpush1.bf16.msra.mxu0 %v2770
  %2780 = vmatprep.subr.bf16.mxu0 0
  %2781 = vmatpush1.bf16.msra.mxu0 0
  %2782 = vmatprep.subr.bf16.mxu0 0
  %2783 = vmatpush1.bf16.msra.mxu0 0
  %2784 = vmatprep.subr.bf16.mxu0 0
  %2785 = vmatpush1.bf16.msra.mxu0 0
  %2786 = vmatprep.subr.bf16.mxu0 0
  %2787 = vmatpush1.bf16.msra.mxu0 0
  %2788 = vmatprep.subr.bf16.mxu0 0
  %2789 = vmatpush1.bf16.msra.mxu0 0
  %2790 = vmatprep.subr.bf16.mxu0 0
  %2791 = vmatpush1.bf16.msra.mxu0 0
  %2792 = vmatprep.subr.bf16.mxu0 0
  %2793 = vmatpush1.bf16.msra.mxu0 0
  %2794 = vmatprep.subr.bf16.mxu0 0
  %2795 = vmatpush1.bf16.msra.mxu0 0
  %2796 = vmatprep.subr.bf16.mxu0 0
  %2797 = vmatpush1.bf16.msra.mxu0 0
  %2798 = vmatprep.subr.bf16.mxu0 0
  %2799 = vmatpush1.bf16.msra.mxu0 0
  %2800 = vmatprep.subr.bf16.mxu0 0
  %2801 = vmatpush1.bf16.msra.mxu0 0
  %2802 = vmatprep.subr.bf16.mxu0 0
  %2803 = vmatpush1.bf16.msra.mxu0 0
  %2804 = vmatprep.subr.bf16.mxu0 0
  %2805 = vmatpush1.bf16.msra.mxu0 0
  %2806 = vmatprep.subr.bf16.mxu0 0
  %2807 = vmatpush1.bf16.msra.mxu0 0
  %2808 = vmatprep.mubr.bf16.mxu0 0
  %2809 = vmatmul.mubr.bf16.gmra.mrb[0].mxu0 %v2774
  %v2810 = vpop.f32.mrb[0].mxu0
  %v2811 = vadd.f32 0.0, %v2810
  %v2812 = vpop.f32.mrb[0].mxu0
  %v2813 = vpop.f32.mrb[0].mxu0
  %v2814 = vadd.f32 0.0, %v2813
  %v2815 = vpop.f32.mrb[0].mxu0
  %2816 = vdwg.mxu0
  %v2817 = vadd.f32 %v2109, %v2811
  %v2818 = vadd.f32 %v2110, %v2814
  %s2819 = scalar_lea.vmem %s8, 2
  %v2820 = vld [vmem:[%s2819] sm:$0x1]
  %v2822 = vlaneseq
  %v2823 = vshrl.u32 %v2822, 7
  %v2824 = vsub.s32 0, %v2823
  %v2825 = vrot.slane %v2820, %v2824
  %v2827 = vadd.f32 %v2817, %v2825
  %v2828 = vadd.f32 %v2818, %v2825
  %s2829 = scalar_lea.vmem %s9, 4
  %v2830 = vld [vmem:[%s2829] sm:$0x3]
  %v2831 = vsel %vm205, %v2827, 0.0
  %2832 = vadd.xlane.f32.xlu0 %v2831
  %v2833 = vpop.xlane.xlu0 %2832
  %v2834 = vsel %vm205, %v2828, 0.0
  %2835 = vadd.xlane.f32.xlu0 %v2834
  %v2836 = vpop.xlane.xlu0 %2835
  %v2837 = vmul.f32 %v2833, %v212
  %v2838 = vmul.f32 %v2836, %v212
  %v2839 = vsub.f32 %v2827, %v2837
  %v2840 = vsub.f32 %v2828, %v2838
  %v2841 = vmul.f32 %v2839, %v2839
  %v2842 = vmul.f32 %v2840, %v2840
  %v2843 = vsel %vm205, %v2841, 0.0
  %2844 = vadd.xlane.f32.xlu0 %v2843
  %v2845 = vpop.xlane.xlu0 %2844
  %v2846 = vsel %vm205, %v2842, 0.0
  %2847 = vadd.xlane.f32.xlu0 %v2846
  %v2848 = vpop.xlane.xlu0 %2847
  %v2849 = vmul.f32 %v2845, %v212
  %v2850 = vmul.f32 %v2848, %v212
  %v2851 = vadd.f32 %v2849, 1e-06
  %v2852 = vadd.f32 %v2850, 1e-06
  %v2853 = vrsqrt.pop %v2851
  %v2854 = vrsqrt.pop %v2852
  %v2855 = vmul.f32 %v2839, %v2853
  %v2856 = vmul.f32 %v2840, %v2854
  %v2857 = vlaneseq
  %v2858 = vshrl.u32 %v2857, 7
  %v2859 = vsub.s32 0, %v2858
  %v2860 = vrot.slane %v2830, %v2859
  %v2861 = vmul.f32 %v2855, %v2860
  %v2862 = vmul.f32 %v2856, %v2860
  %v2863 = vlaneseq
  %v2864 = vshrl.u32 %v2863, 7
  %v2865 = vsub.s32 1, %v2864
  %v2866 = vrot.slane %v2830, %v2865
  %v2867 = vadd.f32 %v2861, %v2866
  %v2868 = vadd.f32 %v2862, %v2866
  %v2869 = vpack.c.bf16 %v2868, %v2867
  %s2870 = scalar_lea.vmem %s10, 32
  %v2871 = vld [vmem:[%s2870] sm:$0xf]
  %v2872 = vld [vmem:[%s2870 + $0x4] sm:$0xf]
  %v2873 = vld [vmem:[%s2870 + $0x8] sm:$0xf]
  %v2874 = vld [vmem:[%s2870 + $0xc] sm:$0xf]
  %s2875 = scalar_lea.vmem %s11, 2
  %v2876 = vld [vmem:[%s2875] sm:$0x1]
  %v2878 = vlaneseq
  %v2879 = vshrl.u32 %v2878, 7
  %v2880 = vsub.s32 0, %v2879
  %v2881 = vrot.slane %v2876, %v2880
  %v2887 = vunpack.c.l.b16 %v2871
  %v2888 = vunpack.c.l.b16 %v2872
  %v2889 = vunpack.c.l.b16 %v2873
  %v2890 = vunpack.c.l.b16 %v2874
  %v2891 = vpack.c.b16 %v2888, %v2887
  %v2892 = vpack.c.b16 %v2890, %v2889
  %v2896 = vsel %vm205, %v2869, 0
  %2898 = vmatprep.subr.bf16.mxu0 0
  %2899 = vmatpush1.bf16.msra.mxu0 %v2891
  %2900 = vmatprep.subr.bf16.mxu0 0
  %2901 = vmatpush1.bf16.msra.mxu0 %v2892
  %2902 = vmatprep.subr.bf16.mxu0 0
  %2903 = vmatpush1.bf16.msra.mxu0 0
  %2904 = vmatprep.subr.bf16.mxu0 0
  %2905 = vmatpush1.bf16.msra.mxu0 0
  %2906 = vmatprep.subr.bf16.mxu0 0
  %2907 = vmatpush1.bf16.msra.mxu0 0
  %2908 = vmatprep.subr.bf16.mxu0 0
  %2909 = vmatpush1.bf16.msra.mxu0 0
  %2910 = vmatprep.subr.bf16.mxu0 0
  %2911 = vmatpush1.bf16.msra.mxu0 0
  %2912 = vmatprep.subr.bf16.mxu0 0
  %2913 = vmatpush1.bf16.msra.mxu0 0
  %2914 = vmatprep.subr.bf16.mxu0 0
  %2915 = vmatpush1.bf16.msra.mxu0 0
  %2916 = vmatprep.subr.bf16.mxu0 0
  %2917 = vmatpush1.bf16.msra.mxu0 0
  %2918 = vmatprep.subr.bf16.mxu0 0
  %2919 = vmatpush1.bf16.msra.mxu0 0
  %2920 = vmatprep.subr.bf16.mxu0 0
  %2921 = vmatpush1.bf16.msra.mxu0 0
  %2922 = vmatprep.subr.bf16.mxu0 0
  %2923 = vmatpush1.bf16.msra.mxu0 0
  %2924 = vmatprep.subr.bf16.mxu0 0
  %2925 = vmatpush1.bf16.msra.mxu0 0
  %2926 = vmatprep.subr.bf16.mxu0 0
  %2927 = vmatpush1.bf16.msra.mxu0 0
  %2928 = vmatprep.subr.bf16.mxu0 0
  %2929 = vmatpush1.bf16.msra.mxu0 0
  %2930 = vmatprep.mubr.bf16.mxu0 0
  %2931 = vmatmul.mubr.bf16.gmra.mrb[0].mxu0 %v2896
  %v2932 = vpop.f32.mrb[0].mxu0
  %v2933 = vadd.f32 %v2881, %v2932
  %v2934 = vpop.f32.mrb[0].mxu0
  %v2935 = vpop.f32.mrb[0].mxu0
  %v2936 = vadd.f32 %v2881, %v2935
  %v2937 = vpop.f32.mrb[0].mxu0
  %2938 = vdwg.mxu0
  %v2939 = vmul.f32 %v2933, 0.5
  %v2940 = vmul.f32 %v2936, 0.5
  %v2941 = vmul.f32 %v2933, 0.70710677
  %v2942 = vmul.f32 %v2936, 0.70710677
  %v2943 = verf.f32.pop %v2941
  %v2944 = verf.f32.pop %v2942
  %v2945 = vadd.f32 %v2943, 1.0
  %v2946 = vadd.f32 %v2944, 1.0
  %v2947 = vmul.f32 %v2939, %v2945
  %v2948 = vmul.f32 %v2940, %v2946
  %v2949 = vpack.c.bf16 %v2948, %v2947
  %s2950 = scalar_lea.vmem %s12, 128
  %v2951 = vld [vmem:[%s2950] sm:$0xf]
  %v2952 = vld [vmem:[%s2950 + $0x4] sm:$0xf]
  %v2953 = vld [vmem:[%s2950 + $0x8] sm:$0xf]
  %v2954 = vld [vmem:[%s2950 + $0xc] sm:$0xf]
  %v2955 = vld [vmem:[%s2950 + $0x10] sm:$0xf]
  %v2956 = vld [vmem:[%s2950 + $0x14] sm:$0xf]
  %v2957 = vld [vmem:[%s2950 + $0x18] sm:$0xf]
  %v2958 = vld [vmem:[%s2950 + $0x1c] sm:$0xf]
  %v2959 = vld [vmem:[%s2950 + $0x20] sm:$0xf]
  %v2960 = vld [vmem:[%s2950 + $0x24] sm:$0xf]
  %v2961 = vld [vmem:[%s2950 + $0x28] sm:$0xf]
  %v2962 = vld [vmem:[%s2950 + $0x2c] sm:$0xf]
  %v2963 = vld [vmem:[%s2950 + $0x30] sm:$0xf]
  %v2964 = vld [vmem:[%s2950 + $0x34] sm:$0xf]
  %v2965 = vld [vmem:[%s2950 + $0x38] sm:$0xf]
  %v2966 = vld [vmem:[%s2950 + $0x3c] sm:$0xf]
  %s2967 = scalar_lea.vmem %s13, 2
  %v2968 = vld [vmem:[%s2967] sm:$0x1]
  %v2970 = vlaneseq
  %v2971 = vshrl.u32 %v2970, 7
  %v2972 = vsub.s32 0, %v2971
  %v2973 = vrot.slane %v2968, %v2972
  %v2991 = vunpack.c.l.b16 %v2951
  %v2992 = vunpack.c.l.b16 %v2952
  %v2993 = vunpack.c.l.b16 %v2953
  %v2994 = vunpack.c.l.b16 %v2954
  %v2995 = vunpack.c.l.b16 %v2955
  %v2996 = vunpack.c.l.b16 %v2956
  %v2997 = vunpack.c.l.b16 %v2957
  %v2998 = vunpack.c.l.b16 %v2958
  %v2999 = vunpack.c.l.b16 %v2959
  %v3000 = vunpack.c.l.b16 %v2960
  %v3001 = vunpack.c.l.b16 %v2961
  %v3002 = vunpack.c.l.b16 %v2962
  %v3003 = vunpack.c.l.b16 %v2963
  %v3004 = vunpack.c.l.b16 %v2964
  %v3005 = vunpack.c.l.b16 %v2965
  %v3006 = vunpack.c.l.b16 %v2966
  %v3007 = vpack.c.b16 %v2992, %v2991
  %v3008 = vpack.c.b16 %v2994, %v2993
  %v3009 = vpack.c.b16 %v2996, %v2995
  %v3010 = vpack.c.b16 %v2998, %v2997
  %v3011 = vpack.c.b16 %v3000, %v2999
  %v3012 = vpack.c.b16 %v3002, %v3001
  %v3013 = vpack.c.b16 %v3004, %v3003
  %v3014 = vpack.c.b16 %v3006, %v3005
  %3023 = vmatprep.subr.bf16.mxu0 0
  %3024 = vmatpush1.bf16.msra.mxu0 %v3007
  %3025 = vmatprep.subr.bf16.mxu0 0
  %3026 = vmatpush1.bf16.msra.mxu0 %v3008
  %3027 = vmatprep.subr.bf16.mxu0 0
  %3028 = vmatpush1.bf16.msra.mxu0 %v3009
  %3029 = vmatprep.subr.bf16.mxu0 0
  %3030 = vmatpush1.bf16.msra.mxu0 %v3010
  %3031 = vmatprep.subr.bf16.mxu0 0
  %3032 = vmatpush1.bf16.msra.mxu0 %v3011
  %3033 = vmatprep.subr.bf16.mxu0 0
  %3034 = vmatpush1.bf16.msra.mxu0 %v3012
  %3035 = vmatprep.subr.bf16.mxu0 0
  %3036 = vmatpush1.bf16.msra.mxu0 %v3013
  %3037 = vmatprep.subr.bf16.mxu0 0
  %3038 = vmatpush1.bf16.msra.mxu0 %v3014
  %3039 = vmatprep.subr.bf16.mxu0 0
  %3040 = vmatpush1.bf16.msra.mxu0 0
  %3041 = vmatprep.subr.bf16.mxu0 0
  %3042 = vmatpush1.bf16.msra.mxu0 0
  %3043 = vmatprep.subr.bf16.mxu0 0
  %3044 = vmatpush1.bf16.msra.mxu0 0
  %3045 = vmatprep.subr.bf16.mxu0 0
  %3046 = vmatpush1.bf16.msra.mxu0 0
  %3047 = vmatprep.subr.bf16.mxu0 0
  %3048 = vmatpush1.bf16.msra.mxu0 0
  %3049 = vmatprep.subr.bf16.mxu0 0
  %3050 = vmatpush1.bf16.msra.mxu0 0
  %3051 = vmatprep.subr.bf16.mxu0 0
  %3052 = vmatpush1.bf16.msra.mxu0 0
  %3053 = vmatprep.subr.bf16.mxu0 0
  %3054 = vmatpush1.bf16.msra.mxu0 0
  %3055 = vmatprep.mubr.bf16.mxu0 0
  %3056 = vmatmul.mubr.bf16.gmra.mrb[0].mxu0 %v2949
  %v3057 = vpop.f32.mrb[0].mxu0
  %v3058 = vadd.f32 %v2973, %v3057
  %v3059 = vpop.f32.mrb[0].mxu0
  %v3060 = vpop.f32.mrb[0].mxu0
  %v3061 = vadd.f32 %v2973, %v3060
  %v3062 = vpop.f32.mrb[0].mxu0
  %3063 = vdwg.mxu0
  %v3064 = vadd.f32 %v2827, %v3058
  %v3065 = vadd.f32 %v2828, %v3061
  %3066 = vst.msk [vmem:[%s14] sm:$0xff] %vm205, %v3064
  %3067 = vst.msk [vmem:[%s14 + $0x8] sm:$0xff] %vm205, %v3065
  %s3068 = scalar_lea.vmem %s4, 6
  %v3069 = vld [vmem:[%s3068] sm:$0x3]
  %v3070 = vsel %vm205, %v3064, 0.0
  %3071 = vadd.xlane.f32.xlu0 %v3070
  %v3072 = vpop.xlane.xlu0 %3071
  %v3073 = vsel %vm205, %v3065, 0.0
  %3074 = vadd.xlane.f32.xlu0 %v3073
  %v3075 = vpop.xlane.xlu0 %3074
  %v3076 = vmul.f32 %v3072, %v212
  %v3077 = vmul.f32 %v3075, %v212
  %v3078 = vsub.f32 %v3064, %v3076
  %v3079 = vsub.f32 %v3065, %v3077
  %v3080 = vmul.f32 %v3078, %v3078
  %v3081 = vmul.f32 %v3079, %v3079
  %v3082 = vsel %vm205, %v3080, 0.0
  %3083 = vadd.xlane.f32.xlu0 %v3082
  %v3084 = vpop.xlane.xlu0 %3083
  %v3085 = vsel %vm205, %v3081, 0.0
  %3086 = vadd.xlane.f32.xlu0 %v3085
  %v3087 = vpop.xlane.xlu0 %3086
  %v3088 = vmul.f32 %v3084, %v212
  %v3089 = vmul.f32 %v3087, %v212
  %v3090 = vadd.f32 %v3088, 1e-06
  %v3091 = vadd.f32 %v3089, 1e-06
  %v3092 = vrsqrt.pop %v3090
  %v3093 = vrsqrt.pop %v3091
  %v3094 = vmul.f32 %v3078, %v3092
  %v3095 = vmul.f32 %v3079, %v3093
  %v3096 = vlaneseq
  %v3097 = vshrl.u32 %v3096, 7
  %v3098 = vsub.s32 0, %v3097
  %v3099 = vrot.slane %v3069, %v3098
  %v3100 = vmul.f32 %v3094, %v3099
  %v3101 = vmul.f32 %v3095, %v3099
  %v3102 = vlaneseq
  %v3103 = vshrl.u32 %v3102, 7
  %v3104 = vsub.s32 1, %v3103
  %v3105 = vrot.slane %v3069, %v3104
  %v3106 = vadd.f32 %v3100, %v3105
  %v3107 = vadd.f32 %v3101, %v3105
  %v3108 = vpack.c.bf16 %v3107, %v3106
  %s3109 = scalar_lea.vmem %s5, 48
  %v3110 = vld [vmem:[%s3109] sm:$0xf]
  %v3111 = vld [vmem:[%s3109 + $0x4] sm:$0xf]
  %v3112 = vld [vmem:[%s3109 + $0x8] sm:$0xf]
  %v3113 = vld [vmem:[%s3109 + $0xc] sm:$0xf]
  %s3114 = scalar_lea.vmem %s6, 3
  %v3115 = vld [vmem:[%s3114] sm:$0x1]
  %v3117 = vlaneseq
  %v3118 = vshrl.u32 %v3117, 7
  %v3119 = vsub.s32 0, %v3118
  %v3120 = vrot.slane %v3115, %v3119
  %v3126 = vunpack.c.l.b16 %v3110
  %v3127 = vunpack.c.l.b16 %v3111
  %v3128 = vunpack.c.l.b16 %v3112
  %v3129 = vunpack.c.l.b16 %v3113
  %v3130 = vpack.c.b16 %v3127, %v3126
  %v3131 = vpack.c.b16 %v3129, %v3128
  %v3135 = vsel %vm205, %v3108, 0
  %3137 = vmatprep.subr.bf16.mxu0 0
  %3138 = vmatpush1.bf16.msra.mxu0 %v3130
  %3139 = vmatprep.subr.bf16.mxu0 0
  %3140 = vmatpush1.bf16.msra.mxu0 %v3131
  %3141 = vmatprep.subr.bf16.mxu0 0
  %3142 = vmatpush1.bf16.msra.mxu0 0
  %3143 = vmatprep.subr.bf16.mxu0 0
  %3144 = vmatpush1.bf16.msra.mxu0 0
  %3145 = vmatprep.subr.bf16.mxu0 0
  %3146 = vmatpush1.bf16.msra.mxu0 0
  %3147 = vmatprep.subr.bf16.mxu0 0
  %3148 = vmatpush1.bf16.msra.mxu0 0
  %3149 = vmatprep.subr.bf16.mxu0 0
  %3150 = vmatpush1.bf16.msra.mxu0 0
  %3151 = vmatprep.subr.bf16.mxu0 0
  %3152 = vmatpush1.bf16.msra.mxu0 0
  %3153 = vmatprep.subr.bf16.mxu0 0
  %3154 = vmatpush1.bf16.msra.mxu0 0
  %3155 = vmatprep.subr.bf16.mxu0 0
  %3156 = vmatpush1.bf16.msra.mxu0 0
  %3157 = vmatprep.subr.bf16.mxu0 0
  %3158 = vmatpush1.bf16.msra.mxu0 0
  %3159 = vmatprep.subr.bf16.mxu0 0
  %3160 = vmatpush1.bf16.msra.mxu0 0
  %3161 = vmatprep.subr.bf16.mxu0 0
  %3162 = vmatpush1.bf16.msra.mxu0 0
  %3163 = vmatprep.subr.bf16.mxu0 0
  %3164 = vmatpush1.bf16.msra.mxu0 0
  %3165 = vmatprep.subr.bf16.mxu0 0
  %3166 = vmatpush1.bf16.msra.mxu0 0
  %3167 = vmatprep.subr.bf16.mxu0 0
  %3168 = vmatpush1.bf16.msra.mxu0 0
  %3169 = vmatprep.mubr.bf16.mxu0 0
  %3170 = vmatmul.mubr.bf16.gmra.mrb[0].mxu0 %v3135
  %v3171 = vpop.f32.mrb[0].mxu0
  %v3172 = vadd.f32 %v3120, %v3171
  %v3173 = vpop.f32.mrb[0].mxu0
  %v3174 = vpop.f32.mrb[0].mxu0
  %v3175 = vadd.f32 %v3120, %v3174
  %v3176 = vpop.f32.mrb[0].mxu0
  %3177 = vdwg.mxu0
  %v3178 = vpack.c.bf16 %v3175, %v3172
  %3180 = vrot.lane.b32.xlu0 %v3178, 96
  %v3181 = vpop.permute.xlu0 %3180
  %v3183 = vsel %vm317, %v3178, 0
  %v3186 = vsel %vm317, %v3181, 0
  %3188 = vmatprep.subr.bf16.mxu0 0
  %3189 = vmatpush1.bf16.xpose.msra.mxu0 %v3186
  %3190 = vmatprep.subr.bf16.mxu0 0
  %3191 = vmatpush1.bf16.xpose.msra.mxu0 0
  %3192 = vmatprep.subr.bf16.mxu0 0
  %3193 = vmatpush1.bf16.xpose.msra.mxu0 0
  %3194 = vmatprep.subr.bf16.mxu0 0
  %3195 = vmatpush1.bf16.xpose.msra.mxu0 0
  %3196 = vmatprep.subr.bf16.mxu0 0
  %3197 = vmatpush1.bf16.xpose.msra.mxu0 0
  %3198 = vmatprep.subr.bf16.mxu0 0
  %3199 = vmatpush1.bf16.xpose.msra.mxu0 0
  %3200 = vmatprep.subr.bf16.mxu0 0
  %3201 = vmatpush1.bf16.xpose.msra.mxu0 0
  %3202 = vmatprep.subr.bf16.mxu0 0
  %3203 = vmatpush1.bf16.xpose.msra.mxu0 0
  %3204 = vmatprep.subr.bf16.mxu0 0
  %3205 = vmatpush1.bf16.xpose.msra.mxu0 0
  %3206 = vmatprep.subr.bf16.mxu0 0
  %3207 = vmatpush1.bf16.xpose.msra.mxu0 0
  %3208 = vmatprep.subr.bf16.mxu0 0
  %3209 = vmatpush1.bf16.xpose.msra.mxu0 0
  %3210 = vmatprep.subr.bf16.mxu0 0
  %3211 = vmatpush1.bf16.xpose.msra.mxu0 0
  %3212 = vmatprep.subr.bf16.mxu0 0
  %3213 = vmatpush1.bf16.xpose.msra.mxu0 0
  %3214 = vmatprep.subr.bf16.mxu0 0
  %3215 = vmatpush1.bf16.xpose.msra.mxu0 0
  %3216 = vmatprep.subr.bf16.mxu0 0
  %3217 = vmatpush1.bf16.xpose.msra.mxu0 0
  %3218 = vmatprep.subr.bf16.mxu0 0
  %3219 = vmatpush1.bf16.xpose.msra.mxu0 0
  %3220 = vmatprep.mubr.bf16.mxu0 0
  %3221 = vmatmul.mubr.bf16.gmra.mrb[0].mxu0 %v3183
  %v3222 = vpop.f32.mrb[0].mxu0
  %v3223 = vadd.f32 0.0, %v3222
  %v3224 = vpop.f32.mrb[0].mxu0
  %v3225 = vpop.f32.mrb[0].mxu0
  %v3226 = vadd.f32 0.0, %v3225
  %v3227 = vpop.f32.mrb[0].mxu0
  %3228 = vdwg.mxu0
  %v3229 = vmul.f32 %v3223, 0.35355338
  %v3230 = vmul.f32 %v3226, 0.35355338
  %v3231 = vadd.f32 %v3229, %v202
  %v3232 = vadd.f32 %v3230, %v203
  %v3233 = vsel %vm369, %v3231, -inf
  %3234 = vmax.xlane.f32.xlu0 %v3233
  %v3235 = vpop.xlane.xlu0 %3234
  %v3236 = vsel %vm369, %v3232, -inf
  %3237 = vmax.xlane.f32.xlu0 %v3236
  %v3238 = vpop.xlane.xlu0 %3237
  %v3239 = vsub.f32 %v3231, %v3235
  %v3240 = vsub.f32 %v3232, %v3238
  %v3241 = vmul.f32 %v3239, 1.442695
  %v3242 = vpow.pop %v3241
  %v3243 = vmul.f32 %v3240, 1.442695
  %v3244 = vpow.pop %v3243
  %v3245 = vsel %vm369, %v3242, 0.0
  %3246 = vadd.xlane.f32.xlu0 %v3245
  %v3247 = vpop.xlane.xlu0 %3246
  %v3248 = vsel %vm369, %v3244, 0.0
  %3249 = vadd.xlane.f32.xlu0 %v3248
  %v3250 = vpop.xlane.xlu0 %3249
  %v3251 = vrcp.pop %v3247
  %v3252 = vrcp.pop %v3250
  %v3253 = vmul.f32 %v3242, %v3251
  %v3254 = vmul.f32 %v3244, %v3252
  %v3255 = vpack.c.bf16 %v3254, %v3253
  %3256 = vrot.lane.b32.xlu0 %v3178, 64
  %v3257 = vpop.permute.xlu0 %3256
  %v3260 = vsel %vm369, %v3255, 0
  %3262 = vmatprep.subr.bf16.mxu0 0
  %3263 = vmatpush1.bf16.msra.mxu0 %v3257
  %3264 = vmatprep.subr.bf16.mxu0 0
  %3265 = vmatpush1.bf16.msra.mxu0 0
  %3266 = vmatprep.subr.bf16.mxu0 0
  %3267 = vmatpush1.bf16.msra.mxu0 0
  %3268 = vmatprep.subr.bf16.mxu0 0
  %3269 = vmatpush1.bf16.msra.mxu0 0
  %3270 = vmatprep.subr.bf16.mxu0 0
  %3271 = vmatpush1.bf16.msra.mxu0 0
  %3272 = vmatprep.subr.bf16.mxu0 0
  %3273 = vmatpush1.bf16.msra.mxu0 0
  %3274 = vmatprep.subr.bf16.mxu0 0
  %3275 = vmatpush1.bf16.msra.mxu0 0
  %3276 = vmatprep.subr.bf16.mxu0 0
  %3277 = vmatpush1.bf16.msra.mxu0 0
  %3278 = vmatprep.subr.bf16.mxu0 0
  %3279 = vmatpush1.bf16.msra.mxu0 0
  %3280 = vmatprep.subr.bf16.mxu0 0
  %3281 = vmatpush1.bf16.msra.mxu0 0
  %3282 = vmatprep.subr.bf16.mxu0 0
  %3283 = vmatpush1.bf16.msra.mxu0 0
  %3284 = vmatprep.subr.bf16.mxu0 0
  %3285 = vmatpush1.bf16.msra.mxu0 0
  %3286 = vmatprep.subr.bf16.mxu0 0
  %3287 = vmatpush1.bf16.msra.mxu0 0
  %3288 = vmatprep.subr.bf16.mxu0 0
  %3289 = vmatpush1.bf16.msra.mxu0 0
  %3290 = vmatprep.subr.bf16.mxu0 0
  %3291 = vmatpush1.bf16.msra.mxu0 0
  %3292 = vmatprep.subr.bf16.mxu0 0
  %3293 = vmatpush1.bf16.msra.mxu0 0
  %3294 = vmatprep.mubr.bf16.mxu0 0
  %3295 = vmatmul.mubr.bf16.gmra.mrb[0].mxu0 %v3260
  %v3296 = vpop.f32.mrb[0].mxu0
  %v3297 = vadd.f32 0.0, %v3296
  %v3298 = vpop.f32.mrb[0].mxu0
  %v3299 = vpop.f32.mrb[0].mxu0
  %v3300 = vadd.f32 0.0, %v3299
  %v3301 = vpop.f32.mrb[0].mxu0
  %3302 = vdwg.mxu0
  %3303 = vst.msk [vmem:[#allocation2] sm:$0xff] %vm317, %v3297
  %3304 = vst.msk [vmem:[#allocation2 + $0x8] sm:$0xff] %vm317, %v3300
  %3305 = vrot.lane.b32.xlu0 %v3178, 120
  %v3306 = vpop.permute.xlu0 %3305
  %3307 = vrot.lane.b32.xlu0 %v3178, 88
  %v3308 = vpop.permute.xlu0 %3307
  %v3310 = vsel %vm317, %v3306, 0
  %v3313 = vsel %vm317, %v3308, 0
  %3315 = vmatprep.subr.bf16.mxu0 0
  %3316 = vmatpush1.bf16.xpose.msra.mxu0 %v3313
  %3317 = vmatprep.subr.bf16.mxu0 0
  %3318 = vmatpush1.bf16.xpose.msra.mxu0 0
  %3319 = vmatprep.subr.bf16.mxu0 0
  %3320 = vmatpush1.bf16.xpose.msra.mxu0 0
  %3321 = vmatprep.subr.bf16.mxu0 0
  %3322 = vmatpush1.bf16.xpose.msra.mxu0 0
  %3323 = vmatprep.subr.bf16.mxu0 0
  %3324 = vmatpush1.bf16.xpose.msra.mxu0 0
  %3325 = vmatprep.subr.bf16.mxu0 0
  %3326 = vmatpush1.bf16.xpose.msra.mxu0 0
  %3327 = vmatprep.subr.bf16.mxu0 0
  %3328 = vmatpush1.bf16.xpose.msra.mxu0 0
  %3329 = vmatprep.subr.bf16.mxu0 0
  %3330 = vmatpush1.bf16.xpose.msra.mxu0 0
  %3331 = vmatprep.subr.bf16.mxu0 0
  %3332 = vmatpush1.bf16.xpose.msra.mxu0 0
  %3333 = vmatprep.subr.bf16.mxu0 0
  %3334 = vmatpush1.bf16.xpose.msra.mxu0 0
  %3335 = vmatprep.subr.bf16.mxu0 0
  %3336 = vmatpush1.bf16.xpose.msra.mxu0 0
  %3337 = vmatprep.subr.bf16.mxu0 0
  %3338 = vmatpush1.bf16.xpose.msra.mxu0 0
  %3339 = vmatprep.subr.bf16.mxu0 0
  %3340 = vmatpush1.bf16.xpose.msra.mxu0 0
  %3341 = vmatprep.subr.bf16.mxu0 0
  %3342 = vmatpush1.bf16.xpose.msra.mxu0 0
  %3343 = vmatprep.subr.bf16.mxu0 0
  %3344 = vmatpush1.bf16.xpose.msra.mxu0 0
  %3345 = vmatprep.subr.bf16.mxu0 0
  %3346 = vmatpush1.bf16.xpose.msra.mxu0 0
  %3347 = vmatprep.mubr.bf16.mxu0 0
  %3348 = vmatmul.mubr.bf16.gmra.mrb[0].mxu0 %v3310
  %v3349 = vpop.f32.mrb[0].mxu0
  %v3350 = vadd.f32 0.0, %v3349
  %v3351 = vpop.f32.mrb[0].mxu0
  %v3352 = vpop.f32.mrb[0].mxu0
  %v3353 = vadd.f32 0.0, %v3352
  %v3354 = vpop.f32.mrb[0].mxu0
  %3355 = vdwg.mxu0
  %v3356 = vmul.f32 %v3350, 0.35355338
  %v3357 = vmul.f32 %v3353, 0.35355338
  %v3358 = vadd.f32 %v3356, %v202
  %v3359 = vadd.f32 %v3357, %v203
  %v3360 = vsel %vm369, %v3358, -inf
  %3361 = vmax.xlane.f32.xlu0 %v3360
  %v3362 = vpop.xlane.xlu0 %3361
  %v3363 = vsel %vm369, %v3359, -inf
  %3364 = vmax.xlane.f32.xlu0 %v3363
  %v3365 = vpop.xlane.xlu0 %3364
  %v3366 = vsub.f32 %v3358, %v3362
  %v3367 = vsub.f32 %v3359, %v3365
  %v3368 = vmul.f32 %v3366, 1.442695
  %v3369 = vpow.pop %v3368
  %v3370 = vmul.f32 %v3367, 1.442695
  %v3371 = vpow.pop %v3370
  %v3372 = vsel %vm369, %v3369, 0.0
  %3373 = vadd.xlane.f32.xlu0 %v3372
  %v3374 = vpop.xlane.xlu0 %3373
  %v3375 = vsel %vm369, %v3371, 0.0
  %3376 = vadd.xlane.f32.xlu0 %v3375
  %v3377 = vpop.xlane.xlu0 %3376
  %v3378 = vrcp.pop %v3374
  %v3379 = vrcp.pop %v3377
  %v3380 = vmul.f32 %v3369, %v3378
  %v3381 = vmul.f32 %v3371, %v3379
  %v3382 = vpack.c.bf16 %v3381, %v3380
  %3383 = vrot.lane.b32.xlu0 %v3178, 56
  %v3384 = vpop.permute.xlu0 %3383
  %v3387 = vsel %vm369, %v3382, 0
  %3389 = vmatprep.subr.bf16.mxu0 0
  %3390 = vmatpush1.bf16.msra.mxu0 %v3384
  %3391 = vmatprep.subr.bf16.mxu0 0
  %3392 = vmatpush1.bf16.msra.mxu0 0
  %3393 = vmatprep.subr.bf16.mxu0 0
  %3394 = vmatpush1.bf16.msra.mxu0 0
  %3395 = vmatprep.subr.bf16.mxu0 0
  %3396 = vmatpush1.bf16.msra.mxu0 0
  %3397 = vmatprep.subr.bf16.mxu0 0
  %3398 = vmatpush1.bf16.msra.mxu0 0
  %3399 = vmatprep.subr.bf16.mxu0 0
  %3400 = vmatpush1.bf16.msra.mxu0 0
  %3401 = vmatprep.subr.bf16.mxu0 0
  %3402 = vmatpush1.bf16.msra.mxu0 0
  %3403 = vmatprep.subr.bf16.mxu0 0
  %3404 = vmatpush1.bf16.msra.mxu0 0
  %3405 = vmatprep.subr.bf16.mxu0 0
  %3406 = vmatpush1.bf16.msra.mxu0 0
  %3407 = vmatprep.subr.bf16.mxu0 0
  %3408 = vmatpush1.bf16.msra.mxu0 0
  %3409 = vmatprep.subr.bf16.mxu0 0
  %3410 = vmatpush1.bf16.msra.mxu0 0
  %3411 = vmatprep.subr.bf16.mxu0 0
  %3412 = vmatpush1.bf16.msra.mxu0 0
  %3413 = vmatprep.subr.bf16.mxu0 0
  %3414 = vmatpush1.bf16.msra.mxu0 0
  %3415 = vmatprep.subr.bf16.mxu0 0
  %3416 = vmatpush1.bf16.msra.mxu0 0
  %3417 = vmatprep.subr.bf16.mxu0 0
  %3418 = vmatpush1.bf16.msra.mxu0 0
  %3419 = vmatprep.subr.bf16.mxu0 0
  %3420 = vmatpush1.bf16.msra.mxu0 0
  %3421 = vmatprep.mubr.bf16.mxu0 0
  %3422 = vmatmul.mubr.bf16.gmra.mrb[0].mxu0 %v3387
  %v3423 = vpop.f32.mrb[0].mxu0
  %v3424 = vadd.f32 0.0, %v3423
  %v3425 = vpop.f32.mrb[0].mxu0
  %v3426 = vpop.f32.mrb[0].mxu0
  %v3427 = vadd.f32 0.0, %v3426
  %v3428 = vpop.f32.mrb[0].mxu0
  %3429 = vdwg.mxu0
  %3432 = vrot.lane.b32.xlu0 %v3424, 8
  %v3433 = vpop.permute.xlu0 %3432
  %3434 = vrot.lane.b32.xlu0 %v3427, 8
  %v3435 = vpop.permute.xlu0 %3434
  %3438 = vst.msk [vmem:[#allocation2] sm:$0xff] %vm575, %v3433
  %3439 = vst.msk [vmem:[#allocation2 + $0x8] sm:$0xff] %vm575, %v3435
  %3440 = vrot.lane.b32.xlu0 %v3178, 112
  %v3441 = vpop.permute.xlu0 %3440
  %3442 = vrot.lane.b32.xlu0 %v3178, 80
  %v3443 = vpop.permute.xlu0 %3442
  %v3445 = vsel %vm317, %v3441, 0
  %v3448 = vsel %vm317, %v3443, 0
  %3450 = vmatprep.subr.bf16.mxu0 0
  %3451 = vmatpush1.bf16.xpose.msra.mxu0 %v3448
  %3452 = vmatprep.subr.bf16.mxu0 0
  %3453 = vmatpush1.bf16.xpose.msra.mxu0 0
  %3454 = vmatprep.subr.bf16.mxu0 0
  %3455 = vmatpush1.bf16.xpose.msra.mxu0 0
  %3456 = vmatprep.subr.bf16.mxu0 0
  %3457 = vmatpush1.bf16.xpose.msra.mxu0 0
  %3458 = vmatprep.subr.bf16.mxu0 0
  %3459 = vmatpush1.bf16.xpose.msra.mxu0 0
  %3460 = vmatprep.subr.bf16.mxu0 0
  %3461 = vmatpush1.bf16.xpose.msra.mxu0 0
  %3462 = vmatprep.subr.bf16.mxu0 0
  %3463 = vmatpush1.bf16.xpose.msra.mxu0 0
  %3464 = vmatprep.subr.bf16.mxu0 0
  %3465 = vmatpush1.bf16.xpose.msra.mxu0 0
  %3466 = vmatprep.subr.bf16.mxu0 0
  %3467 = vmatpush1.bf16.xpose.msra.mxu0 0
  %3468 = vmatprep.subr.bf16.mxu0 0
  %3469 = vmatpush1.bf16.xpose.msra.mxu0 0
  %3470 = vmatprep.subr.bf16.mxu0 0
  %3471 = vmatpush1.bf16.xpose.msra.mxu0 0
  %3472 = vmatprep.subr.bf16.mxu0 0
  %3473 = vmatpush1.bf16.xpose.msra.mxu0 0
  %3474 = vmatprep.subr.bf16.mxu0 0
  %3475 = vmatpush1.bf16.xpose.msra.mxu0 0
  %3476 = vmatprep.subr.bf16.mxu0 0
  %3477 = vmatpush1.bf16.xpose.msra.mxu0 0
  %3478 = vmatprep.subr.bf16.mxu0 0
  %3479 = vmatpush1.bf16.xpose.msra.mxu0 0
  %3480 = vmatprep.subr.bf16.mxu0 0
  %3481 = vmatpush1.bf16.xpose.msra.mxu0 0
  %3482 = vmatprep.mubr.bf16.mxu0 0
  %3483 = vmatmul.mubr.bf16.gmra.mrb[0].mxu0 %v3445
  %v3484 = vpop.f32.mrb[0].mxu0
  %v3485 = vadd.f32 0.0, %v3484
  %v3486 = vpop.f32.mrb[0].mxu0
  %v3487 = vpop.f32.mrb[0].mxu0
  %v3488 = vadd.f32 0.0, %v3487
  %v3489 = vpop.f32.mrb[0].mxu0
  %3490 = vdwg.mxu0
  %v3491 = vmul.f32 %v3485, 0.35355338
  %v3492 = vmul.f32 %v3488, 0.35355338
  %v3493 = vadd.f32 %v3491, %v202
  %v3494 = vadd.f32 %v3492, %v203
  %v3495 = vsel %vm369, %v3493, -inf
  %3496 = vmax.xlane.f32.xlu0 %v3495
  %v3497 = vpop.xlane.xlu0 %3496
  %v3498 = vsel %vm369, %v3494, -inf
  %3499 = vmax.xlane.f32.xlu0 %v3498
  %v3500 = vpop.xlane.xlu0 %3499
  %v3501 = vsub.f32 %v3493, %v3497
  %v3502 = vsub.f32 %v3494, %v3500
  %v3503 = vmul.f32 %v3501, 1.442695
  %v3504 = vpow.pop %v3503
  %v3505 = vmul.f32 %v3502, 1.442695
  %v3506 = vpow.pop %v3505
  %v3507 = vsel %vm369, %v3504, 0.0
  %3508 = vadd.xlane.f32.xlu0 %v3507
  %v3509 = vpop.xlane.xlu0 %3508
  %v3510 = vsel %vm369, %v3506, 0.0
  %3511 = vadd.xlane.f32.xlu0 %v3510
  %v3512 = vpop.xlane.xlu0 %3511
  %v3513 = vrcp.pop %v3509
  %v3514 = vrcp.pop %v3512
  %v3515 = vmul.f32 %v3504, %v3513
  %v3516 = vmul.f32 %v3506, %v3514
  %v3517 = vpack.c.bf16 %v3516, %v3515
  %3518 = vrot.lane.b32.xlu0 %v3178, 48
  %v3519 = vpop.permute.xlu0 %3518
  %v3522 = vsel %vm369, %v3517, 0
  %3524 = vmatprep.subr.bf16.mxu0 0
  %3525 = vmatpush1.bf16.msra.mxu0 %v3519
  %3526 = vmatprep.subr.bf16.mxu0 0
  %3527 = vmatpush1.bf16.msra.mxu0 0
  %3528 = vmatprep.subr.bf16.mxu0 0
  %3529 = vmatpush1.bf16.msra.mxu0 0
  %3530 = vmatprep.subr.bf16.mxu0 0
  %3531 = vmatpush1.bf16.msra.mxu0 0
  %3532 = vmatprep.subr.bf16.mxu0 0
  %3533 = vmatpush1.bf16.msra.mxu0 0
  %3534 = vmatprep.subr.bf16.mxu0 0
  %3535 = vmatpush1.bf16.msra.mxu0 0
  %3536 = vmatprep.subr.bf16.mxu0 0
  %3537 = vmatpush1.bf16.msra.mxu0 0
  %3538 = vmatprep.subr.bf16.mxu0 0
  %3539 = vmatpush1.bf16.msra.mxu0 0
  %3540 = vmatprep.subr.bf16.mxu0 0
  %3541 = vmatpush1.bf16.msra.mxu0 0
  %3542 = vmatprep.subr.bf16.mxu0 0
  %3543 = vmatpush1.bf16.msra.mxu0 0
  %3544 = vmatprep.subr.bf16.mxu0 0
  %3545 = vmatpush1.bf16.msra.mxu0 0
  %3546 = vmatprep.subr.bf16.mxu0 0
  %3547 = vmatpush1.bf16.msra.mxu0 0
  %3548 = vmatprep.subr.bf16.mxu0 0
  %3549 = vmatpush1.bf16.msra.mxu0 0
  %3550 = vmatprep.subr.bf16.mxu0 0
  %3551 = vmatpush1.bf16.msra.mxu0 0
  %3552 = vmatprep.subr.bf16.mxu0 0
  %3553 = vmatpush1.bf16.msra.mxu0 0
  %3554 = vmatprep.subr.bf16.mxu0 0
  %3555 = vmatpush1.bf16.msra.mxu0 0
  %3556 = vmatprep.mubr.bf16.mxu0 0
  %3557 = vmatmul.mubr.bf16.gmra.mrb[0].mxu0 %v3522
  %v3558 = vpop.f32.mrb[0].mxu0
  %v3559 = vadd.f32 0.0, %v3558
  %v3560 = vpop.f32.mrb[0].mxu0
  %v3561 = vpop.f32.mrb[0].mxu0
  %v3562 = vadd.f32 0.0, %v3561
  %v3563 = vpop.f32.mrb[0].mxu0
  %3564 = vdwg.mxu0
  %3567 = vrot.lane.b32.xlu0 %v3559, 16
  %v3568 = vpop.permute.xlu0 %3567
  %3569 = vrot.lane.b32.xlu0 %v3562, 16
  %v3570 = vpop.permute.xlu0 %3569
  %3573 = vst.msk [vmem:[#allocation2] sm:$0xff] %vm711, %v3568
  %3574 = vst.msk [vmem:[#allocation2 + $0x8] sm:$0xff] %vm711, %v3570
  %3575 = vrot.lane.b32.xlu0 %v3178, 104
  %v3576 = vpop.permute.xlu0 %3575
  %3577 = vrot.lane.b32.xlu0 %v3178, 72
  %v3578 = vpop.permute.xlu0 %3577
  %v3580 = vsel %vm317, %v3576, 0
  %v3583 = vsel %vm317, %v3578, 0
  %3585 = vmatprep.subr.bf16.mxu0 0
  %3586 = vmatpush1.bf16.xpose.msra.mxu0 %v3583
  %3587 = vmatprep.subr.bf16.mxu0 0
  %3588 = vmatpush1.bf16.xpose.msra.mxu0 0
  %3589 = vmatprep.subr.bf16.mxu0 0
  %3590 = vmatpush1.bf16.xpose.msra.mxu0 0
  %3591 = vmatprep.subr.bf16.mxu0 0
  %3592 = vmatpush1.bf16.xpose.msra.mxu0 0
  %3593 = vmatprep.subr.bf16.mxu0 0
  %3594 = vmatpush1.bf16.xpose.msra.mxu0 0
  %3595 = vmatprep.subr.bf16.mxu0 0
  %3596 = vmatpush1.bf16.xpose.msra.mxu0 0
  %3597 = vmatprep.subr.bf16.mxu0 0
  %3598 = vmatpush1.bf16.xpose.msra.mxu0 0
  %3599 = vmatprep.subr.bf16.mxu0 0
  %3600 = vmatpush1.bf16.xpose.msra.mxu0 0
  %3601 = vmatprep.subr.bf16.mxu0 0
  %3602 = vmatpush1.bf16.xpose.msra.mxu0 0
  %3603 = vmatprep.subr.bf16.mxu0 0
  %3604 = vmatpush1.bf16.xpose.msra.mxu0 0
  %3605 = vmatprep.subr.bf16.mxu0 0
  %3606 = vmatpush1.bf16.xpose.msra.mxu0 0
  %3607 = vmatprep.subr.bf16.mxu0 0
  %3608 = vmatpush1.bf16.xpose.msra.mxu0 0
  %3609 = vmatprep.subr.bf16.mxu0 0
  %3610 = vmatpush1.bf16.xpose.msra.mxu0 0
  %3611 = vmatprep.subr.bf16.mxu0 0
  %3612 = vmatpush1.bf16.xpose.msra.mxu0 0
  %3613 = vmatprep.subr.bf16.mxu0 0
  %3614 = vmatpush1.bf16.xpose.msra.mxu0 0
  %3615 = vmatprep.subr.bf16.mxu0 0
  %3616 = vmatpush1.bf16.xpose.msra.mxu0 0
  %3617 = vmatprep.mubr.bf16.mxu0 0
  %3618 = vmatmul.mubr.bf16.gmra.mrb[0].mxu0 %v3580
  %v3619 = vpop.f32.mrb[0].mxu0
  %v3620 = vadd.f32 0.0, %v3619
  %v3621 = vpop.f32.mrb[0].mxu0
  %v3622 = vpop.f32.mrb[0].mxu0
  %v3623 = vadd.f32 0.0, %v3622
  %v3624 = vpop.f32.mrb[0].mxu0
  %3625 = vdwg.mxu0
  %v3626 = vmul.f32 %v3620, 0.35355338
  %v3627 = vmul.f32 %v3623, 0.35355338
  %v3628 = vadd.f32 %v3626, %v202
  %v3629 = vadd.f32 %v3627, %v203
  %v3630 = vsel %vm369, %v3628, -inf
  %3631 = vmax.xlane.f32.xlu0 %v3630
  %v3632 = vpop.xlane.xlu0 %3631
  %v3633 = vsel %vm369, %v3629, -inf
  %3634 = vmax.xlane.f32.xlu0 %v3633
  %v3635 = vpop.xlane.xlu0 %3634
  %v3636 = vsub.f32 %v3628, %v3632
  %v3637 = vsub.f32 %v3629, %v3635
  %v3638 = vmul.f32 %v3636, 1.442695
  %v3639 = vpow.pop %v3638
  %v3640 = vmul.f32 %v3637, 1.442695
  %v3641 = vpow.pop %v3640
  %v3642 = vsel %vm369, %v3639, 0.0
  %3643 = vadd.xlane.f32.xlu0 %v3642
  %v3644 = vpop.xlane.xlu0 %3643
  %v3645 = vsel %vm369, %v3641, 0.0
  %3646 = vadd.xlane.f32.xlu0 %v3645
  %v3647 = vpop.xlane.xlu0 %3646
  %v3648 = vrcp.pop %v3644
  %v3649 = vrcp.pop %v3647
  %v3650 = vmul.f32 %v3639, %v3648
  %v3651 = vmul.f32 %v3641, %v3649
  %v3652 = vpack.c.bf16 %v3651, %v3650
  %3653 = vrot.lane.b32.xlu0 %v3178, 40
  %v3654 = vpop.permute.xlu0 %3653
  %v3657 = vsel %vm369, %v3652, 0
  %3659 = vmatprep.subr.bf16.mxu0 0
  %3660 = vmatpush1.bf16.msra.mxu0 %v3654
  %3661 = vmatprep.subr.bf16.mxu0 0
  %3662 = vmatpush1.bf16.msra.mxu0 0
  %3663 = vmatprep.subr.bf16.mxu0 0
  %3664 = vmatpush1.bf16.msra.mxu0 0
  %3665 = vmatprep.subr.bf16.mxu0 0
  %3666 = vmatpush1.bf16.msra.mxu0 0
  %3667 = vmatprep.subr.bf16.mxu0 0
  %3668 = vmatpush1.bf16.msra.mxu0 0
  %3669 = vmatprep.subr.bf16.mxu0 0
  %3670 = vmatpush1.bf16.msra.mxu0 0
  %3671 = vmatprep.subr.bf16.mxu0 0
  %3672 = vmatpush1.bf16.msra.mxu0 0
  %3673 = vmatprep.subr.bf16.mxu0 0
  %3674 = vmatpush1.bf16.msra.mxu0 0
  %3675 = vmatprep.subr.bf16.mxu0 0
  %3676 = vmatpush1.bf16.msra.mxu0 0
  %3677 = vmatprep.subr.bf16.mxu0 0
  %3678 = vmatpush1.bf16.msra.mxu0 0
  %3679 = vmatprep.subr.bf16.mxu0 0
  %3680 = vmatpush1.bf16.msra.mxu0 0
  %3681 = vmatprep.subr.bf16.mxu0 0
  %3682 = vmatpush1.bf16.msra.mxu0 0
  %3683 = vmatprep.subr.bf16.mxu0 0
  %3684 = vmatpush1.bf16.msra.mxu0 0
  %3685 = vmatprep.subr.bf16.mxu0 0
  %3686 = vmatpush1.bf16.msra.mxu0 0
  %3687 = vmatprep.subr.bf16.mxu0 0
  %3688 = vmatpush1.bf16.msra.mxu0 0
  %3689 = vmatprep.subr.bf16.mxu0 0
  %3690 = vmatpush1.bf16.msra.mxu0 0
  %3691 = vmatprep.mubr.bf16.mxu0 0
  %3692 = vmatmul.mubr.bf16.gmra.mrb[0].mxu0 %v3657
  %v3693 = vpop.f32.mrb[0].mxu0
  %v3694 = vadd.f32 0.0, %v3693
  %v3695 = vpop.f32.mrb[0].mxu0
  %v3696 = vpop.f32.mrb[0].mxu0
  %v3697 = vadd.f32 0.0, %v3696
  %v3698 = vpop.f32.mrb[0].mxu0
  %3699 = vdwg.mxu0
  %3702 = vrot.lane.b32.xlu0 %v3694, 24
  %v3703 = vpop.permute.xlu0 %3702
  %3704 = vrot.lane.b32.xlu0 %v3697, 24
  %v3705 = vpop.permute.xlu0 %3704
  %3708 = vst.msk [vmem:[#allocation2] sm:$0xff] %vm847, %v3703
  %3709 = vst.msk [vmem:[#allocation2 + $0x8] sm:$0xff] %vm847, %v3705
  %v3710 = vld [vmem:[#allocation2] sm:$0xff]
  %v3711 = vld [vmem:[#allocation2 + $0x8] sm:$0xff]
  %v3712 = vpack.c.bf16 %v3711, %v3710
  %s3713 = scalar_lea.vmem %s7, 48
  %v3714 = vld [vmem:[%s3713] sm:$0xf]
  %v3715 = vld [vmem:[%s3713 + $0x4] sm:$0xf]
  %v3716 = vld [vmem:[%s3713 + $0x8] sm:$0xf]
  %v3717 = vld [vmem:[%s3713 + $0xc] sm:$0xf]
  %v3722 = vunpack.c.l.b16 %v3714
  %v3723 = vunpack.c.l.b16 %v3715
  %v3724 = vunpack.c.l.b16 %v3716
  %v3725 = vunpack.c.l.b16 %v3717
  %v3726 = vpack.c.b16 %v3723, %v3722
  %v3727 = vpack.c.b16 %v3725, %v3724
  %v3731 = vsel %vm205, %v3712, 0
  %3733 = vmatprep.subr.bf16.mxu0 0
  %3734 = vmatpush1.bf16.msra.mxu0 %v3726
  %3735 = vmatprep.subr.bf16.mxu0 0
  %3736 = vmatpush1.bf16.msra.mxu0 %v3727
  %3737 = vmatprep.subr.bf16.mxu0 0
  %3738 = vmatpush1.bf16.msra.mxu0 0
  %3739 = vmatprep.subr.bf16.mxu0 0
  %3740 = vmatpush1.bf16.msra.mxu0 0
  %3741 = vmatprep.subr.bf16.mxu0 0
  %3742 = vmatpush1.bf16.msra.mxu0 0
  %3743 = vmatprep.subr.bf16.mxu0 0
  %3744 = vmatpush1.bf16.msra.mxu0 0
  %3745 = vmatprep.subr.bf16.mxu0 0
  %3746 = vmatpush1.bf16.msra.mxu0 0
  %3747 = vmatprep.subr.bf16.mxu0 0
  %3748 = vmatpush1.bf16.msra.mxu0 0
  %3749 = vmatprep.subr.bf16.mxu0 0
  %3750 = vmatpush1.bf16.msra.mxu0 0
  %3751 = vmatprep.subr.bf16.mxu0 0
  %3752 = vmatpush1.bf16.msra.mxu0 0
  %3753 = vmatprep.subr.bf16.mxu0 0
  %3754 = vmatpush1.bf16.msra.mxu0 0
  %3755 = vmatprep.subr.bf16.mxu0 0
  %3756 = vmatpush1.bf16.msra.mxu0 0
  %3757 = vmatprep.subr.bf16.mxu0 0
  %3758 = vmatpush1.bf16.msra.mxu0 0
  %3759 = vmatprep.subr.bf16.mxu0 0
  %3760 = vmatpush1.bf16.msra.mxu0 0
  %3761 = vmatprep.subr.bf16.mxu0 0
  %3762 = vmatpush1.bf16.msra.mxu0 0
  %3763 = vmatprep.subr.bf16.mxu0 0
  %3764 = vmatpush1.bf16.msra.mxu0 0
  %3765 = vmatprep.mubr.bf16.mxu0 0
  %3766 = vmatmul.mubr.bf16.gmra.mrb[0].mxu0 %v3731
  %v3767 = vpop.f32.mrb[0].mxu0
  %v3768 = vadd.f32 0.0, %v3767
  %v3769 = vpop.f32.mrb[0].mxu0
  %v3770 = vpop.f32.mrb[0].mxu0
  %v3771 = vadd.f32 0.0, %v3770
  %v3772 = vpop.f32.mrb[0].mxu0
  %3773 = vdwg.mxu0
  %v3774 = vadd.f32 %v3064, %v3768
  %v3775 = vadd.f32 %v3065, %v3771
  %s3776 = scalar_lea.vmem %s8, 3
  %v3777 = vld [vmem:[%s3776] sm:$0x1]
  %v3779 = vlaneseq
  %v3780 = vshrl.u32 %v3779, 7
  %v3781 = vsub.s32 0, %v3780
  %v3782 = vrot.slane %v3777, %v3781
  %v3784 = vadd.f32 %v3774, %v3782
  %v3785 = vadd.f32 %v3775, %v3782
  %s3786 = scalar_lea.vmem %s9, 6
  %v3787 = vld [vmem:[%s3786] sm:$0x3]
  %v3788 = vsel %vm205, %v3784, 0.0
  %3789 = vadd.xlane.f32.xlu0 %v3788
  %v3790 = vpop.xlane.xlu0 %3789
  %v3791 = vsel %vm205, %v3785, 0.0
  %3792 = vadd.xlane.f32.xlu0 %v3791
  %v3793 = vpop.xlane.xlu0 %3792
  %v3794 = vmul.f32 %v3790, %v212
  %v3795 = vmul.f32 %v3793, %v212
  %v3796 = vsub.f32 %v3784, %v3794
  %v3797 = vsub.f32 %v3785, %v3795
  %v3798 = vmul.f32 %v3796, %v3796
  %v3799 = vmul.f32 %v3797, %v3797
  %v3800 = vsel %vm205, %v3798, 0.0
  %3801 = vadd.xlane.f32.xlu0 %v3800
  %v3802 = vpop.xlane.xlu0 %3801
  %v3803 = vsel %vm205, %v3799, 0.0
  %3804 = vadd.xlane.f32.xlu0 %v3803
  %v3805 = vpop.xlane.xlu0 %3804
  %v3806 = vmul.f32 %v3802, %v212
  %v3807 = vmul.f32 %v3805, %v212
  %v3808 = vadd.f32 %v3806, 1e-06
  %v3809 = vadd.f32 %v3807, 1e-06
  %v3810 = vrsqrt.pop %v3808
  %v3811 = vrsqrt.pop %v3809
  %v3812 = vmul.f32 %v3796, %v3810
  %v3813 = vmul.f32 %v3797, %v3811
  %v3814 = vlaneseq
  %v3815 = vshrl.u32 %v3814, 7
  %v3816 = vsub.s32 0, %v3815
  %v3817 = vrot.slane %v3787, %v3816
  %v3818 = vmul.f32 %v3812, %v3817
  %v3819 = vmul.f32 %v3813, %v3817
  %v3820 = vlaneseq
  %v3821 = vshrl.u32 %v3820, 7
  %v3822 = vsub.s32 1, %v3821
  %v3823 = vrot.slane %v3787, %v3822
  %v3824 = vadd.f32 %v3818, %v3823
  %v3825 = vadd.f32 %v3819, %v3823
  %v3826 = vpack.c.bf16 %v3825, %v3824
  %s3827 = scalar_lea.vmem %s10, 48
  %v3828 = vld [vmem:[%s3827] sm:$0xf]
  %v3829 = vld [vmem:[%s3827 + $0x4] sm:$0xf]
  %v3830 = vld [vmem:[%s3827 + $0x8] sm:$0xf]
  %v3831 = vld [vmem:[%s3827 + $0xc] sm:$0xf]
  %s3832 = scalar_lea.vmem %s11, 3
  %v3833 = vld [vmem:[%s3832] sm:$0x1]
  %v3835 = vlaneseq
  %v3836 = vshrl.u32 %v3835, 7
  %v3837 = vsub.s32 0, %v3836
  %v3838 = vrot.slane %v3833, %v3837
  %v3844 = vunpack.c.l.b16 %v3828
  %v3845 = vunpack.c.l.b16 %v3829
  %v3846 = vunpack.c.l.b16 %v3830
  %v3847 = vunpack.c.l.b16 %v3831
  %v3848 = vpack.c.b16 %v3845, %v3844
  %v3849 = vpack.c.b16 %v3847, %v3846
  %v3853 = vsel %vm205, %v3826, 0
  %3855 = vmatprep.subr.bf16.mxu0 0
  %3856 = vmatpush1.bf16.msra.mxu0 %v3848
  %3857 = vmatprep.subr.bf16.mxu0 0
  %3858 = vmatpush1.bf16.msra.mxu0 %v3849
  %3859 = vmatprep.subr.bf16.mxu0 0
  %3860 = vmatpush1.bf16.msra.mxu0 0
  %3861 = vmatprep.subr.bf16.mxu0 0
  %3862 = vmatpush1.bf16.msra.mxu0 0
  %3863 = vmatprep.subr.bf16.mxu0 0
  %3864 = vmatpush1.bf16.msra.mxu0 0
  %3865 = vmatprep.subr.bf16.mxu0 0
  %3866 = vmatpush1.bf16.msra.mxu0 0
  %3867 = vmatprep.subr.bf16.mxu0 0
  %3868 = vmatpush1.bf16.msra.mxu0 0
  %3869 = vmatprep.subr.bf16.mxu0 0
  %3870 = vmatpush1.bf16.msra.mxu0 0
  %3871 = vmatprep.subr.bf16.mxu0 0
  %3872 = vmatpush1.bf16.msra.mxu0 0
  %3873 = vmatprep.subr.bf16.mxu0 0
  %3874 = vmatpush1.bf16.msra.mxu0 0
  %3875 = vmatprep.subr.bf16.mxu0 0
  %3876 = vmatpush1.bf16.msra.mxu0 0
  %3877 = vmatprep.subr.bf16.mxu0 0
  %3878 = vmatpush1.bf16.msra.mxu0 0
  %3879 = vmatprep.subr.bf16.mxu0 0
  %3880 = vmatpush1.bf16.msra.mxu0 0
  %3881 = vmatprep.subr.bf16.mxu0 0
  %3882 = vmatpush1.bf16.msra.mxu0 0
  %3883 = vmatprep.subr.bf16.mxu0 0
  %3884 = vmatpush1.bf16.msra.mxu0 0
  %3885 = vmatprep.subr.bf16.mxu0 0
  %3886 = vmatpush1.bf16.msra.mxu0 0
  %3887 = vmatprep.mubr.bf16.mxu0 0
  %3888 = vmatmul.mubr.bf16.gmra.mrb[0].mxu0 %v3853
  %v3889 = vpop.f32.mrb[0].mxu0
  %v3890 = vadd.f32 %v3838, %v3889
  %v3891 = vpop.f32.mrb[0].mxu0
  %v3892 = vpop.f32.mrb[0].mxu0
  %v3893 = vadd.f32 %v3838, %v3892
  %v3894 = vpop.f32.mrb[0].mxu0
  %3895 = vdwg.mxu0
  %v3896 = vmul.f32 %v3890, 0.5
  %v3897 = vmul.f32 %v3893, 0.5
  %v3898 = vmul.f32 %v3890, 0.70710677
  %v3899 = vmul.f32 %v3893, 0.70710677
  %v3900 = verf.f32.pop %v3898
  %v3901 = verf.f32.pop %v3899
  %v3902 = vadd.f32 %v3900, 1.0
  %v3903 = vadd.f32 %v3901, 1.0
  %v3904 = vmul.f32 %v3896, %v3902
  %v3905 = vmul.f32 %v3897, %v3903
  %v3906 = vpack.c.bf16 %v3905, %v3904
  %s3907 = scalar_lea.vmem %s12, 192
  %v3908 = vld [vmem:[%s3907] sm:$0xf]
  %v3909 = vld [vmem:[%s3907 + $0x4] sm:$0xf]
  %v3910 = vld [vmem:[%s3907 + $0x8] sm:$0xf]
  %v3911 = vld [vmem:[%s3907 + $0xc] sm:$0xf]
  %v3912 = vld [vmem:[%s3907 + $0x10] sm:$0xf]
  %v3913 = vld [vmem:[%s3907 + $0x14] sm:$0xf]
  %v3914 = vld [vmem:[%s3907 + $0x18] sm:$0xf]
  %v3915 = vld [vmem:[%s3907 + $0x1c] sm:$0xf]
  %v3916 = vld [vmem:[%s3907 + $0x20] sm:$0xf]
  %v3917 = vld [vmem:[%s3907 + $0x24] sm:$0xf]
  %v3918 = vld [vmem:[%s3907 + $0x28] sm:$0xf]
  %v3919 = vld [vmem:[%s3907 + $0x2c] sm:$0xf]
  %v3920 = vld [vmem:[%s3907 + $0x30] sm:$0xf]
  %v3921 = vld [vmem:[%s3907 + $0x34] sm:$0xf]
  %v3922 = vld [vmem:[%s3907 + $0x38] sm:$0xf]
  %v3923 = vld [vmem:[%s3907 + $0x3c] sm:$0xf]
  %s3924 = scalar_lea.vmem %s13, 3
  %v3925 = vld [vmem:[%s3924] sm:$0x1]
  %v3927 = vlaneseq
  %v3928 = vshrl.u32 %v3927, 7
  %v3929 = vsub.s32 0, %v3928
  %v3930 = vrot.slane %v3925, %v3929
  %v3948 = vunpack.c.l.b16 %v3908
  %v3949 = vunpack.c.l.b16 %v3909
  %v3950 = vunpack.c.l.b16 %v3910
  %v3951 = vunpack.c.l.b16 %v3911
  %v3952 = vunpack.c.l.b16 %v3912
  %v3953 = vunpack.c.l.b16 %v3913
  %v3954 = vunpack.c.l.b16 %v3914
  %v3955 = vunpack.c.l.b16 %v3915
  %v3956 = vunpack.c.l.b16 %v3916
  %v3957 = vunpack.c.l.b16 %v3917
  %v3958 = vunpack.c.l.b16 %v3918
  %v3959 = vunpack.c.l.b16 %v3919
  %v3960 = vunpack.c.l.b16 %v3920
  %v3961 = vunpack.c.l.b16 %v3921
  %v3962 = vunpack.c.l.b16 %v3922
  %v3963 = vunpack.c.l.b16 %v3923
  %v3964 = vpack.c.b16 %v3949, %v3948
  %v3965 = vpack.c.b16 %v3951, %v3950
  %v3966 = vpack.c.b16 %v3953, %v3952
  %v3967 = vpack.c.b16 %v3955, %v3954
  %v3968 = vpack.c.b16 %v3957, %v3956
  %v3969 = vpack.c.b16 %v3959, %v3958
  %v3970 = vpack.c.b16 %v3961, %v3960
  %v3971 = vpack.c.b16 %v3963, %v3962
  %3980 = vmatprep.subr.bf16.mxu0 0
  %3981 = vmatpush1.bf16.msra.mxu0 %v3964
  %3982 = vmatprep.subr.bf16.mxu0 0
  %3983 = vmatpush1.bf16.msra.mxu0 %v3965
  %3984 = vmatprep.subr.bf16.mxu0 0
  %3985 = vmatpush1.bf16.msra.mxu0 %v3966
  %3986 = vmatprep.subr.bf16.mxu0 0
  %3987 = vmatpush1.bf16.msra.mxu0 %v3967
  %3988 = vmatprep.subr.bf16.mxu0 0
  %3989 = vmatpush1.bf16.msra.mxu0 %v3968
  %3990 = vmatprep.subr.bf16.mxu0 0
  %3991 = vmatpush1.bf16.msra.mxu0 %v3969
  %3992 = vmatprep.subr.bf16.mxu0 0
  %3993 = vmatpush1.bf16.msra.mxu0 %v3970
  %3994 = vmatprep.subr.bf16.mxu0 0
  %3995 = vmatpush1.bf16.msra.mxu0 %v3971
  %3996 = vmatprep.subr.bf16.mxu0 0
  %3997 = vmatpush1.bf16.msra.mxu0 0
  %3998 = vmatprep.subr.bf16.mxu0 0
  %3999 = vmatpush1.bf16.msra.mxu0 0
  %4000 = vmatprep.subr.bf16.mxu0 0
  %4001 = vmatpush1.bf16.msra.mxu0 0
  %4002 = vmatprep.subr.bf16.mxu0 0
  %4003 = vmatpush1.bf16.msra.mxu0 0
  %4004 = vmatprep.subr.bf16.mxu0 0
  %4005 = vmatpush1.bf16.msra.mxu0 0
  %4006 = vmatprep.subr.bf16.mxu0 0
  %4007 = vmatpush1.bf16.msra.mxu0 0
  %4008 = vmatprep.subr.bf16.mxu0 0
  %4009 = vmatpush1.bf16.msra.mxu0 0
  %4010 = vmatprep.subr.bf16.mxu0 0
  %4011 = vmatpush1.bf16.msra.mxu0 0
  %4012 = vmatprep.mubr.bf16.mxu0 0
  %4013 = vmatmul.mubr.bf16.gmra.mrb[0].mxu0 %v3906
  %v4014 = vpop.f32.mrb[0].mxu0
  %v4015 = vadd.f32 %v3930, %v4014
  %v4016 = vpop.f32.mrb[0].mxu0
  %v4017 = vpop.f32.mrb[0].mxu0
  %v4018 = vadd.f32 %v3930, %v4017
  %v4019 = vpop.f32.mrb[0].mxu0
  %4020 = vdwg.mxu0
  %v4021 = vadd.f32 %v3784, %v4015
  %v4022 = vadd.f32 %v3785, %v4018
  %s4023 = scalar_lea.vmem %s14, 16
  %4024 = vst.msk [vmem:[%s4023] sm:$0xff] %vm205, %v4021
  %4025 = vst.msk [vmem:[%s4023 + $0x8] sm:$0xff] %vm205, %v4022
  // Predicated region
  $region58: #{feature_extractor_mae_forward.1} parent=0 // pred_check
    _
  $region59: #{feature_extractor_mae_forward.1} parent=0 // pred_check_branch
    %4027 = sbr.rel (0) target = $region61
  $region60: #{feature_extractor_mae_forward.1} parent=0 // pred_region
    _
  $region61: #{feature_extractor_mae_forward.1} parent=0 // pred_fallthru
    _
  // Predicated region
  $region62: #{feature_extractor_mae_forward.1} parent=0 // pred_check
    _
  $region63: #{feature_extractor_mae_forward.1} parent=0 // pred_check_branch
    %4029 = sbr.rel (0) target = $region65
  $region64: #{feature_extractor_mae_forward.1} parent=0 // pred_region
    _
  $region65: #{feature_extractor_mae_forward.1} parent=0 // pred_fallthru
    _

</llo_original>
